<compile_context>
chip_gen: v7x
topology: tpu7x:2x2x1
jax: 0.10.0
libtpu: 0.0.40
codegen_flags: <defaults>
</compile_context>

<pallas_src>
import functools

import jax
import jax.numpy as jnp
from jax.experimental import pallas as pl
from jax.experimental.pallas import tpu as pltpu

# ----------------------------- model config (small, synthetic) -----------------------------
VOCAB = 100
HIDDEN = 128
NUM_HEADS = 4
INTERMEDIATE = 256
NUM_LAYERS = 2
MAX_POS = 16
TYPE_VOCAB = 2
LN_EPS = 1e-12

BATCH = 2
SEQ = 8


# ----------------------------------- in-kernel helpers -------------------------------------
def _layernorm(x, gamma, beta, eps=LN_EPS):
    mu = jnp.mean(x, axis=-1, keepdims=True)
    var = jnp.mean(jnp.square(x - mu), axis=-1, keepdims=True)
    return (x - mu) * jax.lax.rsqrt(var + eps) * gamma + beta


# ------------------------------------- Pallas kernel ---------------------------------------
def bert_encoder_kernel(emb_ref, mask_ref, eg_ref, eb_ref,
                        wqkv_ref, bqkv_ref, wo_ref, bo_ref, g1_ref, be1_ref,
                        w1_ref, b1_ref, w2_ref, b2_ref, g2_ref, be2_ref,
                        out_ref, *, num_heads, seq, batch_block):
    """One grid step = one (batch_block, layer) pair.

    Grid = (num_batch_blocks, num_layers). The layer axis is 'arbitrary'; the hidden
    state is resident in the *output* VMEM block across all layers of a batch block
    (its block index is constant in the layer index), so no scratch buffer is needed
    and the HBM writeback happens once per batch block with the final-layer value.
    """
    nb = pl.program_id(0)
    layer = pl.program_id(1)

    BB, S = batch_block, seq
    NH = num_heads

    # Fused embedding LayerNorm: initialise the resident hidden state at layer 0.
    @pl.when(layer == 0)
    def _():
        out_ref[...] = _layernorm(emb_ref[...], eg_ref[...], eb_ref[...])

    x = out_ref[...]                     # (BB*S, H) f32, VMEM-resident across layers
    H = x.shape[-1]
    dH = H // NH

    # ---- fused QKV projection: one bf16 MXU matmul, f32 accumulate --------------------
    # 1/sqrt(dH) is pre-folded into the Q columns of wqkv at parameter-prep time.
    xb = x.astype(jnp.bfloat16)
    qkv = jnp.dot(xb, wqkv_ref[...], preferred_element_type=jnp.float32) + bqkv_ref[...]

    qb = qkv[:, :H].reshape(BB, S, H).astype(jnp.bfloat16)
    kb = qkv[:, H:2 * H].reshape(BB, S, H).astype(jnp.bfloat16)
    vb = qkv[:, 2 * H:].reshape(BB, S, H).astype(jnp.bfloat16)

    # Additive attention-mask bias: the full (B, S) block is VMEM-resident; take this
    # batch block's rows and broadcast over the query axis in-kernel.
    B_full = mask_ref.shape[0]
    if BB == B_full:
        mask = mask_ref[...]
    else:
        mask = mask_ref[pl.ds(nb * BB, BB), :]
    mask = mask[:, None, :]                                     # (BB, 1, S)

    # ---- multi-head self-attention -----------------------------------------------------
    # TODO(synk): a two-batch-dim einsum ('bqhd,bkhd->bhqk') would merge all heads into
    # two batched MXU pushes; kept as a static head loop with single-batch-dim einsums
    # (known-good Mosaic lowering).  The per-head lane concatenate is removed by folding
    # the output projection into the loop: attn = sum_h ctx_h @ Wo[h*dH:(h+1)*dH, :].
    attn = jnp.zeros((BB * S, H), jnp.float32)
    for h in range(NH):
        lo = h * dH
        qh = qb[:, :, lo:lo + dH]                               # (BB, S, dH)
        kh = kb[:, :, lo:lo + dH]
        vh = vb[:, :, lo:lo + dH]
        sc = jnp.einsum("bqd,bkd->bqk", qh, kh,
                        preferred_element_type=jnp.float32) + mask        # (BB, S, S) f32
        m = jnp.max(sc, axis=-1, keepdims=True)
        e = jnp.exp(sc - m)
        p = e * pl.reciprocal(jnp.sum(e, axis=-1, keepdims=True), approx=True)
        ctx_h = jnp.einsum("bqk,bkd->bqd", p.astype(jnp.bfloat16), vh,
                           preferred_element_type=jnp.float32)            # (BB, S, dH)
        attn = attn + jnp.dot(ctx_h.reshape(BB * S, dH).astype(jnp.bfloat16),
                              wo_ref[lo:lo + dH, :],
                              preferred_element_type=jnp.float32)
    attn = attn + bo_ref[...]

    # ---- attention residual + LayerNorm (f32) ------------------------------------------
    h1 = _layernorm(x + attn, g1_ref[...], be1_ref[...])

    # ---- feed-forward + residual + LayerNorm -------------------------------------------
    ff = jnp.dot(h1.astype(jnp.bfloat16), w1_ref[...],
                 preferred_element_type=jnp.float32) + b1_ref[...]
    # TODO(synk): HuggingFace BERT uses exact erf-based GELU; tanh approximation used here.
    ff = jax.nn.gelu(ff, approximate=True)
    ff = jnp.dot(ff.astype(jnp.bfloat16), w2_ref[...],
                 preferred_element_type=jnp.float32) + b2_ref[...]

    # Write the new hidden state straight into the resident output block.
    out_ref[...] = _layernorm(h1 + ff, g2_ref[...], be2_ref[...])


# ----------------------------------- JAX wrappers (glue) -----------------------------------
def _default_batch_block(batch):
    """NB=2 batch blocks on v7x (one per TensorCore); NB=1 on single-TC v5e/v6e."""
    try:
        kind = jax.devices()[0].device_kind.lower()
    except Exception:
        kind = ""
    if "v7" in kind and batch % 2 == 0:
        return batch // 2
    return batch


def bert_encoder(emb_sum, mask_bias, params, *, batch, seq, batch_block=None):
    """Runs the full fused encoder. Returns last_hidden_state as (B*S, H) f32."""
    B, S = batch, seq
    H = emb_sum.shape[-1]
    L = params["wqkv"].shape[0]
    if batch_block is None:
        batch_block = _default_batch_block(B)
    BB = batch_block
    assert B % BB == 0
    NB = B // BB

    kernel = functools.partial(bert_encoder_kernel,
                               num_heads=NUM_HEADS, seq=S, batch_block=BB)

    def stacked_spec(arr):
        # Per-layer weight block selected by the layer grid index (pipelined prefetch).
        # The stacked layer dim is squeezed so the kernel sees the 2-D weight directly.
        zeros = (0,) * (arr.ndim - 1)
        return pl.BlockSpec((pl.Squeezed(),) + arr.shape[1:],
                            lambda nb, l, _z=zeros: (l,) + _z)

    weight_names = ["wqkv", "bqkv", "wo", "bo", "g1", "be1",
                    "w1", "b1", "w2", "b2", "g2", "be2"]
    weights = [params[n] for n in weight_names]

    in_specs = [
        pl.BlockSpec((BB * S, H), lambda nb, l: (nb, 0)),   # summed embeddings (B*S, H)
        pl.BlockSpec((B, S), lambda nb, l: (0, 0)),         # additive mask bias, resident
        pl.BlockSpec((1, H), lambda nb, l: (0, 0)),         # embedding LN gamma
        pl.BlockSpec((1, H), lambda nb, l: (0, 0)),         # embedding LN beta
    ] + [stacked_spec(w) for w in weights]

    return pl.pallas_call(
        kernel,
        out_shape=jax.ShapeDtypeStruct((B * S, H), jnp.float32),
        grid=(NB, L),
        in_specs=in_specs,
        out_specs=pl.BlockSpec((BB * S, H), lambda nb, l: (nb, 0)),
        compiler_params=pltpu.CompilerParams(
            dimension_semantics=("parallel", "arbitrary"),
            vmem_limit_bytes=48 * 1024 * 1024,   # safe on v5e/v6e (128 MiB) and v7x (64 MiB)
        ),
    )(emb_sum, mask_bias, params["emb_ln_g"], params["emb_ln_b"], *weights)


def init_params(key):
    ks = jax.random.split(key, 7)
    L, H, I = NUM_LAYERS, HIDDEN, INTERMEDIATE

    def nrm(k, shape):
        return 0.02 * jax.random.normal(k, shape, dtype=jnp.float32)

    # Fold the 1/sqrt(dH) attention scale into the Q columns of the fused QKV weight
    # (one-time parameter transform; removes a per-layer (BB*S, H) VPU multiply).
    dH = H // NUM_HEADS
    q_scale = 1.0 / jnp.sqrt(jnp.float32(dH))
    wqkv = nrm(ks[3], (L, H, 3 * H))
    wqkv = wqkv.at[:, :, :H].multiply(q_scale)

    return {
        "word_emb": nrm(ks[0], (VOCAB, H)),
        "pos_emb": nrm(ks[1], (MAX_POS, H)),
        "type_emb": nrm(ks[2], (TYPE_VOCAB, H)),
        "emb_ln_g": jnp.ones((1, H), jnp.float32),
        "emb_ln_b": jnp.zeros((1, H), jnp.float32),
        # Per-layer weights stacked on a leading layer axis; matmul weights in bf16.
        # TODO(synk): at real model sizes use int8 weights (per-channel scales) on
        # v5e/v6e to halve weight DMA; keep bf16 (or fp8) on v7x (no int MXU path).
        "wqkv": wqkv.astype(jnp.bfloat16),
        "bqkv": jnp.zeros((L, 1, 3 * H), jnp.float32),   # Q slice would also carry q_scale
        "wo": nrm(ks[4], (L, H, H)).astype(jnp.bfloat16),
        "bo": jnp.zeros((L, 1, H), jnp.float32),
        "g1": jnp.ones((L, 1, H), jnp.float32),
        "be1": jnp.zeros((L, 1, H), jnp.float32),
        "w1": nrm(ks[5], (L, H, I)).astype(jnp.bfloat16),
        "b1": jnp.zeros((L, 1, I), jnp.float32),
        "w2": nrm(ks[6], (L, I, H)).astype(jnp.bfloat16),
        "b2": jnp.zeros((L, 1, H), jnp.float32),
        "g2": jnp.ones((L, 1, H), jnp.float32),
        "be2": jnp.zeros((L, 1, H), jnp.float32),
    }


def bioclinical_bert_ft_forward(params, input_ids, attention_mask):
    """Equivalent of BioClinicalBERT_FT.forward: returns the CLS embedding (B, H)."""
    B, S = input_ids.shape
    H = HIDDEN

    # Embeddings: gather + sum in plain JAX glue (data-dependent gather); rest in Pallas.
    word = jnp.take(params["word_emb"], input_ids, axis=0)           # (B, S, H)
    pos = params["pos_emb"][:S][None, :, :]                          # (1, S, H)
    typ = params["type_emb"][0][None, None, :]                       # token_type_ids = 0
    emb_sum = (word + pos + typ).reshape(B * S, H).astype(jnp.float32)

    # Additive attention-mask bias, (B, S); broadcast over the query axis inside the kernel.
    mask_bias = (1.0 - attention_mask.astype(jnp.float32)) * -10000.0

    last_hidden = bert_encoder(emb_sum, mask_bias, params, batch=B, seq=S)  # (B*S, H)

    # cls_embedding = last_hidden_state[:, 0, :]
    return last_hidden.reshape(B, S, H)[:, 0, :]


if __name__ == "__main__":
    key = jax.random.PRNGKey(0)
    pkey, ikey = jax.random.split(key)

    params = init_params(pkey)

    input_ids = jax.random.randint(ikey, (BATCH, SEQ), 0, VOCAB, dtype=jnp.int32)
    attention_mask = jnp.ones((BATCH, SEQ), dtype=jnp.int32).at[1, SEQ - 2:].set(0)  # some padding

    cls_embedding = bioclinical_bert_ft_forward(params, input_ids, attention_mask)
    cls_embedding = jax.block_until_ready(cls_embedding)

    assert cls_embedding.shape == (BATCH, HIDDEN)
    assert cls_embedding.dtype == jnp.float32
    print("KERNEL_OK")
</pallas_src>

<mosaic_0001>
module attributes {stable_mosaic.version = 11 : i64} {
  func.func @bert_encoder_kernel(%arg0: i32, %arg1: i32, %arg2: memref<16x128xf32, #tpu.memory_space<vmem>>, %arg3: memref<2x8xf32, #tpu.memory_space<vmem>>, %arg4: memref<1x128xf32, #tpu.memory_space<vmem>>, %arg5: memref<1x128xf32, #tpu.memory_space<vmem>>, %arg6: memref<1x128x384xbf16, #tpu.memory_space<vmem>>, %arg7: memref<1x1x384xf32, #tpu.memory_space<vmem>>, %arg8: memref<1x128x128xbf16, #tpu.memory_space<vmem>>, %arg9: memref<1x1x128xf32, #tpu.memory_space<vmem>>, %arg10: memref<1x1x128xf32, #tpu.memory_space<vmem>>, %arg11: memref<1x1x128xf32, #tpu.memory_space<vmem>>, %arg12: memref<1x128x256xbf16, #tpu.memory_space<vmem>>, %arg13: memref<1x1x256xf32, #tpu.memory_space<vmem>>, %arg14: memref<1x256x128xbf16, #tpu.memory_space<vmem>>, %arg15: memref<1x1x128xf32, #tpu.memory_space<vmem>>, %arg16: memref<1x1x128xf32, #tpu.memory_space<vmem>>, %arg17: memref<1x1x128xf32, #tpu.memory_space<vmem>>, %arg18: memref<16x128xf32, #tpu.memory_space<vmem>>) attributes {dimension_semantics = [#tpu.dimension_semantics<parallel>, #tpu.dimension_semantics<arbitrary>], iteration_bounds = array<i64: 1, 2>, scalar_prefetch = 0 : i64, scratch_operands = 0 : i64, tpu.core_type = #tpu.core_type<tc>, window_params = [{transform_indices = @transform_0, window_bounds = array<i64: 16, 128>}, {pipeline_mode = #tpu.pipeline_mode<synchronous>, transform_indices = @transform_1, window_bounds = array<i64: 2, 8>}, {pipeline_mode = #tpu.pipeline_mode<synchronous>, transform_indices = @transform_2, window_bounds = array<i64: 1, 128>}, {pipeline_mode = #tpu.pipeline_mode<synchronous>, transform_indices = @transform_3, window_bounds = array<i64: 1, 128>}, {transform_indices = @transform_4, window_bounds = array<i64: 1, 128, 384>}, {transform_indices = @transform_5, window_bounds = array<i64: 1, 1, 384>}, {transform_indices = @transform_6, window_bounds = array<i64: 1, 128, 128>}, {transform_indices = @transform_7, window_bounds = array<i64: 1, 1, 128>}, {transform_indices = @transform_8, window_bounds = array<i64: 1, 1, 128>}, {transform_indices = @transform_9, window_bounds = array<i64: 1, 1, 128>}, {transform_indices = @transform_10, window_bounds = array<i64: 1, 128, 256>}, {transform_indices = @transform_11, window_bounds = array<i64: 1, 1, 256>}, {transform_indices = @transform_12, window_bounds = array<i64: 1, 256, 128>}, {transform_indices = @transform_13, window_bounds = array<i64: 1, 1, 128>}, {transform_indices = @transform_14, window_bounds = array<i64: 1, 1, 128>}, {transform_indices = @transform_15, window_bounds = array<i64: 1, 1, 128>}, {transform_indices = @transform_16, window_bounds = array<i64: 16, 128>}]} {
    %c0_i32 = arith.constant 0 : i32
    %0 = arith.cmpi eq, %arg1, %c0_i32 : i32
    %1 = arith.extui %0 : i1 to i32
    %c0_i32_0 = arith.constant 0 : i32
    %2 = arith.cmpi ne, %1, %c0_i32_0 : i32
    scf.if %2 {
      %c0_85 = arith.constant 0 : index
      %c0_86 = arith.constant 0 : index
      %208 = vector.load %arg2[%c0_85, %c0_86] : memref<16x128xf32, #tpu.memory_space<vmem>>, vector<16x128xf32>
      %c0_87 = arith.constant 0 : index
      %c0_88 = arith.constant 0 : index
      %209 = vector.load %arg4[%c0_87, %c0_88] : memref<1x128xf32, #tpu.memory_space<vmem>>, vector<1x128xf32>
      %c0_89 = arith.constant 0 : index
      %c0_90 = arith.constant 0 : index
      %210 = vector.load %arg5[%c0_89, %c0_90] : memref<1x128xf32, #tpu.memory_space<vmem>>, vector<1x128xf32>
      %cst_91 = arith.constant dense<0.000000e+00> : vector<16xf32>
      %211 = vector.multi_reduction <add>, %208, %cst_91 [1] : vector<16x128xf32> to vector<16xf32>
      %212 = vector.shape_cast %211 : vector<16xf32> to vector<16x1xf32>
      %cst_92 = arith.constant 1.280000e+02 : f32
      %213 = vector.broadcast %cst_92 : f32 to vector<16x1xf32>
      %214 = arith.divf %212, %213 : vector<16x1xf32>
      %215 = vector.broadcast %214 : vector<16x1xf32> to vector<16x128xf32>
      %216 = arith.subf %208, %215 : vector<16x128xf32>
      %217 = arith.mulf %216, %216 : vector<16x128xf32>
      %cst_93 = arith.constant dense<0.000000e+00> : vector<16xf32>
      %218 = vector.multi_reduction <add>, %217, %cst_93 [1] : vector<16x128xf32> to vector<16xf32>
      %219 = vector.shape_cast %218 : vector<16xf32> to vector<16x1xf32>
      %cst_94 = arith.constant 1.280000e+02 : f32
      %220 = vector.broadcast %cst_94 : f32 to vector<16x1xf32>
      %221 = arith.divf %219, %220 : vector<16x1xf32>
      %222 = vector.broadcast %214 : vector<16x1xf32> to vector<16x128xf32>
      %223 = arith.subf %208, %222 : vector<16x128xf32>
      %cst_95 = arith.constant 9.99999996E-13 : f32
      %224 = vector.broadcast %cst_95 : f32 to vector<16x1xf32>
      %225 = arith.addf %221, %224 : vector<16x1xf32>
      %226 = math.rsqrt %225 : vector<16x1xf32>
      %227 = vector.broadcast %226 : vector<16x1xf32> to vector<16x128xf32>
      %228 = arith.mulf %223, %227 : vector<16x128xf32>
      %229 = vector.broadcast %209 : vector<1x128xf32> to vector<16x128xf32>
      %230 = arith.mulf %228, %229 : vector<16x128xf32>
      %231 = vector.broadcast %210 : vector<1x128xf32> to vector<16x128xf32>
      %232 = arith.addf %230, %231 : vector<16x128xf32>
      %c0_96 = arith.constant 0 : index
      %c0_97 = arith.constant 0 : index
      %233 = vector.load %arg18[%c0_96, %c0_97] : memref<16x128xf32, #tpu.memory_space<vmem>>, vector<16x128xf32>
      tpu.vector_store %arg18[%c0_96, %c0_97], %232 {strides = array<i32>} : memref<16x128xf32, #tpu.memory_space<vmem>>, vector<16x128xf32>,
    } else {
    }
    %c0 = arith.constant 0 : index
    %c0_1 = arith.constant 0 : index
    %3 = vector.load %arg18[%c0, %c0_1] : memref<16x128xf32, #tpu.memory_space<vmem>>, vector<16x128xf32>
    %4 = arith.truncf %3 : vector<16x128xf32> to vector<16x128xbf16>
    %c0_2 = arith.constant 0 : index
    %c0_3 = arith.constant 0 : index
    %c0_4 = arith.constant 0 : index
    %5 = vector.load %arg6[%c0_2, %c0_3, %c0_4] : memref<1x128x384xbf16, #tpu.memory_space<vmem>>, vector<1x128x384xbf16>
    %6 = vector.shape_cast %5 : vector<1x128x384xbf16> to vector<128x384xbf16>
    %cst = arith.constant dense<0.000000e+00> : vector<16x384xf32>
    %7 = tpu.matmul %4, %6, %cst {dimension_numbers = #tpu.dot_dimension_numbers<[1], [0], [0], [1], [0, 0, 1, 1], [], []>} : vector<16x128xbf16>, vector<128x384xbf16>, vector<16x384xf32> -> vector<16x384xf32>
    %c0_5 = arith.constant 0 : index
    %c0_6 = arith.constant 0 : index
    %c0_7 = arith.constant 0 : index
    %8 = vector.load %arg7[%c0_5, %c0_6, %c0_7] : memref<1x1x384xf32, #tpu.memory_space<vmem>>, vector<1x1x384xf32>
    %9 = vector.shape_cast %8 : vector<1x1x384xf32> to vector<1x384xf32>
    %10 = vector.broadcast %9 : vector<1x384xf32> to vector<16x384xf32>
    %11 = arith.addf %7, %10 : vector<16x384xf32>
    %12 = vector.extract_strided_slice %11 {offsets = [0, 0], sizes = [16, 128], strides = [1, 1]} : vector<16x384xf32> to vector<16x128xf32>
    %13 = vector.shape_cast %12 : vector<16x128xf32> to vector<2x8x128xf32>
    %14 = arith.truncf %13 : vector<2x8x128xf32> to vector<2x8x128xbf16>
    %15 = vector.extract_strided_slice %11 {offsets = [0, 128], sizes = [16, 128], strides = [1, 1]} : vector<16x384xf32> to vector<16x128xf32>
    %16 = vector.shape_cast %15 : vector<16x128xf32> to vector<2x8x128xf32>
    %17 = arith.truncf %16 : vector<2x8x128xf32> to vector<2x8x128xbf16>
    %18 = vector.extract_strided_slice %11 {offsets = [0, 256], sizes = [16, 128], strides = [1, 1]} : vector<16x384xf32> to vector<16x128xf32>
    %19 = vector.shape_cast %18 : vector<16x128xf32> to vector<2x8x128xf32>
    %20 = arith.truncf %19 : vector<2x8x128xf32> to vector<2x8x128xbf16>
    %c0_8 = arith.constant 0 : index
    %c0_9 = arith.constant 0 : index
    %21 = vector.load %arg3[%c0_8, %c0_9] : memref<2x8xf32, #tpu.memory_space<vmem>>, vector<2x8xf32>
    %22 = vector.shape_cast %21 : vector<2x8xf32> to vector<2x1x8xf32>
    %cst_10 = arith.constant 0.000000e+00 : f32
    %23 = vector.broadcast %cst_10 : f32 to vector<16x128xf32>
    %24 = vector.extract_strided_slice %14 {offsets = [0, 0, 0], sizes = [2, 8, 32], strides = [1, 1, 1]} : vector<2x8x128xbf16> to vector<2x8x32xbf16>
    %25 = vector.extract_strided_slice %17 {offsets = [0, 0, 0], sizes = [2, 8, 32], strides = [1, 1, 1]} : vector<2x8x128xbf16> to vector<2x8x32xbf16>
    %26 = vector.extract_strided_slice %20 {offsets = [0, 0, 0], sizes = [2, 8, 32], strides = [1, 1, 1]} : vector<2x8x128xbf16> to vector<2x8x32xbf16>
    "tpu.trace_start"() <{level = 10 : i32, message = "bqd,bkd->bqk"}> : () -> ()
    %cst_11 = arith.constant dense<0.000000e+00> : vector<2x8x8xf32>
    %27 = tpu.matmul %24, %25, %cst_11 {dimension_numbers = #tpu.dot_dimension_numbers<[2], [2], [1], [1], [0, 0, 0, 1, 1, 1], [0], [0]>} : vector<2x8x32xbf16>, vector<2x8x32xbf16>, vector<2x8x8xf32> -> vector<2x8x8xf32>
    "tpu.trace_stop"() : () -> ()
    %28 = vector.broadcast %22 : vector<2x1x8xf32> to vector<2x8x8xf32>
    %29 = arith.addf %27, %28 : vector<2x8x8xf32>
    %cst_12 = arith.constant dense<0xFF800000> : vector<2x8xf32>
    %30 = vector.multi_reduction <maximumf>, %29, %cst_12 [2] : vector<2x8x8xf32> to vector<2x8xf32>
    %31 = vector.shape_cast %30 : vector<2x8xf32> to vector<2x8x1xf32>
    %32 = vector.broadcast %31 : vector<2x8x1xf32> to vector<2x8x8xf32>
    %33 = arith.subf %29, %32 : vector<2x8x8xf32>
    %34 = math.exp %33 : vector<2x8x8xf32>
    %cst_13 = arith.constant dense<0.000000e+00> : vector<2x8xf32>
    %35 = vector.multi_reduction <add>, %34, %cst_13 [2] : vector<2x8x8xf32> to vector<2x8xf32>
    %36 = vector.shape_cast %35 : vector<2x8xf32> to vector<2x8x1xf32>
    %37 = tpu.reciprocal %36 {approx = true} : vector<2x8x1xf32> -> vector<2x8x1xf32>
    %38 = vector.broadcast %37 : vector<2x8x1xf32> to vector<2x8x8xf32>
    %39 = arith.mulf %34, %38 : vector<2x8x8xf32>
    %40 = arith.truncf %39 : vector<2x8x8xf32> to vector<2x8x8xbf16>
    "tpu.trace_start"() <{level = 10 : i32, message = "bqk,bkd->bqd"}> : () -> ()
    %cst_14 = arith.constant dense<0.000000e+00> : vector<2x8x32xf32>
    %41 = tpu.matmul %40, %26, %cst_14 {dimension_numbers = #tpu.dot_dimension_numbers<[2], [1], [1], [2], [0, 0, 0, 1, 1, 2], [0], [0]>} : vector<2x8x8xbf16>, vector<2x8x32xbf16>, vector<2x8x32xf32> -> vector<2x8x32xf32>
    "tpu.trace_stop"() : () -> ()
    %42 = vector.shape_cast %41 : vector<2x8x32xf32> to vector<16x32xf32>
    %43 = arith.truncf %42 : vector<16x32xf32> to vector<16x32xbf16>
    %c0_15 = arith.constant 0 : index
    %c0_16 = arith.constant 0 : index
    %c0_17 = arith.constant 0 : index
    %44 = vector.load %arg8[%c0_15, %c0_16, %c0_17] : memref<1x128x128xbf16, #tpu.memory_space<vmem>>, vector<1x32x128xbf16>
    %45 = vector.shape_cast %44 : vector<1x32x128xbf16> to vector<32x128xbf16>
    %cst_18 = arith.constant dense<0.000000e+00> : vector<16x128xf32>
    %46 = tpu.matmul %43, %45, %cst_18 {dimension_numbers = #tpu.dot_dimension_numbers<[1], [0], [0], [1], [0, 0, 1, 1], [], []>} : vector<16x32xbf16>, vector<32x128xbf16>, vector<16x128xf32> -> vector<16x128xf32>
    %47 = arith.addf %23, %46 : vector<16x128xf32>
    %48 = vector.extract_strided_slice %14 {offsets = [0, 0, 32], sizes = [2, 8, 32], strides = [1, 1, 1]} : vector<2x8x128xbf16> to vector<2x8x32xbf16>
    %49 = vector.extract_strided_slice %17 {offsets = [0, 0, 32], sizes = [2, 8, 32], strides = [1, 1, 1]} : vector<2x8x128xbf16> to vector<2x8x32xbf16>
    %50 = vector.extract_strided_slice %20 {offsets = [0, 0, 32], sizes = [2, 8, 32], strides = [1, 1, 1]} : vector<2x8x128xbf16> to vector<2x8x32xbf16>
    "tpu.trace_start"() <{level = 10 : i32, message = "bqd,bkd->bqk"}> : () -> ()
    %cst_19 = arith.constant dense<0.000000e+00> : vector<2x8x8xf32>
    %51 = tpu.matmul %48, %49, %cst_19 {dimension_numbers = #tpu.dot_dimension_numbers<[2], [2], [1], [1], [0, 0, 0, 1, 1, 1], [0], [0]>} : vector<2x8x32xbf16>, vector<2x8x32xbf16>, vector<2x8x8xf32> -> vector<2x8x8xf32>
    "tpu.trace_stop"() : () -> ()
    %52 = vector.broadcast %22 : vector<2x1x8xf32> to vector<2x8x8xf32>
    %53 = arith.addf %51, %52 : vector<2x8x8xf32>
    %cst_20 = arith.constant dense<0xFF800000> : vector<2x8xf32>
    %54 = vector.multi_reduction <maximumf>, %53, %cst_20 [2] : vector<2x8x8xf32> to vector<2x8xf32>
    %55 = vector.shape_cast %54 : vector<2x8xf32> to vector<2x8x1xf32>
    %56 = vector.broadcast %55 : vector<2x8x1xf32> to vector<2x8x8xf32>
    %57 = arith.subf %53, %56 : vector<2x8x8xf32>
    %58 = math.exp %57 : vector<2x8x8xf32>
    %cst_21 = arith.constant dense<0.000000e+00> : vector<2x8xf32>
    %59 = vector.multi_reduction <add>, %58, %cst_21 [2] : vector<2x8x8xf32> to vector<2x8xf32>
    %60 = vector.shape_cast %59 : vector<2x8xf32> to vector<2x8x1xf32>
    %61 = tpu.reciprocal %60 {approx = true} : vector<2x8x1xf32> -> vector<2x8x1xf32>
    %62 = vector.broadcast %61 : vector<2x8x1xf32> to vector<2x8x8xf32>
    %63 = arith.mulf %58, %62 : vector<2x8x8xf32>
    %64 = arith.truncf %63 : vector<2x8x8xf32> to vector<2x8x8xbf16>
    "tpu.trace_start"() <{level = 10 : i32, message = "bqk,bkd->bqd"}> : () -> ()
    %cst_22 = arith.constant dense<0.000000e+00> : vector<2x8x32xf32>
    %65 = tpu.matmul %64, %50, %cst_22 {dimension_numbers = #tpu.dot_dimension_numbers<[2], [1], [1], [2], [0, 0, 0, 1, 1, 2], [0], [0]>} : vector<2x8x8xbf16>, vector<2x8x32xbf16>, vector<2x8x32xf32> -> vector<2x8x32xf32>
    "tpu.trace_stop"() : () -> ()
    %66 = vector.shape_cast %65 : vector<2x8x32xf32> to vector<16x32xf32>
    %67 = arith.truncf %66 : vector<16x32xf32> to vector<16x32xbf16>
    %c0_23 = arith.constant 0 : index
    %c32 = arith.constant 32 : index
    %c0_24 = arith.constant 0 : index
    %68 = vector.load %arg8[%c0_23, %c32, %c0_24] : memref<1x128x128xbf16, #tpu.memory_space<vmem>>, vector<1x32x128xbf16>
    %69 = vector.shape_cast %68 : vector<1x32x128xbf16> to vector<32x128xbf16>
    %cst_25 = arith.constant dense<0.000000e+00> : vector<16x128xf32>
    %70 = tpu.matmul %67, %69, %cst_25 {dimension_numbers = #tpu.dot_dimension_numbers<[1], [0], [0], [1], [0, 0, 1, 1], [], []>} : vector<16x32xbf16>, vector<32x128xbf16>, vector<16x128xf32> -> vector<16x128xf32>
    %71 = arith.addf %47, %70 : vector<16x128xf32>
    %72 = vector.extract_strided_slice %14 {offsets = [0, 0, 64], sizes = [2, 8, 32], strides = [1, 1, 1]} : vector<2x8x128xbf16> to vector<2x8x32xbf16>
    %73 = vector.extract_strided_slice %17 {offsets = [0, 0, 64], sizes = [2, 8, 32], strides = [1, 1, 1]} : vector<2x8x128xbf16> to vector<2x8x32xbf16>
    %74 = vector.extract_strided_slice %20 {offsets = [0, 0, 64], sizes = [2, 8, 32], strides = [1, 1, 1]} : vector<2x8x128xbf16> to vector<2x8x32xbf16>
    "tpu.trace_start"() <{level = 10 : i32, message = "bqd,bkd->bqk"}> : () -> ()
    %cst_26 = arith.constant dense<0.000000e+00> : vector<2x8x8xf32>
    %75 = tpu.matmul %72, %73, %cst_26 {dimension_numbers = #tpu.dot_dimension_numbers<[2], [2], [1], [1], [0, 0, 0, 1, 1, 1], [0], [0]>} : vector<2x8x32xbf16>, vector<2x8x32xbf16>, vector<2x8x8xf32> -> vector<2x8x8xf32>
    "tpu.trace_stop"() : () -> ()
    %76 = vector.broadcast %22 : vector<2x1x8xf32> to vector<2x8x8xf32>
    %77 = arith.addf %75, %76 : vector<2x8x8xf32>
    %cst_27 = arith.constant dense<0xFF800000> : vector<2x8xf32>
    %78 = vector.multi_reduction <maximumf>, %77, %cst_27 [2] : vector<2x8x8xf32> to vector<2x8xf32>
    %79 = vector.shape_cast %78 : vector<2x8xf32> to vector<2x8x1xf32>
    %80 = vector.broadcast %79 : vector<2x8x1xf32> to vector<2x8x8xf32>
    %81 = arith.subf %77, %80 : vector<2x8x8xf32>
    %82 = math.exp %81 : vector<2x8x8xf32>
    %cst_28 = arith.constant dense<0.000000e+00> : vector<2x8xf32>
    %83 = vector.multi_reduction <add>, %82, %cst_28 [2] : vector<2x8x8xf32> to vector<2x8xf32>
    %84 = vector.shape_cast %83 : vector<2x8xf32> to vector<2x8x1xf32>
    %85 = tpu.reciprocal %84 {approx = true} : vector<2x8x1xf32> -> vector<2x8x1xf32>
    %86 = vector.broadcast %85 : vector<2x8x1xf32> to vector<2x8x8xf32>
    %87 = arith.mulf %82, %86 : vector<2x8x8xf32>
    %88 = arith.truncf %87 : vector<2x8x8xf32> to vector<2x8x8xbf16>
    "tpu.trace_start"() <{level = 10 : i32, message = "bqk,bkd->bqd"}> : () -> ()
    %cst_29 = arith.constant dense<0.000000e+00> : vector<2x8x32xf32>
    %89 = tpu.matmul %88, %74, %cst_29 {dimension_numbers = #tpu.dot_dimension_numbers<[2], [1], [1], [2], [0, 0, 0, 1, 1, 2], [0], [0]>} : vector<2x8x8xbf16>, vector<2x8x32xbf16>, vector<2x8x32xf32> -> vector<2x8x32xf32>
    "tpu.trace_stop"() : () -> ()
    %90 = vector.shape_cast %89 : vector<2x8x32xf32> to vector<16x32xf32>
    %91 = arith.truncf %90 : vector<16x32xf32> to vector<16x32xbf16>
    %c0_30 = arith.constant 0 : index
    %c64 = arith.constant 64 : index
    %c0_31 = arith.constant 0 : index
    %92 = vector.load %arg8[%c0_30, %c64, %c0_31] : memref<1x128x128xbf16, #tpu.memory_space<vmem>>, vector<1x32x128xbf16>
    %93 = vector.shape_cast %92 : vector<1x32x128xbf16> to vector<32x128xbf16>
    %cst_32 = arith.constant dense<0.000000e+00> : vector<16x128xf32>
    %94 = tpu.matmul %91, %93, %cst_32 {dimension_numbers = #tpu.dot_dimension_numbers<[1], [0], [0], [1], [0, 0, 1, 1], [], []>} : vector<16x32xbf16>, vector<32x128xbf16>, vector<16x128xf32> -> vector<16x128xf32>
    %95 = arith.addf %71, %94 : vector<16x128xf32>
    %96 = vector.extract_strided_slice %14 {offsets = [0, 0, 96], sizes = [2, 8, 32], strides = [1, 1, 1]} : vector<2x8x128xbf16> to vector<2x8x32xbf16>
    %97 = vector.extract_strided_slice %17 {offsets = [0, 0, 96], sizes = [2, 8, 32], strides = [1, 1, 1]} : vector<2x8x128xbf16> to vector<2x8x32xbf16>
    %98 = vector.extract_strided_slice %20 {offsets = [0, 0, 96], sizes = [2, 8, 32], strides = [1, 1, 1]} : vector<2x8x128xbf16> to vector<2x8x32xbf16>
    "tpu.trace_start"() <{level = 10 : i32, message = "bqd,bkd->bqk"}> : () -> ()
    %cst_33 = arith.constant dense<0.000000e+00> : vector<2x8x8xf32>
    %99 = tpu.matmul %96, %97, %cst_33 {dimension_numbers = #tpu.dot_dimension_numbers<[2], [2], [1], [1], [0, 0, 0, 1, 1, 1], [0], [0]>} : vector<2x8x32xbf16>, vector<2x8x32xbf16>, vector<2x8x8xf32> -> vector<2x8x8xf32>
    "tpu.trace_stop"() : () -> ()
    %100 = vector.broadcast %22 : vector<2x1x8xf32> to vector<2x8x8xf32>
    %101 = arith.addf %99, %100 : vector<2x8x8xf32>
    %cst_34 = arith.constant dense<0xFF800000> : vector<2x8xf32>
    %102 = vector.multi_reduction <maximumf>, %101, %cst_34 [2] : vector<2x8x8xf32> to vector<2x8xf32>
    %103 = vector.shape_cast %102 : vector<2x8xf32> to vector<2x8x1xf32>
    %104 = vector.broadcast %103 : vector<2x8x1xf32> to vector<2x8x8xf32>
    %105 = arith.subf %101, %104 : vector<2x8x8xf32>
    %106 = math.exp %105 : vector<2x8x8xf32>
    %cst_35 = arith.constant dense<0.000000e+00> : vector<2x8xf32>
    %107 = vector.multi_reduction <add>, %106, %cst_35 [2] : vector<2x8x8xf32> to vector<2x8xf32>
    %108 = vector.shape_cast %107 : vector<2x8xf32> to vector<2x8x1xf32>
    %109 = tpu.reciprocal %108 {approx = true} : vector<2x8x1xf32> -> vector<2x8x1xf32>
    %110 = vector.broadcast %109 : vector<2x8x1xf32> to vector<2x8x8xf32>
    %111 = arith.mulf %106, %110 : vector<2x8x8xf32>
    %112 = arith.truncf %111 : vector<2x8x8xf32> to vector<2x8x8xbf16>
    "tpu.trace_start"() <{level = 10 : i32, message = "bqk,bkd->bqd"}> : () -> ()
    %cst_36 = arith.constant dense<0.000000e+00> : vector<2x8x32xf32>
    %113 = tpu.matmul %112, %98, %cst_36 {dimension_numbers = #tpu.dot_dimension_numbers<[2], [1], [1], [2], [0, 0, 0, 1, 1, 2], [0], [0]>} : vector<2x8x8xbf16>, vector<2x8x32xbf16>, vector<2x8x32xf32> -> vector<2x8x32xf32>
    "tpu.trace_stop"() : () -> ()
    %114 = vector.shape_cast %113 : vector<2x8x32xf32> to vector<16x32xf32>
    %115 = arith.truncf %114 : vector<16x32xf32> to vector<16x32xbf16>
    %c0_37 = arith.constant 0 : index
    %c96 = arith.constant 96 : index
    %c0_38 = arith.constant 0 : index
    %116 = vector.load %arg8[%c0_37, %c96, %c0_38] : memref<1x128x128xbf16, #tpu.memory_space<vmem>>, vector<1x32x128xbf16>
    %117 = vector.shape_cast %116 : vector<1x32x128xbf16> to vector<32x128xbf16>
    %cst_39 = arith.constant dense<0.000000e+00> : vector<16x128xf32>
    %118 = tpu.matmul %115, %117, %cst_39 {dimension_numbers = #tpu.dot_dimension_numbers<[1], [0], [0], [1], [0, 0, 1, 1], [], []>} : vector<16x32xbf16>, vector<32x128xbf16>, vector<16x128xf32> -> vector<16x128xf32>
    %119 = arith.addf %95, %118 : vector<16x128xf32>
    %c0_40 = arith.constant 0 : index
    %c0_41 = arith.constant 0 : index
    %c0_42 = arith.constant 0 : index
    %120 = vector.load %arg9[%c0_40, %c0_41, %c0_42] : memref<1x1x128xf32, #tpu.memory_space<vmem>>, vector<1x1x128xf32>
    %121 = vector.shape_cast %120 : vector<1x1x128xf32> to vector<1x128xf32>
    %122 = vector.broadcast %121 : vector<1x128xf32> to vector<16x128xf32>
    %123 = arith.addf %119, %122 : vector<16x128xf32>
    %124 = arith.addf %3, %123 : vector<16x128xf32>
    %c0_43 = arith.constant 0 : index
    %c0_44 = arith.constant 0 : index
    %c0_45 = arith.constant 0 : index
    %125 = vector.load %arg10[%c0_43, %c0_44, %c0_45] : memref<1x1x128xf32, #tpu.memory_space<vmem>>, vector<1x1x128xf32>
    %126 = vector.shape_cast %125 : vector<1x1x128xf32> to vector<1x128xf32>
    %c0_46 = arith.constant 0 : index
    %c0_47 = arith.constant 0 : index
    %c0_48 = arith.constant 0 : index
    %127 = vector.load %arg11[%c0_46, %c0_47, %c0_48] : memref<1x1x128xf32, #tpu.memory_space<vmem>>, vector<1x1x128xf32>
    %128 = vector.shape_cast %127 : vector<1x1x128xf32> to vector<1x128xf32>
    %cst_49 = arith.constant dense<0.000000e+00> : vector<16xf32>
    %129 = vector.multi_reduction <add>, %124, %cst_49 [1] : vector<16x128xf32> to vector<16xf32>
    %130 = vector.shape_cast %129 : vector<16xf32> to vector<16x1xf32>
    %cst_50 = arith.constant 1.280000e+02 : f32
    %131 = vector.broadcast %cst_50 : f32 to vector<16x1xf32>
    %132 = arith.divf %130, %131 : vector<16x1xf32>
    %133 = vector.broadcast %132 : vector<16x1xf32> to vector<16x128xf32>
    %134 = arith.subf %124, %133 : vector<16x128xf32>
    %135 = arith.mulf %134, %134 : vector<16x128xf32>
    %cst_51 = arith.constant dense<0.000000e+00> : vector<16xf32>
    %136 = vector.multi_reduction <add>, %135, %cst_51 [1] : vector<16x128xf32> to vector<16xf32>
    %137 = vector.shape_cast %136 : vector<16xf32> to vector<16x1xf32>
    %cst_52 = arith.constant 1.280000e+02 : f32
    %138 = vector.broadcast %cst_52 : f32 to vector<16x1xf32>
    %139 = arith.divf %137, %138 : vector<16x1xf32>
    %140 = vector.broadcast %132 : vector<16x1xf32> to vector<16x128xf32>
    %141 = arith.subf %124, %140 : vector<16x128xf32>
    %cst_53 = arith.constant 9.99999996E-13 : f32
    %142 = vector.broadcast %cst_53 : f32 to vector<16x1xf32>
    %143 = arith.addf %139, %142 : vector<16x1xf32>
    %144 = math.rsqrt %143 : vector<16x1xf32>
    %145 = vector.broadcast %144 : vector<16x1xf32> to vector<16x128xf32>
    %146 = arith.mulf %141, %145 : vector<16x128xf32>
    %147 = vector.broadcast %126 : vector<1x128xf32> to vector<16x128xf32>
    %148 = arith.mulf %146, %147 : vector<16x128xf32>
    %149 = vector.broadcast %128 : vector<1x128xf32> to vector<16x128xf32>
    %150 = arith.addf %148, %149 : vector<16x128xf32>
    %151 = arith.truncf %150 : vector<16x128xf32> to vector<16x128xbf16>
    %c0_54 = arith.constant 0 : index
    %c0_55 = arith.constant 0 : index
    %c0_56 = arith.constant 0 : index
    %152 = vector.load %arg12[%c0_54, %c0_55, %c0_56] : memref<1x128x256xbf16, #tpu.memory_space<vmem>>, vector<1x128x256xbf16>
    %153 = vector.shape_cast %152 : vector<1x128x256xbf16> to vector<128x256xbf16>
    %cst_57 = arith.constant dense<0.000000e+00> : vector<16x256xf32>
    %154 = tpu.matmul %151, %153, %cst_57 {dimension_numbers = #tpu.dot_dimension_numbers<[1], [0], [0], [1], [0, 0, 1, 1], [], []>} : vector<16x128xbf16>, vector<128x256xbf16>, vector<16x256xf32> -> vector<16x256xf32>
    %c0_58 = arith.constant 0 : index
    %c0_59 = arith.constant 0 : index
    %c0_60 = arith.constant 0 : index
    %155 = vector.load %arg13[%c0_58, %c0_59, %c0_60] : memref<1x1x256xf32, #tpu.memory_space<vmem>>, vector<1x1x256xf32>
    %156 = vector.shape_cast %155 : vector<1x1x256xf32> to vector<1x256xf32>
    %157 = vector.broadcast %156 : vector<1x256xf32> to vector<16x256xf32>
    %158 = arith.addf %154, %157 : vector<16x256xf32>
    %159 = arith.mulf %158, %158 : vector<16x256xf32>
    %160 = arith.mulf %158, %159 : vector<16x256xf32>
    %cst_61 = arith.constant 4.471500e-02 : f32
    %161 = vector.broadcast %cst_61 : f32 to vector<16x256xf32>
    %162 = arith.mulf %161, %160 : vector<16x256xf32>
    %163 = arith.addf %158, %162 : vector<16x256xf32>
    %cst_62 = arith.constant 0.797884583 : f32
    %164 = vector.broadcast %cst_62 : f32 to vector<16x256xf32>
    %165 = arith.mulf %164, %163 : vector<16x256xf32>
    %166 = math.tanh %165 : vector<16x256xf32>
    %cst_63 = arith.constant 1.000000e+00 : f32
    %167 = vector.broadcast %cst_63 : f32 to vector<16x256xf32>
    %168 = arith.addf %167, %166 : vector<16x256xf32>
    %cst_64 = arith.constant 5.000000e-01 : f32
    %169 = vector.broadcast %cst_64 : f32 to vector<16x256xf32>
    %170 = arith.mulf %169, %168 : vector<16x256xf32>
    %171 = arith.mulf %158, %170 : vector<16x256xf32>
    %172 = arith.truncf %171 : vector<16x256xf32> to vector<16x256xbf16>
    %c0_65 = arith.constant 0 : index
    %c0_66 = arith.constant 0 : index
    %c0_67 = arith.constant 0 : index
    %173 = vector.load %arg14[%c0_65, %c0_66, %c0_67] : memref<1x256x128xbf16, #tpu.memory_space<vmem>>, vector<1x256x128xbf16>
    %174 = vector.shape_cast %173 : vector<1x256x128xbf16> to vector<256x128xbf16>
    %cst_68 = arith.constant dense<0.000000e+00> : vector<16x128xf32>
    %175 = tpu.matmul %172, %174, %cst_68 {dimension_numbers = #tpu.dot_dimension_numbers<[1], [0], [0], [1], [0, 0, 1, 1], [], []>} : vector<16x256xbf16>, vector<256x128xbf16>, vector<16x128xf32> -> vector<16x128xf32>
    %c0_69 = arith.constant 0 : index
    %c0_70 = arith.constant 0 : index
    %c0_71 = arith.constant 0 : index
    %176 = vector.load %arg15[%c0_69, %c0_70, %c0_71] : memref<1x1x128xf32, #tpu.memory_space<vmem>>, vector<1x1x128xf32>
    %177 = vector.shape_cast %176 : vector<1x1x128xf32> to vector<1x128xf32>
    %178 = vector.broadcast %177 : vector<1x128xf32> to vector<16x128xf32>
    %179 = arith.addf %175, %178 : vector<16x128xf32>
    %180 = arith.addf %150, %179 : vector<16x128xf32>
    %c0_72 = arith.constant 0 : index
    %c0_73 = arith.constant 0 : index
    %c0_74 = arith.constant 0 : index
    %181 = vector.load %arg16[%c0_72, %c0_73, %c0_74] : memref<1x1x128xf32, #tpu.memory_space<vmem>>, vector<1x1x128xf32>
    %182 = vector.shape_cast %181 : vector<1x1x128xf32> to vector<1x128xf32>
    %c0_75 = arith.constant 0 : index
    %c0_76 = arith.constant 0 : index
    %c0_77 = arith.constant 0 : index
    %183 = vector.load %arg17[%c0_75, %c0_76, %c0_77] : memref<1x1x128xf32, #tpu.memory_space<vmem>>, vector<1x1x128xf32>
    %184 = vector.shape_cast %183 : vector<1x1x128xf32> to vector<1x128xf32>
    %cst_78 = arith.constant dense<0.000000e+00> : vector<16xf32>
    %185 = vector.multi_reduction <add>, %180, %cst_78 [1] : vector<16x128xf32> to vector<16xf32>
    %186 = vector.shape_cast %185 : vector<16xf32> to vector<16x1xf32>
    %cst_79 = arith.constant 1.280000e+02 : f32
    %187 = vector.broadcast %cst_79 : f32 to vector<16x1xf32>
    %188 = arith.divf %186, %187 : vector<16x1xf32>
    %189 = vector.broadcast %188 : vector<16x1xf32> to vector<16x128xf32>
    %190 = arith.subf %180, %189 : vector<16x128xf32>
    %191 = arith.mulf %190, %190 : vector<16x128xf32>
    %cst_80 = arith.constant dense<0.000000e+00> : vector<16xf32>
    %192 = vector.multi_reduction <add>, %191, %cst_80 [1] : vector<16x128xf32> to vector<16xf32>
    %193 = vector.shape_cast %192 : vector<16xf32> to vector<16x1xf32>
    %cst_81 = arith.constant 1.280000e+02 : f32
    %194 = vector.broadcast %cst_81 : f32 to vector<16x1xf32>
    %195 = arith.divf %193, %194 : vector<16x1xf32>
    %196 = vector.broadcast %188 : vector<16x1xf32> to vector<16x128xf32>
    %197 = arith.subf %180, %196 : vector<16x128xf32>
    %cst_82 = arith.constant 9.99999996E-13 : f32
    %198 = vector.broadcast %cst_82 : f32 to vector<16x1xf32>
    %199 = arith.addf %195, %198 : vector<16x1xf32>
    %200 = math.rsqrt %199 : vector<16x1xf32>
    %201 = vector.broadcast %200 : vector<16x1xf32> to vector<16x128xf32>
    %202 = arith.mulf %197, %201 : vector<16x128xf32>
    %203 = vector.broadcast %182 : vector<1x128xf32> to vector<16x128xf32>
    %204 = arith.mulf %202, %203 : vector<16x128xf32>
    %205 = vector.broadcast %184 : vector<1x128xf32> to vector<16x128xf32>
    %206 = arith.addf %204, %205 : vector<16x128xf32>
    %c0_83 = arith.constant 0 : index
    %c0_84 = arith.constant 0 : index
    %207 = vector.load %arg18[%c0_83, %c0_84] : memref<16x128xf32, #tpu.memory_space<vmem>>, vector<16x128xf32>
    tpu.vector_store %arg18[%c0_83, %c0_84], %206 {strides = array<i32>} : memref<16x128xf32, #tpu.memory_space<vmem>>, vector<16x128xf32>,
    return
  }
  func.func @transform_0(%arg0: i32, %arg1: i32) -> (i32, i32) {
    %c0_i32 = arith.constant 0 : i32
    %c0_i32_0 = arith.constant 0 : i32
    return %arg0, %c0_i32 : i32, i32
  }
  func.func @transform_1(%arg0: i32, %arg1: i32) -> (i32, i32) {
    %c0_i32 = arith.constant 0 : i32
    %c0_i32_0 = arith.constant 0 : i32
    %c0_i32_1 = arith.constant 0 : i32
    return %c0_i32, %c0_i32_0 : i32, i32
  }
  func.func @transform_2(%arg0: i32, %arg1: i32) -> (i32, i32) {
    %c0_i32 = arith.constant 0 : i32
    %c0_i32_0 = arith.constant 0 : i32
    %c0_i32_1 = arith.constant 0 : i32
    return %c0_i32, %c0_i32_0 : i32, i32
  }
  func.func @transform_3(%arg0: i32, %arg1: i32) -> (i32, i32) {
    %c0_i32 = arith.constant 0 : i32
    %c0_i32_0 = arith.constant 0 : i32
    %c0_i32_1 = arith.constant 0 : i32
    return %c0_i32, %c0_i32_0 : i32, i32
  }
  func.func @transform_4(%arg0: i32, %arg1: i32) -> (i32, i32, i32) {
    %c0_i32 = arith.constant 0 : i32
    %c0_i32_0 = arith.constant 0 : i32
    %c0_i32_1 = arith.constant 0 : i32
    return %arg1, %c0_i32, %c0_i32_0 : i32, i32, i32
  }
  func.func @transform_5(%arg0: i32, %arg1: i32) -> (i32, i32, i32) {
    %c0_i32 = arith.constant 0 : i32
    %c0_i32_0 = arith.constant 0 : i32
    %c0_i32_1 = arith.constant 0 : i32
    return %arg1, %c0_i32, %c0_i32_0 : i32, i32, i32
  }
  func.func @transform_6(%arg0: i32, %arg1: i32) -> (i32, i32, i32) {
    %c0_i32 = arith.constant 0 : i32
    %c0_i32_0 = arith.constant 0 : i32
    %c0_i32_1 = arith.constant 0 : i32
    return %arg1, %c0_i32, %c0_i32_0 : i32, i32, i32
  }
  func.func @transform_7(%arg0: i32, %arg1: i32) -> (i32, i32, i32) {
    %c0_i32 = arith.constant 0 : i32
    %c0_i32_0 = arith.constant 0 : i32
    %c0_i32_1 = arith.constant 0 : i32
    return %arg1, %c0_i32, %c0_i32_0 : i32, i32, i32
  }
  func.func @transform_8(%arg0: i32, %arg1: i32) -> (i32, i32, i32) {
    %c0_i32 = arith.constant 0 : i32
    %c0_i32_0 = arith.constant 0 : i32
    %c0_i32_1 = arith.constant 0 : i32
    return %arg1, %c0_i32, %c0_i32_0 : i32, i32, i32
  }
  func.func @transform_9(%arg0: i32, %arg1: i32) -> (i32, i32, i32) {
    %c0_i32 = arith.constant 0 : i32
    %c0_i32_0 = arith.constant 0 : i32
    %c0_i32_1 = arith.constant 0 : i32
    return %arg1, %c0_i32, %c0_i32_0 : i32, i32, i32
  }
  func.func @transform_10(%arg0: i32, %arg1: i32) -> (i32, i32, i32) {
    %c0_i32 = arith.constant 0 : i32
    %c0_i32_0 = arith.constant 0 : i32
    %c0_i32_1 = arith.constant 0 : i32
    return %arg1, %c0_i32, %c0_i32_0 : i32, i32, i32
  }
  func.func @transform_11(%arg0: i32, %arg1: i32) -> (i32, i32, i32) {
    %c0_i32 = arith.constant 0 : i32
    %c0_i32_0 = arith.constant 0 : i32
    %c0_i32_1 = arith.constant 0 : i32
    return %arg1, %c0_i32, %c0_i32_0 : i32, i32, i32
  }
  func.func @transform_12(%arg0: i32, %arg1: i32) -> (i32, i32, i32) {
    %c0_i32 = arith.constant 0 : i32
    %c0_i32_0 = arith.constant 0 : i32
    %c0_i32_1 = arith.constant 0 : i32
    return %arg1, %c0_i32, %c0_i32_0 : i32, i32, i32
  }
  func.func @transform_13(%arg0: i32, %arg1: i32) -> (i32, i32, i32) {
    %c0_i32 = arith.constant 0 : i32
    %c0_i32_0 = arith.constant 0 : i32
    %c0_i32_1 = arith.constant 0 : i32
    return %arg1, %c0_i32, %c0_i32_0 : i32, i32, i32
  }
  func.func @transform_14(%arg0: i32, %arg1: i32) -> (i32, i32, i32) {
    %c0_i32 = arith.constant 0 : i32
    %c0_i32_0 = arith.constant 0 : i32
    %c0_i32_1 = arith.constant 0 : i32
    return %arg1, %c0_i32, %c0_i32_0 : i32, i32, i32
  }
  func.func @transform_15(%arg0: i32, %arg1: i32) -> (i32, i32, i32) {
    %c0_i32 = arith.constant 0 : i32
    %c0_i32_0 = arith.constant 0 : i32
    %c0_i32_1 = arith.constant 0 : i32
    return %arg1, %c0_i32, %c0_i32_0 : i32, i32, i32
  }
  func.func @transform_16(%arg0: i32, %arg1: i32) -> (i32, i32) {
    %c0_i32 = arith.constant 0 : i32
    %c0_i32_0 = arith.constant 0 : i32
    return %arg0, %c0_i32 : i32, i32
  }
}

</mosaic_0001>

<llo_original>
// kernel: tpu_custom_call.1
$region0: #{tpu_custom_call.1}
  #allocation0 [shape = 'u32[]', space=smem, size = 0x4, offset = 0x4, fixed_abs, tag = 'smem constant byte address 0x4 - core index']
  #allocation1 [shape = 'u32[144,128]{1,0:T(1,128)}', space=vmem, size = 0x12000, scoped, tag = 'internal scratch']
  %s0 = inlined_call_operand.hbm [shape: f32[16,128], index: 0, kind: input, shape index: {}]
  %s1 = inlined_call_operand.hbm [shape: f32[2,8], index: 1, kind: input, shape index: {}]
  %s2 = inlined_call_operand.hbm [shape: f32[1,128], index: 2, kind: input, shape index: {}]
  %s3 = inlined_call_operand.hbm [shape: f32[1,128], index: 3, kind: input, shape index: {}]
  %s4 = inlined_call_operand.hbm [shape: bf16[2,128,384], index: 4, kind: input, shape index: {}]
  %s5 = inlined_call_operand.vmem [shape: f32[2,1,384], index: 5, kind: input, shape index: {}]
  %s6 = inlined_call_operand.hbm [shape: bf16[2,128,128], index: 6, kind: input, shape index: {}]
  %s7 = inlined_call_operand.vmem [shape: f32[2,1,128], index: 7, kind: input, shape index: {}]
  %s8 = inlined_call_operand.vmem [shape: f32[2,1,128], index: 8, kind: input, shape index: {}]
  %s9 = inlined_call_operand.vmem [shape: f32[2,1,128], index: 9, kind: input, shape index: {}]
  %s10 = inlined_call_operand.hbm [shape: bf16[2,128,256], index: 10, kind: input, shape index: {}]
  %s11 = inlined_call_operand.vmem [shape: f32[2,1,256], index: 11, kind: input, shape index: {}]
  %s12 = inlined_call_operand.hbm [shape: bf16[2,256,128], index: 12, kind: input, shape index: {}]
  %s13 = inlined_call_operand.vmem [shape: f32[2,1,128], index: 13, kind: input, shape index: {}]
  %s14 = inlined_call_operand.vmem [shape: f32[2,1,128], index: 14, kind: input, shape index: {}]
  %s15 = inlined_call_operand.vmem [shape: f32[2,1,128], index: 15, kind: input, shape index: {}]
  %s16 = inlined_call_operand.hbm [shape: f32[16,128], index: 16, kind: output, shape index: {}]
  %s17 = sld [smem:[#allocation0]]
  $region133: #{tpu_custom_call.1} parent=0
    _
  %s19 = ssub.s32 1, %s17
  %s20 = scalar_select 0, %s19, %s17
  $region1: #{tpu_custom_call.1} parent=0
    #allocation2 [shape = 'u8[8192]{0}', space=vmem, size = 0x2000, scoped, tag = 'input window, operand 0, single buffered']
    #allocation3 [shape = 's32[2]{0}', space=sflag, size = 0x8, scoped, tag = 'scoped memory for tpu_custom_call.1']
    #allocation4 [shape = 's32[2]{0}', space=sflag, size = 0x8, scoped, tag = 'scoped memory for tpu_custom_call.1']
    #allocation5 [shape = 'u8[1024]{0}', space=vmem, size = 0x400, scoped, tag = 'input window, operand 1, single buffered']
    #allocation6 [shape = 's32[1]{0}', space=sflag, size = 0x4, scoped, tag = 'scoped memory for tpu_custom_call.1']
    #allocation7 [shape = 'u8[512]{0}', space=vmem, size = 0x400, scoped, tag = 'input window, operand 2, single buffered']
    #allocation8 [shape = 'u8[512]{0}', space=vmem, size = 0x400, scoped, tag = 'input window, operand 3, single buffered']
    #allocation9 [shape = 's32[1]{0}', space=sflag, size = 0x4, scoped, tag = 'scoped memory for tpu_custom_call.1']
    #allocation10 [shape = 'u8[196608]{0}', space=vmem, size = 0x30000, scoped, tag = 'input window, operand 4']
    #allocation11 [shape = 'u8[65536]{0}', space=vmem, size = 0x10000, scoped, tag = 'input window, operand 6']
    #allocation12 [shape = 'u8[131072]{0}', space=vmem, size = 0x20000, scoped, tag = 'input window, operand 10']
    #allocation13 [shape = 'u8[131072]{0}', space=vmem, size = 0x20000, scoped, tag = 'input window, operand 12']
    #allocation14 [shape = 'u8[8192]{0}', space=vmem, size = 0x2000, scoped, tag = 'output window, operand 0, single buffered']
    %21 = vsyncpa [#allocation3], 0
    %22 = vsyncpa [#allocation6], 0
    %23 = vsyncpa [#allocation9], 0
    %24 = vsyncpa [#allocation4], 0
    loop: start=0, step=1, limit=4
    $region2: #{tpu_custom_call.1} parent=1 // loop_pre_header
      _
    $region3: #{tpu_custom_call.1} parent=1 // loop_header
      %s26 = sphi 0, %s30
      %p27 = scmp.ge.s32.totalorder %s26, 4
      %s33 = sphi 0, %s45
      %s34 = sphi 0, %s41
      %s35 = sphi 0, %s33
      %s36 = sphi 0, %s34
      %s37 = sphi 0, %s35
      %s38 = sphi 0, %s36
      %s48 = sphi 0, %s50
      %s51 = sphi 0, %s48
      %s52 = sphi 0, %s51
      %s68 = sphi 0, %s52
      %s72 = sphi 0, %s72
      %s74 = sphi 0, %s72
      %s75 = sphi 0, %s74
      %s89 = sphi 0, %s75
      %s93 = sphi 0, %s93
      %s95 = sphi 0, %s93
      %s96 = sphi 0, %s95
      %s110 = sphi 0, %s96
      %s114 = sphi 0, %s114
      %s116 = sphi 0, %s114
      %s117 = sphi 0, %s116
      %s131 = sphi 0, %s117
      %s137 = sphi 0, %s139
      %s140 = sphi 0, %s137
      %s141 = sphi 0, %s140
      %s157 = sphi 0, %s141
      %s163 = sphi 0, %s165
      %s166 = sphi 0, %s163
      %s167 = sphi 0, %s166
      %s183 = sphi 0, %s167
      %s189 = sphi 0, %s191
      %s192 = sphi 0, %s189
      %s193 = sphi 0, %s192
      %s209 = sphi 0, %s193
      %s215 = sphi 0, %s217
      %s218 = sphi 0, %s215
      %s219 = sphi 0, %s218
      %s235 = sphi 0, %s219
      %s241 = sphi 0, %s243
      %s244 = sphi 0, %s241
      %s245 = sphi 0, %s244
      %s261 = sphi 0, %s245
      %s267 = sphi 0, %s269
      %s270 = sphi 0, %s267
      %s271 = sphi 0, %s270
      %s287 = sphi 0, %s271
      %s293 = sphi 0, %s295
      %s296 = sphi 0, %s293
      %s297 = sphi 0, %s296
      %s313 = sphi 0, %s297
      %s319 = sphi 0, %s321
      %s322 = sphi 0, %s319
      %s323 = sphi 0, %s322
      %s339 = sphi 0, %s323
      %s345 = sphi 0, %s347
      %s348 = sphi 0, %s345
      %s349 = sphi 0, %s348
      %s365 = sphi 0, %s349
      %s371 = sphi 0, %s373
      %s374 = sphi 0, %s371
      %s375 = sphi 0, %s374
      %s391 = sphi 0, %s375
      %s397 = sphi 0, %s399
      %s400 = sphi 0, %s397
      %s401 = sphi 0, %s400
      %s417 = sphi 0, %s401
      %s423 = sphi 0, %s425
      %s426 = sphi 0, %s423
      %s427 = sphi 0, %s426
      %s443 = sphi 0, %s427
      %s449 = sphi 0, %s451
      %s452 = sphi 0, %s449
      %s453 = sphi 0, %s452
      %s469 = sphi 0, %s453
    $region4: #{tpu_custom_call.1} parent=1 // loop_header_branch
      %29 = sbr.rel (%p27) target = $region8
    $region5: #{tpu_custom_call.1} parent=1 // loop_body
      %s31 = ssub.s32 %s26, 1
      %s32 = ssub.s32 %s26, 2
      %s39 = sadd.s32 1, %s34
      %p40 = scmp.ge.s32.totalorder %s39, 2
      %s41 = scalar_select %p40, 0, %s39
      %s42 = sadd.s32 1, %s33
      %s43 = scalar_select %p40, %s42, %s33
      %p44 = scmp.ge.s32.totalorder %s43, 1
      %s45 = scalar_select %p44, 0, %s43
      %s46 = ssub.s32 %s33, %s45
      %p47 = scmp.eq.s32.totalorder %s46, 0
      %s49 = sadd.s32 %s48, 1
      %s50 = scalar_select %p47, %s48, %s49
      %p53 = pneg %p47
      %p54 = scmp.eq.s32.totalorder %s26, 1
      %p55 = por %p53, %p54
      %p56 = scmp.ne.s32.totalorder %s48, %s51
      %p57 = scmp.eq.s32.totalorder %s26, 0
      %p58 = por %p56, %p57
      %p59 = scmp.ne.s32.totalorder %s48, %s51
      %p60 = scmp.eq.s32.totalorder %s31, 1
      %p61 = por %p59, %p60
      %p62 = scmp.ne.s32.totalorder %s51, %s52
      %p63 = scmp.eq.s32.totalorder %s31, 0
      %p64 = por %p62, %p63
      %p65 = scmp.ne.s32.totalorder %s51, %s52
      %p66 = scmp.eq.s32.totalorder %s32, 1
      %p67 = por %p65, %p66
      %p69 = scmp.ne.s32.totalorder %s52, %s68
      %p70 = scmp.eq.s32.totalorder %s32, 0
      %p71 = por %p69, %p70
      %s73 = sadd.s32 %s72, 1
      %p76 = scmp.eq.s32.totalorder %s26, 1
      %p77 = scmp.ne.s32.totalorder %s72, %s74
      %p78 = scmp.eq.s32.totalorder %s26, 0
      %p79 = por %p77, %p78
      %p80 = scmp.ne.s32.totalorder %s72, %s74
      %p81 = scmp.eq.s32.totalorder %s31, 1
      %p82 = por %p80, %p81
      %p83 = scmp.ne.s32.totalorder %s74, %s75
      %p84 = scmp.eq.s32.totalorder %s31, 0
      %p85 = por %p83, %p84
      %p86 = scmp.ne.s32.totalorder %s74, %s75
      %p87 = scmp.eq.s32.totalorder %s32, 1
      %p88 = por %p86, %p87
      %p90 = scmp.ne.s32.totalorder %s75, %s89
      %p91 = scmp.eq.s32.totalorder %s32, 0
      %p92 = por %p90, %p91
      %s94 = sadd.s32 %s93, 1
      %p97 = scmp.eq.s32.totalorder %s26, 1
      %p98 = scmp.ne.s32.totalorder %s93, %s95
      %p99 = scmp.eq.s32.totalorder %s26, 0
      %p100 = por %p98, %p99
      %p101 = scmp.ne.s32.totalorder %s93, %s95
      %p102 = scmp.eq.s32.totalorder %s31, 1
      %p103 = por %p101, %p102
      %p104 = scmp.ne.s32.totalorder %s95, %s96
      %p105 = scmp.eq.s32.totalorder %s31, 0
      %p106 = por %p104, %p105
      %p107 = scmp.ne.s32.totalorder %s95, %s96
      %p108 = scmp.eq.s32.totalorder %s32, 1
      %p109 = por %p107, %p108
      %p111 = scmp.ne.s32.totalorder %s96, %s110
      %p112 = scmp.eq.s32.totalorder %s32, 0
      %p113 = por %p111, %p112
      %s115 = sadd.s32 %s114, 1
      %p118 = scmp.eq.s32.totalorder %s26, 1
      %p119 = scmp.ne.s32.totalorder %s114, %s116
      %p120 = scmp.eq.s32.totalorder %s26, 0
      %p121 = por %p119, %p120
      %p122 = scmp.ne.s32.totalorder %s114, %s116
      %p123 = scmp.eq.s32.totalorder %s31, 1
      %p124 = por %p122, %p123
      %p125 = scmp.ne.s32.totalorder %s116, %s117
      %p126 = scmp.eq.s32.totalorder %s31, 0
      %p127 = por %p125, %p126
      %p128 = scmp.ne.s32.totalorder %s116, %s117
      %p129 = scmp.eq.s32.totalorder %s32, 1
      %p130 = por %p128, %p129
      %p132 = scmp.ne.s32.totalorder %s117, %s131
      %p133 = scmp.eq.s32.totalorder %s32, 0
      %p134 = por %p132, %p133
      %s135 = ssub.s32 %s34, %s41
      %p136 = scmp.eq.s32.totalorder %s135, 0
      %s138 = sadd.s32 %s137, 1
      %s139 = scalar_select %p136, %s137, %s138
      %p142 = pneg %p136
      %p143 = scmp.eq.s32.totalorder %s26, 1
      %p144 = por %p142, %p143
      %p145 = scmp.ne.s32.totalorder %s137, %s140
      %p146 = scmp.eq.s32.totalorder %s26, 0
      %p147 = por %p145, %p146
      %p148 = scmp.ne.s32.totalorder %s137, %s140
      %p149 = scmp.eq.s32.totalorder %s31, 1
      %p150 = por %p148, %p149
      %p151 = scmp.ne.s32.totalorder %s140, %s141
      %p152 = scmp.eq.s32.totalorder %s31, 0
      %p153 = por %p151, %p152
      %p154 = scmp.ne.s32.totalorder %s140, %s141
      %p155 = scmp.eq.s32.totalorder %s32, 1
      %p156 = por %p154, %p155
      %p158 = scmp.ne.s32.totalorder %s141, %s157
      %p159 = scmp.eq.s32.totalorder %s32, 0
      %p160 = por %p158, %p159
      %s161 = ssub.s32 %s34, %s41
      %p162 = scmp.eq.s32.totalorder %s161, 0
      %s164 = sadd.s32 %s163, 1
      %s165 = scalar_select %p162, %s163, %s164
      %p168 = pneg %p162
      %p169 = scmp.eq.s32.totalorder %s26, 1
      %p170 = por %p168, %p169
      %p171 = scmp.ne.s32.totalorder %s163, %s166
      %p172 = scmp.eq.s32.totalorder %s26, 0
      %p173 = por %p171, %p172
      %p174 = scmp.ne.s32.totalorder %s163, %s166
      %p175 = scmp.eq.s32.totalorder %s31, 1
      %p176 = por %p174, %p175
      %p177 = scmp.ne.s32.totalorder %s166, %s167
      %p178 = scmp.eq.s32.totalorder %s31, 0
      %p179 = por %p177, %p178
      %p180 = scmp.ne.s32.totalorder %s166, %s167
      %p181 = scmp.eq.s32.totalorder %s32, 1
      %p182 = por %p180, %p181
      %p184 = scmp.ne.s32.totalorder %s167, %s183
      %p185 = scmp.eq.s32.totalorder %s32, 0
      %p186 = por %p184, %p185
      %s187 = ssub.s32 %s34, %s41
      %p188 = scmp.eq.s32.totalorder %s187, 0
      %s190 = sadd.s32 %s189, 1
      %s191 = scalar_select %p188, %s189, %s190
      %p194 = pneg %p188
      %p195 = scmp.eq.s32.totalorder %s26, 1
      %p196 = por %p194, %p195
      %p197 = scmp.ne.s32.totalorder %s189, %s192
      %p198 = scmp.eq.s32.totalorder %s26, 0
      %p199 = por %p197, %p198
      %p200 = scmp.ne.s32.totalorder %s189, %s192
      %p201 = scmp.eq.s32.totalorder %s31, 1
      %p202 = por %p200, %p201
      %p203 = scmp.ne.s32.totalorder %s192, %s193
      %p204 = scmp.eq.s32.totalorder %s31, 0
      %p205 = por %p203, %p204
      %p206 = scmp.ne.s32.totalorder %s192, %s193
      %p207 = scmp.eq.s32.totalorder %s32, 1
      %p208 = por %p206, %p207
      %p210 = scmp.ne.s32.totalorder %s193, %s209
      %p211 = scmp.eq.s32.totalorder %s32, 0
      %p212 = por %p210, %p211
      %s213 = ssub.s32 %s34, %s41
      %p214 = scmp.eq.s32.totalorder %s213, 0
      %s216 = sadd.s32 %s215, 1
      %s217 = scalar_select %p214, %s215, %s216
      %p220 = pneg %p214
      %p221 = scmp.eq.s32.totalorder %s26, 1
      %p222 = por %p220, %p221
      %p223 = scmp.ne.s32.totalorder %s215, %s218
      %p224 = scmp.eq.s32.totalorder %s26, 0
      %p225 = por %p223, %p224
      %p226 = scmp.ne.s32.totalorder %s215, %s218
      %p227 = scmp.eq.s32.totalorder %s31, 1
      %p228 = por %p226, %p227
      %p229 = scmp.ne.s32.totalorder %s218, %s219
      %p230 = scmp.eq.s32.totalorder %s31, 0
      %p231 = por %p229, %p230
      %p232 = scmp.ne.s32.totalorder %s218, %s219
      %p233 = scmp.eq.s32.totalorder %s32, 1
      %p234 = por %p232, %p233
      %p236 = scmp.ne.s32.totalorder %s219, %s235
      %p237 = scmp.eq.s32.totalorder %s32, 0
      %p238 = por %p236, %p237
      %s239 = ssub.s32 %s34, %s41
      %p240 = scmp.eq.s32.totalorder %s239, 0
      %s242 = sadd.s32 %s241, 1
      %s243 = scalar_select %p240, %s241, %s242
      %p246 = pneg %p240
      %p247 = scmp.eq.s32.totalorder %s26, 1
      %p248 = por %p246, %p247
      %p249 = scmp.ne.s32.totalorder %s241, %s244
      %p250 = scmp.eq.s32.totalorder %s26, 0
      %p251 = por %p249, %p250
      %p252 = scmp.ne.s32.totalorder %s241, %s244
      %p253 = scmp.eq.s32.totalorder %s31, 1
      %p254 = por %p252, %p253
      %p255 = scmp.ne.s32.totalorder %s244, %s245
      %p256 = scmp.eq.s32.totalorder %s31, 0
      %p257 = por %p255, %p256
      %p258 = scmp.ne.s32.totalorder %s244, %s245
      %p259 = scmp.eq.s32.totalorder %s32, 1
      %p260 = por %p258, %p259
      %p262 = scmp.ne.s32.totalorder %s245, %s261
      %p263 = scmp.eq.s32.totalorder %s32, 0
      %p264 = por %p262, %p263
      %s265 = ssub.s32 %s34, %s41
      %p266 = scmp.eq.s32.totalorder %s265, 0
      %s268 = sadd.s32 %s267, 1
      %s269 = scalar_select %p266, %s267, %s268
      %p272 = pneg %p266
      %p273 = scmp.eq.s32.totalorder %s26, 1
      %p274 = por %p272, %p273
      %p275 = scmp.ne.s32.totalorder %s267, %s270
      %p276 = scmp.eq.s32.totalorder %s26, 0
      %p277 = por %p275, %p276
      %p278 = scmp.ne.s32.totalorder %s267, %s270
      %p279 = scmp.eq.s32.totalorder %s31, 1
      %p280 = por %p278, %p279
      %p281 = scmp.ne.s32.totalorder %s270, %s271
      %p282 = scmp.eq.s32.totalorder %s31, 0
      %p283 = por %p281, %p282
      %p284 = scmp.ne.s32.totalorder %s270, %s271
      %p285 = scmp.eq.s32.totalorder %s32, 1
      %p286 = por %p284, %p285
      %p288 = scmp.ne.s32.totalorder %s271, %s287
      %p289 = scmp.eq.s32.totalorder %s32, 0
      %p290 = por %p288, %p289
      %s291 = ssub.s32 %s34, %s41
      %p292 = scmp.eq.s32.totalorder %s291, 0
      %s294 = sadd.s32 %s293, 1
      %s295 = scalar_select %p292, %s293, %s294
      %p298 = pneg %p292
      %p299 = scmp.eq.s32.totalorder %s26, 1
      %p300 = por %p298, %p299
      %p301 = scmp.ne.s32.totalorder %s293, %s296
      %p302 = scmp.eq.s32.totalorder %s26, 0
      %p303 = por %p301, %p302
      %p304 = scmp.ne.s32.totalorder %s293, %s296
      %p305 = scmp.eq.s32.totalorder %s31, 1
      %p306 = por %p304, %p305
      %p307 = scmp.ne.s32.totalorder %s296, %s297
      %p308 = scmp.eq.s32.totalorder %s31, 0
      %p309 = por %p307, %p308
      %p310 = scmp.ne.s32.totalorder %s296, %s297
      %p311 = scmp.eq.s32.totalorder %s32, 1
      %p312 = por %p310, %p311
      %p314 = scmp.ne.s32.totalorder %s297, %s313
      %p315 = scmp.eq.s32.totalorder %s32, 0
      %p316 = por %p314, %p315
      %s317 = ssub.s32 %s34, %s41
      %p318 = scmp.eq.s32.totalorder %s317, 0
      %s320 = sadd.s32 %s319, 1
      %s321 = scalar_select %p318, %s319, %s320
      %p324 = pneg %p318
      %p325 = scmp.eq.s32.totalorder %s26, 1
      %p326 = por %p324, %p325
      %p327 = scmp.ne.s32.totalorder %s319, %s322
      %p328 = scmp.eq.s32.totalorder %s26, 0
      %p329 = por %p327, %p328
      %p330 = scmp.ne.s32.totalorder %s319, %s322
      %p331 = scmp.eq.s32.totalorder %s31, 1
      %p332 = por %p330, %p331
      %p333 = scmp.ne.s32.totalorder %s322, %s323
      %p334 = scmp.eq.s32.totalorder %s31, 0
      %p335 = por %p333, %p334
      %p336 = scmp.ne.s32.totalorder %s322, %s323
      %p337 = scmp.eq.s32.totalorder %s32, 1
      %p338 = por %p336, %p337
      %p340 = scmp.ne.s32.totalorder %s323, %s339
      %p341 = scmp.eq.s32.totalorder %s32, 0
      %p342 = por %p340, %p341
      %s343 = ssub.s32 %s34, %s41
      %p344 = scmp.eq.s32.totalorder %s343, 0
      %s346 = sadd.s32 %s345, 1
      %s347 = scalar_select %p344, %s345, %s346
      %p350 = pneg %p344
      %p351 = scmp.eq.s32.totalorder %s26, 1
      %p352 = por %p350, %p351
      %p353 = scmp.ne.s32.totalorder %s345, %s348
      %p354 = scmp.eq.s32.totalorder %s26, 0
      %p355 = por %p353, %p354
      %p356 = scmp.ne.s32.totalorder %s345, %s348
      %p357 = scmp.eq.s32.totalorder %s31, 1
      %p358 = por %p356, %p357
      %p359 = scmp.ne.s32.totalorder %s348, %s349
      %p360 = scmp.eq.s32.totalorder %s31, 0
      %p361 = por %p359, %p360
      %p362 = scmp.ne.s32.totalorder %s348, %s349
      %p363 = scmp.eq.s32.totalorder %s32, 1
      %p364 = por %p362, %p363
      %p366 = scmp.ne.s32.totalorder %s349, %s365
      %p367 = scmp.eq.s32.totalorder %s32, 0
      %p368 = por %p366, %p367
      %s369 = ssub.s32 %s34, %s41
      %p370 = scmp.eq.s32.totalorder %s369, 0
      %s372 = sadd.s32 %s371, 1
      %s373 = scalar_select %p370, %s371, %s372
      %p376 = pneg %p370
      %p377 = scmp.eq.s32.totalorder %s26, 1
      %p378 = por %p376, %p377
      %p379 = scmp.ne.s32.totalorder %s371, %s374
      %p380 = scmp.eq.s32.totalorder %s26, 0
      %p381 = por %p379, %p380
      %p382 = scmp.ne.s32.totalorder %s371, %s374
      %p383 = scmp.eq.s32.totalorder %s31, 1
      %p384 = por %p382, %p383
      %p385 = scmp.ne.s32.totalorder %s374, %s375
      %p386 = scmp.eq.s32.totalorder %s31, 0
      %p387 = por %p385, %p386
      %p388 = scmp.ne.s32.totalorder %s374, %s375
      %p389 = scmp.eq.s32.totalorder %s32, 1
      %p390 = por %p388, %p389
      %p392 = scmp.ne.s32.totalorder %s375, %s391
      %p393 = scmp.eq.s32.totalorder %s32, 0
      %p394 = por %p392, %p393
      %s395 = ssub.s32 %s34, %s41
      %p396 = scmp.eq.s32.totalorder %s395, 0
      %s398 = sadd.s32 %s397, 1
      %s399 = scalar_select %p396, %s397, %s398
      %p402 = pneg %p396
      %p403 = scmp.eq.s32.totalorder %s26, 1
      %p404 = por %p402, %p403
      %p405 = scmp.ne.s32.totalorder %s397, %s400
      %p406 = scmp.eq.s32.totalorder %s26, 0
      %p407 = por %p405, %p406
      %p408 = scmp.ne.s32.totalorder %s397, %s400
      %p409 = scmp.eq.s32.totalorder %s31, 1
      %p410 = por %p408, %p409
      %p411 = scmp.ne.s32.totalorder %s400, %s401
      %p412 = scmp.eq.s32.totalorder %s31, 0
      %p413 = por %p411, %p412
      %p414 = scmp.ne.s32.totalorder %s400, %s401
      %p415 = scmp.eq.s32.totalorder %s32, 1
      %p416 = por %p414, %p415
      %p418 = scmp.ne.s32.totalorder %s401, %s417
      %p419 = scmp.eq.s32.totalorder %s32, 0
      %p420 = por %p418, %p419
      %s421 = ssub.s32 %s34, %s41
      %p422 = scmp.eq.s32.totalorder %s421, 0
      %s424 = sadd.s32 %s423, 1
      %s425 = scalar_select %p422, %s423, %s424
      %p428 = pneg %p422
      %p429 = scmp.eq.s32.totalorder %s26, 1
      %p430 = por %p428, %p429
      %p431 = scmp.ne.s32.totalorder %s423, %s426
      %p432 = scmp.eq.s32.totalorder %s26, 0
      %p433 = por %p431, %p432
      %p434 = scmp.ne.s32.totalorder %s423, %s426
      %p435 = scmp.eq.s32.totalorder %s31, 1
      %p436 = por %p434, %p435
      %p437 = scmp.ne.s32.totalorder %s426, %s427
      %p438 = scmp.eq.s32.totalorder %s31, 0
      %p439 = por %p437, %p438
      %p440 = scmp.ne.s32.totalorder %s426, %s427
      %p441 = scmp.eq.s32.totalorder %s32, 1
      %p442 = por %p440, %p441
      %p444 = scmp.ne.s32.totalorder %s427, %s443
      %p445 = scmp.eq.s32.totalorder %s32, 0
      %p446 = por %p444, %p445
      %s447 = ssub.s32 %s33, %s45
      %p448 = scmp.eq.s32.totalorder %s447, 0
      %s450 = sadd.s32 %s449, 1
      %s451 = scalar_select %p448, %s449, %s450
      %p454 = pneg %p448
      %p455 = scmp.eq.s32.totalorder %s26, 1
      %p456 = por %p454, %p455
      %p457 = scmp.ne.s32.totalorder %s449, %s452
      %p458 = scmp.eq.s32.totalorder %s26, 0
      %p459 = por %p457, %p458
      %p460 = scmp.ne.s32.totalorder %s449, %s452
      %p461 = scmp.eq.s32.totalorder %s31, 1
      %p462 = por %p460, %p461
      %p463 = scmp.ne.s32.totalorder %s452, %s453
      %p464 = scmp.eq.s32.totalorder %s31, 0
      %p465 = por %p463, %p464
      %p466 = scmp.ne.s32.totalorder %s452, %s453
      %p467 = scmp.eq.s32.totalorder %s32, 1
      %p468 = por %p466, %p467
      %p470 = scmp.ne.s32.totalorder %s453, %s469
      %p471 = scmp.eq.s32.totalorder %s32, 0
      %p472 = por %p470, %p471
      %p473 = scmp.le.s32.totalorder 1, %s26
      %p474 = scmp.lt.s32.totalorder %s26, 3
      %p475 = pnand %p473, %p474
      %p476 = pneg %p475
      // Predicated region
      $region9: #{tpu_custom_call.1} parent=5 // pred_check
        _
      $region10: #{tpu_custom_call.1} parent=5 // pred_check_branch
        %478 = sbr.rel (%p475) target = $region12
      $region11: #{tpu_custom_call.1} parent=5 // pred_region
        %s479 = ssub.s32 %s26, 1
        // Predicated region
        $region13: #{tpu_custom_call.1} parent=11 // pred_check
          %p480 = pneg %p64
        $region14: #{tpu_custom_call.1} parent=11 // pred_check_branch
          %482 = sbr.rel (%p480) target = $region16
        $region15: #{tpu_custom_call.1} parent=11 // pred_region
          %s483 = smul.u32 2, %s35
          %s485 = ssub.s32 256, 256
          %486 = vsyncadd [#allocation3], %s485
          %s487 = smul.addr %s483, 128
          %s488 = scalar_lea.hbm %s0, %s487
          %s489 = sshll.u32 [#allocation2], 4
          %s490 = int_to_ptr.vmem [resolvable:$true] %s489
          %495 = dma.hbm_to_vmem [thread:$0]  %s488, 256, %s490, [#allocation3], 128, 128, 8
        $region16: #{tpu_custom_call.1} parent=11 // pred_fallthru
          _
        // Predicated region
        $region17: #{tpu_custom_call.1} parent=11 // pred_check
          %p496 = pneg %p85
        $region18: #{tpu_custom_call.1} parent=11 // pred_check_branch
          %498 = sbr.rel (%p496) target = $region20
        $region19: #{tpu_custom_call.1} parent=11 // pred_region
          %s500 = ssub.s32 32, 32
          %501 = vsyncadd [#allocation6], %s500
          %s503 = sshll.u32 [#allocation5], 4
          %s504 = int_to_ptr.vmem [resolvable:$true] %s503
          %506 = dma.hbm_to_vmem [thread:$0]  %s1, 32, %s504, [#allocation6]
        $region20: #{tpu_custom_call.1} parent=11 // pred_fallthru
          _
        // Predicated region
        $region21: #{tpu_custom_call.1} parent=11 // pred_check
          %p507 = pneg %p106
        $region22: #{tpu_custom_call.1} parent=11 // pred_check_branch
          %509 = sbr.rel (%p507) target = $region24
        $region23: #{tpu_custom_call.1} parent=11 // pred_region
          %s511 = ssub.s32 16, 16
          %512 = vsyncadd [#allocation6], %s511
          %s514 = sshll.u32 [#allocation7], 4
          %s515 = int_to_ptr.vmem [resolvable:$true] %s514
          %517 = dma.hbm_to_vmem [thread:$0]  %s2, 16, %s515, [#allocation6]
        $region24: #{tpu_custom_call.1} parent=11 // pred_fallthru
          _
        // Predicated region
        $region25: #{tpu_custom_call.1} parent=11 // pred_check
          %p518 = pneg %p127
        $region26: #{tpu_custom_call.1} parent=11 // pred_check_branch
          %520 = sbr.rel (%p518) target = $region28
        $region27: #{tpu_custom_call.1} parent=11 // pred_region
          %s522 = ssub.s32 16, 16
          %523 = vsyncadd [#allocation9], %s522
          %s525 = sshll.u32 [#allocation8], 4
          %s526 = int_to_ptr.vmem [resolvable:$true] %s525
          %528 = dma.hbm_to_vmem [thread:$0]  %s3, 16, %s526, [#allocation9]
        $region28: #{tpu_custom_call.1} parent=11 // pred_fallthru
          _
      $region12: #{tpu_custom_call.1} parent=5 // pred_fallthru
        _
      %p529 = scmp.lt.s32.totalorder %s26, 2
      // Predicated region
      $region29: #{tpu_custom_call.1} parent=5 // pred_check
        %p530 = pneg %p529
      $region30: #{tpu_custom_call.1} parent=5 // pred_check_branch
        %532 = sbr.rel (%p530) target = $region32
      $region31: #{tpu_custom_call.1} parent=5 // pred_region
        // Predicated region
        $region33: #{tpu_custom_call.1} parent=31 // pred_check
          %p533 = pneg %p147
        $region34: #{tpu_custom_call.1} parent=31 // pred_check_branch
          %535 = sbr.rel (%p533) target = $region36
        $region35: #{tpu_custom_call.1} parent=31 // pred_region
          %s536 = sand.u32 %s26, 1
          %s537 = scalar_lea.sflag [#allocation3], %s536
          %s538 = sand.u32 %s137, 1
          %s539 = smul.addr %s538, 192
          %s540 = scalar_lea.vmem [#allocation10], %s539
          %s542 = ssub.s32 3072, 3072
          %543 = vsyncadd %s537, %s542
          %s544 = smul.addr %s34, 48
          %s545 = smul.addr %s544, 64
          %s546 = scalar_lea.hbm %s4, %s545
          %s547 = sshll.u32 %s540, 4
          %s548 = int_to_ptr.vmem [resolvable:$true] %s547
          %553 = dma.hbm_to_vmem [thread:$0]  %s546, 3072, %s548, %s537, 192, 192, 12
        $region36: #{tpu_custom_call.1} parent=31 // pred_fallthru
          _
        // Predicated region
        $region37: #{tpu_custom_call.1} parent=31 // pred_check
          %p554 = pneg %p173
        $region38: #{tpu_custom_call.1} parent=31 // pred_check_branch
          %556 = sbr.rel (%p554) target = $region40
        $region39: #{tpu_custom_call.1} parent=31 // pred_region
          %p557 = scmp.lt.s32.totalorder %s34, 1
          %s558 = scalar_select %p557, %s34, 1
          %s559 = smul.addr %s558, 3
          %s560 = scalar_lea.vmem %s5, %s559
        $region40: #{tpu_custom_call.1} parent=31 // pred_fallthru
          _
        // Predicated region
        $region41: #{tpu_custom_call.1} parent=31 // pred_check
          %p561 = pneg %p199
        $region42: #{tpu_custom_call.1} parent=31 // pred_check_branch
          %563 = sbr.rel (%p561) target = $region44
        $region43: #{tpu_custom_call.1} parent=31 // pred_region
          %s564 = sand.u32 %s26, 1
          %s565 = scalar_lea.sflag [#allocation3], %s564
          %s566 = sand.u32 %s189, 1
          %s567 = smul.addr %s566, 64
          %s568 = scalar_lea.vmem [#allocation11], %s567
          %s570 = ssub.s32 1024, 1024
          %571 = vsyncadd %s565, %s570
          %s572 = smul.addr %s34, 16
          %s573 = smul.addr %s572, 64
          %s574 = scalar_lea.hbm %s6, %s573
          %s575 = sshll.u32 %s568, 4
          %s576 = int_to_ptr.vmem [resolvable:$true] %s575
          %581 = dma.hbm_to_vmem [thread:$0]  %s574, 1024, %s576, %s565, 64, 64, 4
        $region44: #{tpu_custom_call.1} parent=31 // pred_fallthru
          _
        // Predicated region
        $region45: #{tpu_custom_call.1} parent=31 // pred_check
          %p582 = pneg %p225
        $region46: #{tpu_custom_call.1} parent=31 // pred_check_branch
          %584 = sbr.rel (%p582) target = $region48
        $region47: #{tpu_custom_call.1} parent=31 // pred_region
          %p585 = scmp.lt.s32.totalorder %s34, 1
          %s586 = scalar_select %p585, %s34, 1
          %s587 = scalar_lea.vmem %s7, %s586
        $region48: #{tpu_custom_call.1} parent=31 // pred_fallthru
          _
        // Predicated region
        $region49: #{tpu_custom_call.1} parent=31 // pred_check
          %p588 = pneg %p251
        $region50: #{tpu_custom_call.1} parent=31 // pred_check_branch
          %590 = sbr.rel (%p588) target = $region52
        $region51: #{tpu_custom_call.1} parent=31 // pred_region
          %p591 = scmp.lt.s32.totalorder %s34, 1
          %s592 = scalar_select %p591, %s34, 1
          %s593 = scalar_lea.vmem %s8, %s592
        $region52: #{tpu_custom_call.1} parent=31 // pred_fallthru
          _
        // Predicated region
        $region53: #{tpu_custom_call.1} parent=31 // pred_check
          %p594 = pneg %p277
        $region54: #{tpu_custom_call.1} parent=31 // pred_check_branch
          %596 = sbr.rel (%p594) target = $region56
        $region55: #{tpu_custom_call.1} parent=31 // pred_region
          %p597 = scmp.lt.s32.totalorder %s34, 1
          %s598 = scalar_select %p597, %s34, 1
          %s599 = scalar_lea.vmem %s9, %s598
        $region56: #{tpu_custom_call.1} parent=31 // pred_fallthru
          _
        // Predicated region
        $region57: #{tpu_custom_call.1} parent=31 // pred_check
          %p600 = pneg %p303
        $region58: #{tpu_custom_call.1} parent=31 // pred_check_branch
          %602 = sbr.rel (%p600) target = $region60
        $region59: #{tpu_custom_call.1} parent=31 // pred_region
          %s603 = sand.u32 %s26, 1
          %s604 = scalar_lea.sflag [#allocation3], %s603
          %s605 = sand.u32 %s293, 1
          %s606 = smul.addr %s605, 128
          %s607 = scalar_lea.vmem [#allocation12], %s606
          %s609 = ssub.s32 2048, 2048
          %610 = vsyncadd %s604, %s609
          %s611 = smul.addr %s34, 32
          %s612 = smul.addr %s611, 64
          %s613 = scalar_lea.hbm %s10, %s612
          %s614 = sshll.u32 %s607, 4
          %s615 = int_to_ptr.vmem [resolvable:$true] %s614
          %620 = dma.hbm_to_vmem [thread:$0]  %s613, 2048, %s615, %s604, 128, 128, 8
        $region60: #{tpu_custom_call.1} parent=31 // pred_fallthru
          _
        // Predicated region
        $region61: #{tpu_custom_call.1} parent=31 // pred_check
          %p621 = pneg %p329
        $region62: #{tpu_custom_call.1} parent=31 // pred_check_branch
          %623 = sbr.rel (%p621) target = $region64
        $region63: #{tpu_custom_call.1} parent=31 // pred_region
          %p624 = scmp.lt.s32.totalorder %s34, 1
          %s625 = scalar_select %p624, %s34, 1
          %s626 = smul.addr %s625, 2
          %s627 = scalar_lea.vmem %s11, %s626
        $region64: #{tpu_custom_call.1} parent=31 // pred_fallthru
          _
        // Predicated region
        $region65: #{tpu_custom_call.1} parent=31 // pred_check
          %p628 = pneg %p355
        $region66: #{tpu_custom_call.1} parent=31 // pred_check_branch
          %630 = sbr.rel (%p628) target = $region68
        $region67: #{tpu_custom_call.1} parent=31 // pred_region
          %s631 = sand.u32 %s26, 1
          %s632 = scalar_lea.sflag [#allocation3], %s631
          %s633 = sand.u32 %s345, 1
          %s634 = smul.addr %s633, 128
          %s635 = scalar_lea.vmem [#allocation13], %s634
          %s637 = ssub.s32 2048, 2048
          %638 = vsyncadd %s632, %s637
          %s639 = smul.addr %s34, 32
          %s640 = smul.addr %s639, 64
          %s641 = scalar_lea.hbm %s12, %s640
          %s642 = sshll.u32 %s635, 4
          %s643 = int_to_ptr.vmem [resolvable:$true] %s642
          %648 = dma.hbm_to_vmem [thread:$0]  %s641, 2048, %s643, %s632, 64, 64, 4
        $region68: #{tpu_custom_call.1} parent=31 // pred_fallthru
          _
        // Predicated region
        $region69: #{tpu_custom_call.1} parent=31 // pred_check
          %p649 = pneg %p381
        $region70: #{tpu_custom_call.1} parent=31 // pred_check_branch
          %651 = sbr.rel (%p649) target = $region72
        $region71: #{tpu_custom_call.1} parent=31 // pred_region
          %p652 = scmp.lt.s32.totalorder %s34, 1
          %s653 = scalar_select %p652, %s34, 1
          %s654 = scalar_lea.vmem %s13, %s653
        $region72: #{tpu_custom_call.1} parent=31 // pred_fallthru
          _
        // Predicated region
        $region73: #{tpu_custom_call.1} parent=31 // pred_check
          %p655 = pneg %p407
        $region74: #{tpu_custom_call.1} parent=31 // pred_check_branch
          %657 = sbr.rel (%p655) target = $region76
        $region75: #{tpu_custom_call.1} parent=31 // pred_region
          %p658 = scmp.lt.s32.totalorder %s34, 1
          %s659 = scalar_select %p658, %s34, 1
          %s660 = scalar_lea.vmem %s14, %s659
        $region76: #{tpu_custom_call.1} parent=31 // pred_fallthru
          _
        // Predicated region
        $region77: #{tpu_custom_call.1} parent=31 // pred_check
          %p661 = pneg %p433
        $region78: #{tpu_custom_call.1} parent=31 // pred_check_branch
          %663 = sbr.rel (%p661) target = $region80
        $region79: #{tpu_custom_call.1} parent=31 // pred_region
          %p664 = scmp.lt.s32.totalorder %s34, 1
          %s665 = scalar_select %p664, %s34, 1
          %s666 = scalar_lea.vmem %s15, %s665
        $region80: #{tpu_custom_call.1} parent=31 // pred_fallthru
          _
      $region32: #{tpu_custom_call.1} parent=5 // pred_fallthru
        _
      %p667 = scmp.le.s32.totalorder 1, %s26
      %p668 = scmp.lt.s32.totalorder %s26, 3
      %p669 = pnand %p667, %p668
      %p670 = pneg %p669
      // Predicated region
      $region81: #{tpu_custom_call.1} parent=5 // pred_check
        _
      $region82: #{tpu_custom_call.1} parent=5 // pred_check_branch
        %672 = sbr.rel (%p669) target = $region84
      $region83: #{tpu_custom_call.1} parent=5 // pred_region
        %s673 = ssub.s32 %s26, 1
        // Predicated region
        $region85: #{tpu_custom_call.1} parent=83 // pred_check
          %p674 = pneg %p64
        $region86: #{tpu_custom_call.1} parent=83 // pred_check_branch
          %676 = sbr.rel (%p674) target = $region88
        $region87: #{tpu_custom_call.1} parent=83 // pred_region
          %677 = dma.done [#allocation3], 256
        $region88: #{tpu_custom_call.1} parent=83 // pred_fallthru
          _
        // Predicated region
        $region89: #{tpu_custom_call.1} parent=83 // pred_check
          %p678 = pneg %p85
        $region90: #{tpu_custom_call.1} parent=83 // pred_check_branch
          %680 = sbr.rel (%p678) target = $region92
        $region91: #{tpu_custom_call.1} parent=83 // pred_region
          %681 = dma.done [#allocation6], 32
        $region92: #{tpu_custom_call.1} parent=83 // pred_fallthru
          _
        // Predicated region
        $region93: #{tpu_custom_call.1} parent=83 // pred_check
          %p682 = pneg %p106
        $region94: #{tpu_custom_call.1} parent=83 // pred_check_branch
          %684 = sbr.rel (%p682) target = $region96
        $region95: #{tpu_custom_call.1} parent=83 // pred_region
          %685 = dma.done [#allocation6], 16
        $region96: #{tpu_custom_call.1} parent=83 // pred_fallthru
          _
        // Predicated region
        $region97: #{tpu_custom_call.1} parent=83 // pred_check
          %p686 = pneg %p127
        $region98: #{tpu_custom_call.1} parent=83 // pred_check_branch
          %688 = sbr.rel (%p686) target = $region100
        $region99: #{tpu_custom_call.1} parent=83 // pred_region
          %689 = dma.done [#allocation9], 16
        $region100: #{tpu_custom_call.1} parent=83 // pred_fallthru
          _
        %s690 = sand.u32 %s31, 1
        %s691 = scalar_lea.sflag [#allocation3], %s690
        %s692 = sand.u32 %s140, 1
        %s693 = smul.addr %s692, 192
        %s694 = scalar_lea.vmem [#allocation10], %s693
        // Predicated region
        $region101: #{tpu_custom_call.1} parent=83 // pred_check
          %p695 = pneg %p153
        $region102: #{tpu_custom_call.1} parent=83 // pred_check_branch
          %697 = sbr.rel (%p695) target = $region104
        $region103: #{tpu_custom_call.1} parent=83 // pred_region
          %698 = dma.done %s691, 3072
        $region104: #{tpu_custom_call.1} parent=83 // pred_fallthru
          _
        %s699 = sand.u32 %s31, 1
        %s700 = scalar_lea.sflag [#allocation3], %s699
        %s701 = sand.u32 %s192, 1
        %s702 = smul.addr %s701, 64
        %s703 = scalar_lea.vmem [#allocation11], %s702
        // Predicated region
        $region105: #{tpu_custom_call.1} parent=83 // pred_check
          %p704 = pneg %p205
        $region106: #{tpu_custom_call.1} parent=83 // pred_check_branch
          %706 = sbr.rel (%p704) target = $region108
        $region107: #{tpu_custom_call.1} parent=83 // pred_region
          %707 = dma.done %s700, 1024
        $region108: #{tpu_custom_call.1} parent=83 // pred_fallthru
          _
        %s708 = sand.u32 %s31, 1
        %s709 = scalar_lea.sflag [#allocation3], %s708
        %s710 = sand.u32 %s296, 1
        %s711 = smul.addr %s710, 128
        %s712 = scalar_lea.vmem [#allocation12], %s711
        // Predicated region
        $region109: #{tpu_custom_call.1} parent=83 // pred_check
          %p713 = pneg %p309
        $region110: #{tpu_custom_call.1} parent=83 // pred_check_branch
          %715 = sbr.rel (%p713) target = $region112
        $region111: #{tpu_custom_call.1} parent=83 // pred_region
          %716 = dma.done %s709, 2048
        $region112: #{tpu_custom_call.1} parent=83 // pred_fallthru
          _
        %s717 = sand.u32 %s31, 1
        %s718 = scalar_lea.sflag [#allocation3], %s717
        %s719 = sand.u32 %s348, 1
        %s720 = smul.addr %s719, 128
        %s721 = scalar_lea.vmem [#allocation13], %s720
        // Predicated region
        $region113: #{tpu_custom_call.1} parent=83 // pred_check
          %p722 = pneg %p361
        $region114: #{tpu_custom_call.1} parent=83 // pred_check_branch
          %724 = sbr.rel (%p722) target = $region116
        $region115: #{tpu_custom_call.1} parent=83 // pred_region
          %725 = dma.done %s718, 2048
        $region116: #{tpu_custom_call.1} parent=83 // pred_fallthru
          _
        %p726 = pneg %p64
        %p727 = pneg %p61
        %p728 = pneg %p85
        %p729 = pneg %p82
        %p730 = pneg %p106
        %p731 = pneg %p103
        %p732 = pneg %p127
        %p733 = pneg %p124
        %s734 = sand.u32 %s31, 1
        %s735 = scalar_lea.sflag [#allocation3], %s734
        %s736 = sand.u32 %s140, 1
        %s737 = smul.addr %s736, 192
        %s738 = scalar_lea.vmem [#allocation10], %s737
        %p739 = pneg %p153
        %p740 = pneg %p150
        %p741 = scmp.lt.s32.totalorder %s36, 1
        %s742 = scalar_select %p741, %s36, 1
        %s743 = smul.addr %s742, 3
        %s744 = scalar_lea.vmem %s5, %s743
        %p745 = pneg %p179
        %p746 = pneg %p176
        %s747 = sand.u32 %s31, 1
        %s748 = scalar_lea.sflag [#allocation3], %s747
        %s749 = sand.u32 %s192, 1
        %s750 = smul.addr %s749, 64
        %s751 = scalar_lea.vmem [#allocation11], %s750
        %p752 = pneg %p205
        %p753 = pneg %p202
        %p754 = scmp.lt.s32.totalorder %s36, 1
        %s755 = scalar_select %p754, %s36, 1
        %s756 = scalar_lea.vmem %s7, %s755
        %p757 = pneg %p231
        %p758 = pneg %p228
        %p759 = scmp.lt.s32.totalorder %s36, 1
        %s760 = scalar_select %p759, %s36, 1
        %s761 = scalar_lea.vmem %s8, %s760
        %p762 = pneg %p257
        %p763 = pneg %p254
        %p764 = scmp.lt.s32.totalorder %s36, 1
        %s765 = scalar_select %p764, %s36, 1
        %s766 = scalar_lea.vmem %s9, %s765
        %p767 = pneg %p283
        %p768 = pneg %p280
        %s769 = sand.u32 %s31, 1
        %s770 = scalar_lea.sflag [#allocation3], %s769
        %s771 = sand.u32 %s296, 1
        %s772 = smul.addr %s771, 128
        %s773 = scalar_lea.vmem [#allocation12], %s772
        %p774 = pneg %p309
        %p775 = pneg %p306
        %p776 = scmp.lt.s32.totalorder %s36, 1
        %s777 = scalar_select %p776, %s36, 1
        %s778 = smul.addr %s777, 2
        %s779 = scalar_lea.vmem %s11, %s778
        %p780 = pneg %p335
        %p781 = pneg %p332
        %s782 = sand.u32 %s31, 1
        %s783 = scalar_lea.sflag [#allocation3], %s782
        %s784 = sand.u32 %s348, 1
        %s785 = smul.addr %s784, 128
        %s786 = scalar_lea.vmem [#allocation13], %s785
        %p787 = pneg %p361
        %p788 = pneg %p358
        %p789 = scmp.lt.s32.totalorder %s36, 1
        %s790 = scalar_select %p789, %s36, 1
        %s791 = scalar_lea.vmem %s13, %s790
        %p792 = pneg %p387
        %p793 = pneg %p384
        %p794 = scmp.lt.s32.totalorder %s36, 1
        %s795 = scalar_select %p794, %s36, 1
        %s796 = scalar_lea.vmem %s14, %s795
        %p797 = pneg %p413
        %p798 = pneg %p410
        %p799 = scmp.lt.s32.totalorder %s36, 1
        %s800 = scalar_select %p799, %s36, 1
        %s801 = scalar_lea.vmem %s15, %s800
        %p802 = pneg %p439
        %p803 = pneg %p436
        %p804 = pneg %p465
        %p805 = pneg %p462
        %s806 = smul.u32 2, %s35
        %p807 = scmp.lt.s32.totalorder %s36, 1
        %s808 = scalar_select %p807, %s36, 1
        %s809 = smul.addr %s808, 3
        %s810 = scalar_lea.vmem %s5, %s809
        %p811 = scmp.lt.s32.totalorder %s36, 1
        %s812 = scalar_select %p811, %s36, 1
        %s813 = scalar_lea.vmem %s7, %s812
        %p814 = scmp.lt.s32.totalorder %s36, 1
        %s815 = scalar_select %p814, %s36, 1
        %s816 = scalar_lea.vmem %s8, %s815
        %p817 = scmp.lt.s32.totalorder %s36, 1
        %s818 = scalar_select %p817, %s36, 1
        %s819 = scalar_lea.vmem %s9, %s818
        %p820 = scmp.lt.s32.totalorder %s36, 1
        %s821 = scalar_select %p820, %s36, 1
        %s822 = smul.addr %s821, 2
        %s823 = scalar_lea.vmem %s11, %s822
        %p824 = scmp.lt.s32.totalorder %s36, 1
        %s825 = scalar_select %p824, %s36, 1
        %s826 = scalar_lea.vmem %s13, %s825
        %p827 = scmp.lt.s32.totalorder %s36, 1
        %s828 = scalar_select %p827, %s36, 1
        %s829 = scalar_lea.vmem %s14, %s828
        %p830 = scmp.lt.s32.totalorder %s36, 1
        %s831 = scalar_select %p830, %s36, 1
        %s832 = scalar_lea.vmem %s15, %s831
        %s833 = smul.u32 2, %s35
        %p835 = scmp.eq.s32.totalorder %s36, 0
        // Predicated region
        $region117: #{tpu_custom_call.1} parent=83 // pred_check
          %p836 = pneg %p835
        $region118: #{tpu_custom_call.1} parent=83 // pred_check_branch
          %838 = sbr.rel (%p836) target = $region120
        $region119: #{tpu_custom_call.1} parent=83 // pred_region
          %v839 = vld [vmem:[#allocation2] sm:$0xff]
          %v840 = vld [vmem:[#allocation2 + $0x8] sm:$0xff]
          %v841 = vld [vmem:[#allocation7] sm:$0x1]
          %v842 = vld [vmem:[#allocation8] sm:$0x1]
          %843 = vadd.xlane.f32.xlu0 %v839
          %v844 = vpop.xlane.xlu0 %843
          %845 = vadd.xlane.f32.xlu0 %v840
          %v846 = vpop.xlane.xlu0 %845
          %v847 = vrcp.pop 128.0
          %v848 = vmul.f32 %v844, %v847
          %v849 = vmul.f32 %v846, %v847
          %v850 = vsub.f32 %v839, %v848
          %v851 = vsub.f32 %v840, %v849
          %v852 = vmul.f32 %v850, %v850
          %v853 = vmul.f32 %v851, %v851
          %854 = vadd.xlane.f32.xlu0 %v852
          %v855 = vpop.xlane.xlu0 %854
          %856 = vadd.xlane.f32.xlu0 %v853
          %v857 = vpop.xlane.xlu0 %856
          %v858 = vmul.f32 %v855, %v847
          %v859 = vmul.f32 %v857, %v847
          %v860 = vadd.f32 %v858, 1e-12
          %v861 = vadd.f32 %v859, 1e-12
          %v862 = vrsqrt.pop %v860
          %v863 = vrsqrt.pop %v861
          %v864 = vmul.f32 %v850, %v862
          %v865 = vmul.f32 %v851, %v863
          %v867 = vlaneseq
          %v868 = vshrl.u32 %v867, 7
          %v869 = vsub.s32 0, %v868
          %v870 = vrot.slane %v841, %v869
          %v872 = vmul.f32 %v864, %v870
          %v873 = vmul.f32 %v865, %v870
          %v875 = vlaneseq
          %v876 = vshrl.u32 %v875, 7
          %v877 = vsub.s32 0, %v876
          %v878 = vrot.slane %v842, %v877
          %v880 = vadd.f32 %v872, %v878
          %v881 = vadd.f32 %v873, %v878
          %882 = vst [vmem:[#allocation14] sm:$0xff] %v880
          %883 = vst [vmem:[#allocation14 + $0x8] sm:$0xff] %v881
        $region120: #{tpu_custom_call.1} parent=83 // pred_fallthru
          _
        %v884 = vld [vmem:[#allocation14] sm:$0xff]
        %v885 = vld [vmem:[#allocation14 + $0x8] sm:$0xff]
        %v886 = vpack.c.bf16 %v885, %v884
        %v887 = vld [vmem:[%s694] sm:$0xff]
        %v888 = vld [vmem:[%s694 + $0x8] sm:$0xf]
        %v889 = vld [vmem:[%s694 + $0xc] sm:$0xff]
        %v890 = vld [vmem:[%s694 + $0x14] sm:$0xf]
        %v891 = vld [vmem:[%s694 + $0x18] sm:$0xff]
        %v892 = vld [vmem:[%s694 + $0x20] sm:$0xf]
        %v893 = vld [vmem:[%s694 + $0x24] sm:$0xff]
        %v894 = vld [vmem:[%s694 + $0x2c] sm:$0xf]
        %v895 = vld [vmem:[%s694 + $0x30] sm:$0xff]
        %v896 = vld [vmem:[%s694 + $0x38] sm:$0xf]
        %v897 = vld [vmem:[%s694 + $0x3c] sm:$0xff]
        %v898 = vld [vmem:[%s694 + $0x44] sm:$0xf]
        %v899 = vld [vmem:[%s694 + $0x48] sm:$0xff]
        %v900 = vld [vmem:[%s694 + $0x50] sm:$0xf]
        %v901 = vld [vmem:[%s694 + $0x54] sm:$0xff]
        %v902 = vld [vmem:[%s694 + $0x5c] sm:$0xf]
        %v903 = vld [vmem:[%s694 + $0x60] sm:$0xff]
        %v904 = vld [vmem:[%s694 + $0x68] sm:$0xf]
        %v905 = vld [vmem:[%s694 + $0x6c] sm:$0xff]
        %v906 = vld [vmem:[%s694 + $0x74] sm:$0xf]
        %v907 = vld [vmem:[%s694 + $0x78] sm:$0xff]
        %v908 = vld [vmem:[%s694 + $0x80] sm:$0xf]
        %v909 = vld [vmem:[%s694 + $0x84] sm:$0xff]
        %v910 = vld [vmem:[%s694 + $0x8c] sm:$0xf]
        %v911 = vld [vmem:[%s694 + $0x90] sm:$0xff]
        %v912 = vld [vmem:[%s694 + $0x98] sm:$0xf]
        %v913 = vld [vmem:[%s694 + $0x9c] sm:$0xff]
        %v914 = vld [vmem:[%s694 + $0xa4] sm:$0xf]
        %v915 = vld [vmem:[%s694 + $0xa8] sm:$0xff]
        %v916 = vld [vmem:[%s694 + $0xb0] sm:$0xf]
        %v917 = vld [vmem:[%s694 + $0xb4] sm:$0xff]
        %v918 = vld [vmem:[%s694 + $0xbc] sm:$0xf]
        %v919 = vld [vmem:[%s810] sm:$0x7]
        %v921 = vlaneseq
        %v922 = vshrl.u32 %v921, 7
        %v923 = vsub.s32 0, %v922
        %v924 = vrot.slane %v919, %v923
        %v925 = vlaneseq
        %v926 = vshrl.u32 %v925, 7
        %v927 = vsub.s32 1, %v926
        %v928 = vrot.slane %v919, %v927
        %v929 = vlaneseq
        %v930 = vshrl.u32 %v929, 7
        %v931 = vsub.s32 2, %v930
        %v932 = vrot.slane %v919, %v931
        %v968 = vunpack.c.l.b16 %v887
        %v969 = vunpack.c.h.b16 %v887
        %v970 = vunpack.c.l.b16 %v888
        %v971 = vunpack.c.l.b16 %v889
        %v972 = vunpack.c.h.b16 %v889
        %v973 = vunpack.c.l.b16 %v890
        %v974 = vunpack.c.l.b16 %v891
        %v975 = vunpack.c.h.b16 %v891
        %v976 = vunpack.c.l.b16 %v892
        %v977 = vunpack.c.l.b16 %v893
        %v978 = vunpack.c.h.b16 %v893
        %v979 = vunpack.c.l.b16 %v894
        %v980 = vunpack.c.l.b16 %v895
        %v981 = vunpack.c.h.b16 %v895
        %v982 = vunpack.c.l.b16 %v896
        %v983 = vunpack.c.l.b16 %v897
        %v984 = vunpack.c.h.b16 %v897
        %v985 = vunpack.c.l.b16 %v898
        %v986 = vunpack.c.l.b16 %v899
        %v987 = vunpack.c.h.b16 %v899
        %v988 = vunpack.c.l.b16 %v900
        %v989 = vunpack.c.l.b16 %v901
        %v990 = vunpack.c.h.b16 %v901
        %v991 = vunpack.c.l.b16 %v902
        %v992 = vunpack.c.l.b16 %v903
        %v993 = vunpack.c.h.b16 %v903
        %v994 = vunpack.c.l.b16 %v904
        %v995 = vunpack.c.l.b16 %v905
        %v996 = vunpack.c.h.b16 %v905
        %v997 = vunpack.c.l.b16 %v906
        %v998 = vunpack.c.l.b16 %v907
        %v999 = vunpack.c.h.b16 %v907
        %v1000 = vunpack.c.l.b16 %v908
        %v1001 = vunpack.c.l.b16 %v909
        %v1002 = vunpack.c.h.b16 %v909
        %v1003 = vunpack.c.l.b16 %v910
        %v1004 = vunpack.c.l.b16 %v911
        %v1005 = vunpack.c.h.b16 %v911
        %v1006 = vunpack.c.l.b16 %v912
        %v1007 = vunpack.c.l.b16 %v913
        %v1008 = vunpack.c.h.b16 %v913
        %v1009 = vunpack.c.l.b16 %v914
        %v1010 = vunpack.c.l.b16 %v915
        %v1011 = vunpack.c.h.b16 %v915
        %v1012 = vunpack.c.l.b16 %v916
        %v1013 = vunpack.c.l.b16 %v917
        %v1014 = vunpack.c.h.b16 %v917
        %v1015 = vunpack.c.l.b16 %v918
        %v1016 = vpack.c.b16 %v971, %v968
        %v1017 = vpack.c.b16 %v972, %v969
        %v1018 = vpack.c.b16 %v973, %v970
        %v1019 = vpack.c.b16 %v977, %v974
        %v1020 = vpack.c.b16 %v978, %v975
        %v1021 = vpack.c.b16 %v979, %v976
        %v1022 = vpack.c.b16 %v983, %v980
        %v1023 = vpack.c.b16 %v984, %v981
        %v1024 = vpack.c.b16 %v985, %v982
        %v1025 = vpack.c.b16 %v989, %v986
        %v1026 = vpack.c.b16 %v990, %v987
        %v1027 = vpack.c.b16 %v991, %v988
        %v1028 = vpack.c.b16 %v995, %v992
        %v1029 = vpack.c.b16 %v996, %v993
        %v1030 = vpack.c.b16 %v997, %v994
        %v1031 = vpack.c.b16 %v1001, %v998
        %v1032 = vpack.c.b16 %v1002, %v999
        %v1033 = vpack.c.b16 %v1003, %v1000
        %v1034 = vpack.c.b16 %v1007, %v1004
        %v1035 = vpack.c.b16 %v1008, %v1005
        %v1036 = vpack.c.b16 %v1009, %v1006
        %v1037 = vpack.c.b16 %v1013, %v1010
        %v1038 = vpack.c.b16 %v1014, %v1011
        %v1039 = vpack.c.b16 %v1015, %v1012
        %1064 = vmatprep.subr.bf16.mxu0 %v1017
        %1065 = vmatpush1.bf16.msra.mxu0 %v1016
        %1066 = vmatprep.subr.bf16.mxu0 %v1020
        %1067 = vmatpush1.bf16.msra.mxu0 %v1019
        %1068 = vmatprep.subr.bf16.mxu0 %v1023
        %1069 = vmatpush1.bf16.msra.mxu0 %v1022
        %1070 = vmatprep.subr.bf16.mxu0 %v1026
        %1071 = vmatpush1.bf16.msra.mxu0 %v1025
        %1072 = vmatprep.subr.bf16.mxu0 %v1029
        %1073 = vmatpush1.bf16.msra.mxu0 %v1028
        %1074 = vmatprep.subr.bf16.mxu0 %v1032
        %1075 = vmatpush1.bf16.msra.mxu0 %v1031
        %1076 = vmatprep.subr.bf16.mxu0 %v1035
        %1077 = vmatpush1.bf16.msra.mxu0 %v1034
        %1078 = vmatprep.subr.bf16.mxu0 %v1038
        %1079 = vmatpush1.bf16.msra.mxu0 %v1037
        %1080 = vmatprep.subr.bf16.mxu0 0
        %1081 = vmatpush1.bf16.msra.mxu0 0
        %1082 = vmatprep.subr.bf16.mxu0 0
        %1083 = vmatpush1.bf16.msra.mxu0 0
        %1084 = vmatprep.subr.bf16.mxu0 0
        %1085 = vmatpush1.bf16.msra.mxu0 0
        %1086 = vmatprep.subr.bf16.mxu0 0
        %1087 = vmatpush1.bf16.msra.mxu0 0
        %1088 = vmatprep.subr.bf16.mxu0 0
        %1089 = vmatpush1.bf16.msra.mxu0 0
        %1090 = vmatprep.subr.bf16.mxu0 0
        %1091 = vmatpush1.bf16.msra.mxu0 0
        %1092 = vmatprep.subr.bf16.mxu0 0
        %1093 = vmatpush1.bf16.msra.mxu0 0
        %1094 = vmatprep.subr.bf16.mxu0 0
        %1095 = vmatpush1.bf16.msra.mxu0 0
        %1096 = vmatprep.mubr.bf16.mxu0 0
        %1097 = vmatmul.mubr.bf16.gmra.mrb[0].mxu0 %v886
        %v1098 = vpop.f32.mrb[0].mxu0
        %v1099 = vadd.f32 %v924, %v1098
        %v1100 = vpop.f32.mrb[0].mxu0
        %v1101 = vadd.f32 %v928, %v1100
        %v1102 = vpop.f32.mrb[0].mxu0
        %v1103 = vadd.f32 %v924, %v1102
        %v1104 = vpop.f32.mrb[0].mxu0
        %v1105 = vadd.f32 %v928, %v1104
        %1106 = vdwg.mxu0
        %1107 = vmatprep.subr.bf16.mxu0 0
        %1108 = vmatpush1.bf16.msra.mxu0 %v1018
        %1109 = vmatprep.subr.bf16.mxu0 0
        %1110 = vmatpush1.bf16.msra.mxu0 %v1021
        %1111 = vmatprep.subr.bf16.mxu0 0
        %1112 = vmatpush1.bf16.msra.mxu0 %v1024
        %1113 = vmatprep.subr.bf16.mxu0 0
        %1114 = vmatpush1.bf16.msra.mxu0 %v1027
        %1115 = vmatprep.subr.bf16.mxu0 0
        %1116 = vmatpush1.bf16.msra.mxu0 %v1030
        %1117 = vmatprep.subr.bf16.mxu0 0
        %1118 = vmatpush1.bf16.msra.mxu0 %v1033
        %1119 = vmatprep.subr.bf16.mxu0 0
        %1120 = vmatpush1.bf16.msra.mxu0 %v1036
        %1121 = vmatprep.subr.bf16.mxu0 0
        %1122 = vmatpush1.bf16.msra.mxu0 %v1039
        %1123 = vmatprep.subr.bf16.mxu0 0
        %1124 = vmatpush1.bf16.msra.mxu0 0
        %1125 = vmatprep.subr.bf16.mxu0 0
        %1126 = vmatpush1.bf16.msra.mxu0 0
        %1127 = vmatprep.subr.bf16.mxu0 0
        %1128 = vmatpush1.bf16.msra.mxu0 0
        %1129 = vmatprep.subr.bf16.mxu0 0
        %1130 = vmatpush1.bf16.msra.mxu0 0
        %1131 = vmatprep.subr.bf16.mxu0 0
        %1132 = vmatpush1.bf16.msra.mxu0 0
        %1133 = vmatprep.subr.bf16.mxu0 0
        %1134 = vmatpush1.bf16.msra.mxu0 0
        %1135 = vmatprep.subr.bf16.mxu0 0
        %1136 = vmatpush1.bf16.msra.mxu0 0
        %1137 = vmatprep.subr.bf16.mxu0 0
        %1138 = vmatpush1.bf16.msra.mxu0 0
        %1139 = vmatprep.mubr.bf16.mxu0 0
        %1140 = vmatmul.mubr.bf16.gmra.mrb[0].mxu0 %v886
        %v1141 = vpop.f32.mrb[0].mxu0
        %v1142 = vadd.f32 %v932, %v1141
        %v1143 = vpop.f32.mrb[0].mxu0
        %v1144 = vpop.f32.mrb[0].mxu0
        %v1145 = vadd.f32 %v932, %v1144
        %v1146 = vpop.f32.mrb[0].mxu0
        %1147 = vdwg.mxu0
        %v1148 = vpack.c.bf16 %v1099, %v1099
        %v1149 = vpack.c.bf16 %v1103, %v1103
        %v1150 = vpack.c.bf16 %v1101, %v1101
        %v1151 = vpack.c.bf16 %v1105, %v1105
        %v1152 = vpack.c.bf16 %v1142, %v1142
        %v1153 = vpack.c.bf16 %v1145, %v1145
        %v1154 = vld [vmem:[#allocation5] sm:$0x3]
        %v1157 = vunpack.c.l.s4 1966171168
        %v1158 = vunpack.c.0.s8 %v1157
        %v1159 = vlaneseq
        %v1160 = vshrl.u32 %v1159, 7
        %v1161 = vsub.s32 %v1158, %v1160
        %v1162 = vrot.slane %v1154, %v1161
        %v1163 = vcombine.high %v1162, %v1162
        %v1165 = vunpack.c.l.s4 1966171168
        %v1166 = vunpack.c.0.s8 %v1165
        %v1167 = vlaneseq
        %v1168 = vshrl.u32 %v1167, 7
        %v1169 = vsub.s32 %v1166, %v1168
        %v1170 = vrot.slane %v1162, %v1169
        %v1172 = vunpack.c.l.s4 1966171168
        %v1173 = vunpack.c.0.s8 %v1172
        %v1174 = vlaneseq
        %v1175 = vshrl.u32 %v1174, 7
        %v1176 = vsub.s32 %v1173, %v1175
        %v1177 = vrot.slane %v1163, %v1176
        %v1178 = vlaneseq
        %v1179 = vshrl.u32 %v1178, 7
        %v1180 = vsub.s32 0, %v1179
        %v1181 = vrot.slane %v1170, %v1180
        %v1182 = vlaneseq
        %v1183 = vshrl.u32 %v1182, 7
        %v1184 = vsub.s32 0, %v1183
        %v1185 = vrot.slane %v1177, %v1184
        %vm1188 = vcmask 261120
        %v1190 = vsel %vm1188, %v1148, 0
        %v1193 = vsel %vm1188, %v1150, 0
        %1195 = vmatprep.subr.bf16.mxu0 0
        %1196 = vmatpush1.bf16.xpose.msra.mxu0 %v1193
        %1197 = vmatprep.subr.bf16.mxu0 0
        %1198 = vmatpush1.bf16.xpose.msra.mxu0 0
        %1199 = vmatprep.subr.bf16.mxu0 0
        %1200 = vmatpush1.bf16.xpose.msra.mxu0 0
        %1201 = vmatprep.subr.bf16.mxu0 0
        %1202 = vmatpush1.bf16.xpose.msra.mxu0 0
        %1203 = vmatprep.subr.bf16.mxu0 0
        %1204 = vmatpush1.bf16.xpose.msra.mxu0 0
        %1205 = vmatprep.subr.bf16.mxu0 0
        %1206 = vmatpush1.bf16.xpose.msra.mxu0 0
        %1207 = vmatprep.subr.bf16.mxu0 0
        %1208 = vmatpush1.bf16.xpose.msra.mxu0 0
        %1209 = vmatprep.subr.bf16.mxu0 0
        %1210 = vmatpush1.bf16.xpose.msra.mxu0 0
        %1211 = vmatprep.subr.bf16.mxu0 0
        %1212 = vmatpush1.bf16.xpose.msra.mxu0 0
        %1213 = vmatprep.subr.bf16.mxu0 0
        %1214 = vmatpush1.bf16.xpose.msra.mxu0 0
        %1215 = vmatprep.subr.bf16.mxu0 0
        %1216 = vmatpush1.bf16.xpose.msra.mxu0 0
        %1217 = vmatprep.subr.bf16.mxu0 0
        %1218 = vmatpush1.bf16.xpose.msra.mxu0 0
        %1219 = vmatprep.subr.bf16.mxu0 0
        %1220 = vmatpush1.bf16.xpose.msra.mxu0 0
        %1221 = vmatprep.subr.bf16.mxu0 0
        %1222 = vmatpush1.bf16.xpose.msra.mxu0 0
        %1223 = vmatprep.subr.bf16.mxu0 0
        %1224 = vmatpush1.bf16.xpose.msra.mxu0 0
        %1225 = vmatprep.subr.bf16.mxu0 0
        %1226 = vmatpush1.bf16.xpose.msra.mxu0 0
        %1227 = vmatprep.mubr.bf16.mxu0 0
        %1228 = vmatmul.mubr.bf16.gmra.mrb[0].mxu0 %v1190
        %v1229 = vpop.f32.mrb[0].mxu0
        %v1230 = vadd.f32 %v1181, %v1229
        %v1231 = vpop.f32.mrb[0].mxu0
        %v1232 = vpop.f32.mrb[0].mxu0
        %v1233 = vpop.f32.mrb[0].mxu0
        %1234 = vdwg.mxu0
        %v1236 = vsel %vm1188, %v1149, 0
        %v1239 = vsel %vm1188, %v1151, 0
        %1241 = vmatprep.subr.bf16.mxu0 0
        %1242 = vmatpush1.bf16.xpose.msra.mxu0 %v1239
        %1243 = vmatprep.subr.bf16.mxu0 0
        %1244 = vmatpush1.bf16.xpose.msra.mxu0 0
        %1245 = vmatprep.subr.bf16.mxu0 0
        %1246 = vmatpush1.bf16.xpose.msra.mxu0 0
        %1247 = vmatprep.subr.bf16.mxu0 0
        %1248 = vmatpush1.bf16.xpose.msra.mxu0 0
        %1249 = vmatprep.subr.bf16.mxu0 0
        %1250 = vmatpush1.bf16.xpose.msra.mxu0 0
        %1251 = vmatprep.subr.bf16.mxu0 0
        %1252 = vmatpush1.bf16.xpose.msra.mxu0 0
        %1253 = vmatprep.subr.bf16.mxu0 0
        %1254 = vmatpush1.bf16.xpose.msra.mxu0 0
        %1255 = vmatprep.subr.bf16.mxu0 0
        %1256 = vmatpush1.bf16.xpose.msra.mxu0 0
        %1257 = vmatprep.subr.bf16.mxu0 0
        %1258 = vmatpush1.bf16.xpose.msra.mxu0 0
        %1259 = vmatprep.subr.bf16.mxu0 0
        %1260 = vmatpush1.bf16.xpose.msra.mxu0 0
        %1261 = vmatprep.subr.bf16.mxu0 0
        %1262 = vmatpush1.bf16.xpose.msra.mxu0 0
        %1263 = vmatprep.subr.bf16.mxu0 0
        %1264 = vmatpush1.bf16.xpose.msra.mxu0 0
        %1265 = vmatprep.subr.bf16.mxu0 0
        %1266 = vmatpush1.bf16.xpose.msra.mxu0 0
        %1267 = vmatprep.subr.bf16.mxu0 0
        %1268 = vmatpush1.bf16.xpose.msra.mxu0 0
        %1269 = vmatprep.subr.bf16.mxu0 0
        %1270 = vmatpush1.bf16.xpose.msra.mxu0 0
        %1271 = vmatprep.subr.bf16.mxu0 0
        %1272 = vmatpush1.bf16.xpose.msra.mxu0 0
        %1273 = vmatprep.mubr.bf16.mxu0 0
        %1274 = vmatmul.mubr.bf16.gmra.mrb[0].mxu0 %v1236
        %v1275 = vpop.f32.mrb[0].mxu0
        %v1276 = vadd.f32 %v1185, %v1275
        %v1277 = vpop.f32.mrb[0].mxu0
        %v1278 = vpop.f32.mrb[0].mxu0
        %v1279 = vpop.f32.mrb[0].mxu0
        %1280 = vdwg.mxu0
        %vm1281 = vcmask 64512
        %v1282 = vsel %vm1281, %v1230, -inf
        %1283 = vmax.xlane.f32.xlu0 %v1282
        %v1284 = vpop.xlane.xlu0 %1283
        %v1285 = vsel %vm1281, %v1276, -inf
        %1286 = vmax.xlane.f32.xlu0 %v1285
        %v1287 = vpop.xlane.xlu0 %1286
        %v1288 = vsub.f32 %v1230, %v1284
        %v1289 = vsub.f32 %v1276, %v1287
        %v1290 = vmul.f32 %v1288, 1.442695
        %v1291 = vpow.pop %v1290
        %v1292 = vmul.f32 %v1289, 1.442695
        %v1293 = vpow.pop %v1292
        %v1294 = vsel %vm1281, %v1291, 0.0
        %1295 = vadd.xlane.f32.xlu0 %v1294
        %v1296 = vpop.xlane.xlu0 %1295
        %v1297 = vsel %vm1281, %v1293, 0.0
        %1298 = vadd.xlane.f32.xlu0 %v1297
        %v1299 = vpop.xlane.xlu0 %1298
        %v1300 = vrcp.pop %v1296
        %v1301 = vrcp.pop %v1299
        %v1302 = vmul.f32 %v1291, %v1300
        %v1303 = vmul.f32 %v1293, %v1301
        %v1304 = vpack.c.bf16 %v1302, %v1302
        %v1305 = vpack.c.bf16 %v1303, %v1303
        %v1307 = vsel %vm1281, %v1304, 0
        %vm1309 = vcmask 1043456
        %v1311 = vsel %vm1309, %v1152, 0
        %1313 = vmatprep.subr.bf16.mxu0 0
        %1314 = vmatpush1.bf16.msra.mxu0 %v1311
        %1315 = vmatprep.subr.bf16.mxu0 0
        %1316 = vmatpush1.bf16.msra.mxu0 0
        %1317 = vmatprep.subr.bf16.mxu0 0
        %1318 = vmatpush1.bf16.msra.mxu0 0
        %1319 = vmatprep.subr.bf16.mxu0 0
        %1320 = vmatpush1.bf16.msra.mxu0 0
        %1321 = vmatprep.subr.bf16.mxu0 0
        %1322 = vmatpush1.bf16.msra.mxu0 0
        %1323 = vmatprep.subr.bf16.mxu0 0
        %1324 = vmatpush1.bf16.msra.mxu0 0
        %1325 = vmatprep.subr.bf16.mxu0 0
        %1326 = vmatpush1.bf16.msra.mxu0 0
        %1327 = vmatprep.subr.bf16.mxu0 0
        %1328 = vmatpush1.bf16.msra.mxu0 0
        %1329 = vmatprep.subr.bf16.mxu0 0
        %1330 = vmatpush1.bf16.msra.mxu0 0
        %1331 = vmatprep.subr.bf16.mxu0 0
        %1332 = vmatpush1.bf16.msra.mxu0 0
        %1333 = vmatprep.subr.bf16.mxu0 0
        %1334 = vmatpush1.bf16.msra.mxu0 0
        %1335 = vmatprep.subr.bf16.mxu0 0
        %1336 = vmatpush1.bf16.msra.mxu0 0
        %1337 = vmatprep.subr.bf16.mxu0 0
        %1338 = vmatpush1.bf16.msra.mxu0 0
        %1339 = vmatprep.subr.bf16.mxu0 0
        %1340 = vmatpush1.bf16.msra.mxu0 0
        %1341 = vmatprep.subr.bf16.mxu0 0
        %1342 = vmatpush1.bf16.msra.mxu0 0
        %1343 = vmatprep.subr.bf16.mxu0 0
        %1344 = vmatpush1.bf16.msra.mxu0 0
        %1345 = vmatprep.mubr.bf16.mxu0 0
        %1346 = vmatmul.mubr.bf16.gmra.mrb[0].mxu0 %v1307
        %v1347 = vpop.f32.mrb[0].mxu0
        %v1348 = vadd.f32 0.0, %v1347
        %v1349 = vpop.f32.mrb[0].mxu0
        %v1350 = vpop.f32.mrb[0].mxu0
        %v1351 = vpop.f32.mrb[0].mxu0
        %1352 = vdwg.mxu0
        %v1354 = vsel %vm1281, %v1305, 0
        %v1357 = vsel %vm1309, %v1153, 0
        %1359 = vmatprep.subr.bf16.mxu0 0
        %1360 = vmatpush1.bf16.msra.mxu0 %v1357
        %1361 = vmatprep.subr.bf16.mxu0 0
        %1362 = vmatpush1.bf16.msra.mxu0 0
        %1363 = vmatprep.subr.bf16.mxu0 0
        %1364 = vmatpush1.bf16.msra.mxu0 0
        %1365 = vmatprep.subr.bf16.mxu0 0
        %1366 = vmatpush1.bf16.msra.mxu0 0
        %1367 = vmatprep.subr.bf16.mxu0 0
        %1368 = vmatpush1.bf16.msra.mxu0 0
        %1369 = vmatprep.subr.bf16.mxu0 0
        %1370 = vmatpush1.bf16.msra.mxu0 0
        %1371 = vmatprep.subr.bf16.mxu0 0
        %1372 = vmatpush1.bf16.msra.mxu0 0
        %1373 = vmatprep.subr.bf16.mxu0 0
        %1374 = vmatpush1.bf16.msra.mxu0 0
        %1375 = vmatprep.subr.bf16.mxu0 0
        %1376 = vmatpush1.bf16.msra.mxu0 0
        %1377 = vmatprep.subr.bf16.mxu0 0
        %1378 = vmatpush1.bf16.msra.mxu0 0
        %1379 = vmatprep.subr.bf16.mxu0 0
        %1380 = vmatpush1.bf16.msra.mxu0 0
        %1381 = vmatprep.subr.bf16.mxu0 0
        %1382 = vmatpush1.bf16.msra.mxu0 0
        %1383 = vmatprep.subr.bf16.mxu0 0
        %1384 = vmatpush1.bf16.msra.mxu0 0
        %1385 = vmatprep.subr.bf16.mxu0 0
        %1386 = vmatpush1.bf16.msra.mxu0 0
        %1387 = vmatprep.subr.bf16.mxu0 0
        %1388 = vmatpush1.bf16.msra.mxu0 0
        %1389 = vmatprep.subr.bf16.mxu0 0
        %1390 = vmatpush1.bf16.msra.mxu0 0
        %1391 = vmatprep.mubr.bf16.mxu0 0
        %1392 = vmatmul.mubr.bf16.gmra.mrb[0].mxu0 %v1354
        %v1393 = vpop.f32.mrb[0].mxu0
        %v1394 = vadd.f32 0.0, %v1393
        %v1395 = vpop.f32.mrb[0].mxu0
        %v1396 = vpop.f32.mrb[0].mxu0
        %v1397 = vpop.f32.mrb[0].mxu0
        %1398 = vdwg.mxu0
        %v1399 = vpack.c.bf16 %v1394, %v1348
        %v1400 = vld [vmem:[%s703] sm:$0xf]
        %v1401 = vld [vmem:[%s703 + $0x4] sm:$0xf]
        %v1402 = vld [vmem:[%s703 + $0x8] sm:$0xf]
        %v1403 = vld [vmem:[%s703 + $0xc] sm:$0xf]
        %1405 = vrot.lane.b32.xlu0 %v1148, 96
        %v1406 = vpop.permute.xlu0 %1405
        %1408 = vrot.lane.b32.xlu0 %v1150, 96
        %v1409 = vpop.permute.xlu0 %1408
        %v1411 = vsel %vm1188, %v1406, 0
        %v1414 = vsel %vm1188, %v1409, 0
        %1416 = vmatprep.subr.bf16.mxu0 0
        %1417 = vmatpush1.bf16.xpose.msra.mxu0 %v1414
        %1418 = vmatprep.subr.bf16.mxu0 0
        %1419 = vmatpush1.bf16.xpose.msra.mxu0 0
        %1420 = vmatprep.subr.bf16.mxu0 0
        %1421 = vmatpush1.bf16.xpose.msra.mxu0 0
        %1422 = vmatprep.subr.bf16.mxu0 0
        %1423 = vmatpush1.bf16.xpose.msra.mxu0 0
        %1424 = vmatprep.subr.bf16.mxu0 0
        %1425 = vmatpush1.bf16.xpose.msra.mxu0 0
        %1426 = vmatprep.subr.bf16.mxu0 0
        %1427 = vmatpush1.bf16.xpose.msra.mxu0 0
        %1428 = vmatprep.subr.bf16.mxu0 0
        %1429 = vmatpush1.bf16.xpose.msra.mxu0 0
        %1430 = vmatprep.subr.bf16.mxu0 0
        %1431 = vmatpush1.bf16.xpose.msra.mxu0 0
        %1432 = vmatprep.subr.bf16.mxu0 0
        %1433 = vmatpush1.bf16.xpose.msra.mxu0 0
        %1434 = vmatprep.subr.bf16.mxu0 0
        %1435 = vmatpush1.bf16.xpose.msra.mxu0 0
        %1436 = vmatprep.subr.bf16.mxu0 0
        %1437 = vmatpush1.bf16.xpose.msra.mxu0 0
        %1438 = vmatprep.subr.bf16.mxu0 0
        %1439 = vmatpush1.bf16.xpose.msra.mxu0 0
        %1440 = vmatprep.subr.bf16.mxu0 0
        %1441 = vmatpush1.bf16.xpose.msra.mxu0 0
        %1442 = vmatprep.subr.bf16.mxu0 0
        %1443 = vmatpush1.bf16.xpose.msra.mxu0 0
        %1444 = vmatprep.subr.bf16.mxu0 0
        %1445 = vmatpush1.bf16.xpose.msra.mxu0 0
        %1446 = vmatprep.subr.bf16.mxu0 0
        %1447 = vmatpush1.bf16.xpose.msra.mxu0 0
        %1448 = vmatprep.mubr.bf16.mxu0 0
        %1449 = vmatmul.mubr.bf16.gmra.mrb[0].mxu0 %v1411
        %v1450 = vpop.f32.mrb[0].mxu0
        %v1451 = vadd.f32 %v1181, %v1450
        %v1452 = vpop.f32.mrb[0].mxu0
        %v1453 = vpop.f32.mrb[0].mxu0
        %v1454 = vpop.f32.mrb[0].mxu0
        %1455 = vdwg.mxu0
        %1457 = vrot.lane.b32.xlu0 %v1149, 96
        %v1458 = vpop.permute.xlu0 %1457
        %1460 = vrot.lane.b32.xlu0 %v1151, 96
        %v1461 = vpop.permute.xlu0 %1460
        %v1463 = vsel %vm1188, %v1458, 0
        %v1466 = vsel %vm1188, %v1461, 0
        %1468 = vmatprep.subr.bf16.mxu0 0
        %1469 = vmatpush1.bf16.xpose.msra.mxu0 %v1466
        %1470 = vmatprep.subr.bf16.mxu0 0
        %1471 = vmatpush1.bf16.xpose.msra.mxu0 0
        %1472 = vmatprep.subr.bf16.mxu0 0
        %1473 = vmatpush1.bf16.xpose.msra.mxu0 0
        %1474 = vmatprep.subr.bf16.mxu0 0
        %1475 = vmatpush1.bf16.xpose.msra.mxu0 0
        %1476 = vmatprep.subr.bf16.mxu0 0
        %1477 = vmatpush1.bf16.xpose.msra.mxu0 0
        %1478 = vmatprep.subr.bf16.mxu0 0
        %1479 = vmatpush1.bf16.xpose.msra.mxu0 0
        %1480 = vmatprep.subr.bf16.mxu0 0
        %1481 = vmatpush1.bf16.xpose.msra.mxu0 0
        %1482 = vmatprep.subr.bf16.mxu0 0
        %1483 = vmatpush1.bf16.xpose.msra.mxu0 0
        %1484 = vmatprep.subr.bf16.mxu0 0
        %1485 = vmatpush1.bf16.xpose.msra.mxu0 0
        %1486 = vmatprep.subr.bf16.mxu0 0
        %1487 = vmatpush1.bf16.xpose.msra.mxu0 0
        %1488 = vmatprep.subr.bf16.mxu0 0
        %1489 = vmatpush1.bf16.xpose.msra.mxu0 0
        %1490 = vmatprep.subr.bf16.mxu0 0
        %1491 = vmatpush1.bf16.xpose.msra.mxu0 0
        %1492 = vmatprep.subr.bf16.mxu0 0
        %1493 = vmatpush1.bf16.xpose.msra.mxu0 0
        %1494 = vmatprep.subr.bf16.mxu0 0
        %1495 = vmatpush1.bf16.xpose.msra.mxu0 0
        %1496 = vmatprep.subr.bf16.mxu0 0
        %1497 = vmatpush1.bf16.xpose.msra.mxu0 0
        %1498 = vmatprep.subr.bf16.mxu0 0
        %1499 = vmatpush1.bf16.xpose.msra.mxu0 0
        %1500 = vmatprep.mubr.bf16.mxu0 0
        %1501 = vmatmul.mubr.bf16.gmra.mrb[0].mxu0 %v1463
        %v1502 = vpop.f32.mrb[0].mxu0
        %v1503 = vadd.f32 %v1185, %v1502
        %v1504 = vpop.f32.mrb[0].mxu0
        %v1505 = vpop.f32.mrb[0].mxu0
        %v1506 = vpop.f32.mrb[0].mxu0
        %1507 = vdwg.mxu0
        %v1508 = vsel %vm1281, %v1451, -inf
        %1509 = vmax.xlane.f32.xlu0 %v1508
        %v1510 = vpop.xlane.xlu0 %1509
        %v1511 = vsel %vm1281, %v1503, -inf
        %1512 = vmax.xlane.f32.xlu0 %v1511
        %v1513 = vpop.xlane.xlu0 %1512
        %v1514 = vsub.f32 %v1451, %v1510
        %v1515 = vsub.f32 %v1503, %v1513
        %v1516 = vmul.f32 %v1514, 1.442695
        %v1517 = vpow.pop %v1516
        %v1518 = vmul.f32 %v1515, 1.442695
        %v1519 = vpow.pop %v1518
        %v1520 = vsel %vm1281, %v1517, 0.0
        %1521 = vadd.xlane.f32.xlu0 %v1520
        %v1522 = vpop.xlane.xlu0 %1521
        %v1523 = vsel %vm1281, %v1519, 0.0
        %1524 = vadd.xlane.f32.xlu0 %v1523
        %v1525 = vpop.xlane.xlu0 %1524
        %v1526 = vrcp.pop %v1522
        %v1527 = vrcp.pop %v1525
        %v1528 = vmul.f32 %v1517, %v1526
        %v1529 = vmul.f32 %v1519, %v1527
        %v1530 = vpack.c.bf16 %v1528, %v1528
        %v1531 = vpack.c.bf16 %v1529, %v1529
        %1533 = vrot.lane.b32.xlu0 %v1152, 96
        %v1534 = vpop.permute.xlu0 %1533
        %v1536 = vsel %vm1281, %v1530, 0
        %v1539 = vsel %vm1309, %v1534, 0
        %1541 = vmatprep.subr.bf16.mxu0 0
        %1542 = vmatpush1.bf16.msra.mxu0 %v1539
        %1543 = vmatprep.subr.bf16.mxu0 0
        %1544 = vmatpush1.bf16.msra.mxu0 0
        %1545 = vmatprep.subr.bf16.mxu0 0
        %1546 = vmatpush1.bf16.msra.mxu0 0
        %1547 = vmatprep.subr.bf16.mxu0 0
        %1548 = vmatpush1.bf16.msra.mxu0 0
        %1549 = vmatprep.subr.bf16.mxu0 0
        %1550 = vmatpush1.bf16.msra.mxu0 0
        %1551 = vmatprep.subr.bf16.mxu0 0
        %1552 = vmatpush1.bf16.msra.mxu0 0
        %1553 = vmatprep.subr.bf16.mxu0 0
        %1554 = vmatpush1.bf16.msra.mxu0 0
        %1555 = vmatprep.subr.bf16.mxu0 0
        %1556 = vmatpush1.bf16.msra.mxu0 0
        %1557 = vmatprep.subr.bf16.mxu0 0
        %1558 = vmatpush1.bf16.msra.mxu0 0
        %1559 = vmatprep.subr.bf16.mxu0 0
        %1560 = vmatpush1.bf16.msra.mxu0 0
        %1561 = vmatprep.subr.bf16.mxu0 0
        %1562 = vmatpush1.bf16.msra.mxu0 0
        %1563 = vmatprep.subr.bf16.mxu0 0
        %1564 = vmatpush1.bf16.msra.mxu0 0
        %1565 = vmatprep.subr.bf16.mxu0 0
        %1566 = vmatpush1.bf16.msra.mxu0 0
        %1567 = vmatprep.subr.bf16.mxu0 0
        %1568 = vmatpush1.bf16.msra.mxu0 0
        %1569 = vmatprep.subr.bf16.mxu0 0
        %1570 = vmatpush1.bf16.msra.mxu0 0
        %1571 = vmatprep.subr.bf16.mxu0 0
        %1572 = vmatpush1.bf16.msra.mxu0 0
        %1573 = vmatprep.mubr.bf16.mxu0 0
        %1574 = vmatmul.mubr.bf16.gmra.mrb[0].mxu0 %v1536
        %v1575 = vpop.f32.mrb[0].mxu0
        %v1576 = vadd.f32 0.0, %v1575
        %v1577 = vpop.f32.mrb[0].mxu0
        %v1578 = vpop.f32.mrb[0].mxu0
        %v1579 = vpop.f32.mrb[0].mxu0
        %1580 = vdwg.mxu0
        %1582 = vrot.lane.b32.xlu0 %v1153, 96
        %v1583 = vpop.permute.xlu0 %1582
        %v1585 = vsel %vm1281, %v1531, 0
        %v1588 = vsel %vm1309, %v1583, 0
        %1590 = vmatprep.subr.bf16.mxu0 0
        %1591 = vmatpush1.bf16.msra.mxu0 %v1588
        %1592 = vmatprep.subr.bf16.mxu0 0
        %1593 = vmatpush1.bf16.msra.mxu0 0
        %1594 = vmatprep.subr.bf16.mxu0 0
        %1595 = vmatpush1.bf16.msra.mxu0 0
        %1596 = vmatprep.subr.bf16.mxu0 0
        %1597 = vmatpush1.bf16.msra.mxu0 0
        %1598 = vmatprep.subr.bf16.mxu0 0
        %1599 = vmatpush1.bf16.msra.mxu0 0
        %1600 = vmatprep.subr.bf16.mxu0 0
        %1601 = vmatpush1.bf16.msra.mxu0 0
        %1602 = vmatprep.subr.bf16.mxu0 0
        %1603 = vmatpush1.bf16.msra.mxu0 0
        %1604 = vmatprep.subr.bf16.mxu0 0
        %1605 = vmatpush1.bf16.msra.mxu0 0
        %1606 = vmatprep.subr.bf16.mxu0 0
        %1607 = vmatpush1.bf16.msra.mxu0 0
        %1608 = vmatprep.subr.bf16.mxu0 0
        %1609 = vmatpush1.bf16.msra.mxu0 0
        %1610 = vmatprep.subr.bf16.mxu0 0
        %1611 = vmatpush1.bf16.msra.mxu0 0
        %1612 = vmatprep.subr.bf16.mxu0 0
        %1613 = vmatpush1.bf16.msra.mxu0 0
        %1614 = vmatprep.subr.bf16.mxu0 0
        %1615 = vmatpush1.bf16.msra.mxu0 0
        %1616 = vmatprep.subr.bf16.mxu0 0
        %1617 = vmatpush1.bf16.msra.mxu0 0
        %1618 = vmatprep.subr.bf16.mxu0 0
        %1619 = vmatpush1.bf16.msra.mxu0 0
        %1620 = vmatprep.subr.bf16.mxu0 0
        %1621 = vmatpush1.bf16.msra.mxu0 0
        %1622 = vmatprep.mubr.bf16.mxu0 0
        %1623 = vmatmul.mubr.bf16.gmra.mrb[0].mxu0 %v1585
        %v1624 = vpop.f32.mrb[0].mxu0
        %v1625 = vadd.f32 0.0, %v1624
        %v1626 = vpop.f32.mrb[0].mxu0
        %v1627 = vpop.f32.mrb[0].mxu0
        %v1628 = vpop.f32.mrb[0].mxu0
        %1629 = vdwg.mxu0
        %v1630 = vpack.c.bf16 %v1625, %v1576
        %v1631 = vld [vmem:[%s703 + $0x10] sm:$0xf]
        %v1632 = vld [vmem:[%s703 + $0x14] sm:$0xf]
        %v1633 = vld [vmem:[%s703 + $0x18] sm:$0xf]
        %v1634 = vld [vmem:[%s703 + $0x1c] sm:$0xf]
        %v1639 = vunpack.c.l.b16 %v1631
        %v1640 = vunpack.c.l.b16 %v1632
        %v1641 = vunpack.c.l.b16 %v1633
        %v1642 = vunpack.c.l.b16 %v1634
        %v1643 = vpack.c.b16 %v1640, %v1639
        %v1644 = vpack.c.b16 %v1642, %v1641
        %v1648 = vsel %vm1188, %v1630, 0
        %1650 = vmatprep.subr.bf16.mxu0 0
        %1651 = vmatpush1.bf16.msra.mxu0 %v1643
        %1652 = vmatprep.subr.bf16.mxu0 0
        %1653 = vmatpush1.bf16.msra.mxu0 %v1644
        %1654 = vmatprep.subr.bf16.mxu0 0
        %1655 = vmatpush1.bf16.msra.mxu0 0
        %1656 = vmatprep.subr.bf16.mxu0 0
        %1657 = vmatpush1.bf16.msra.mxu0 0
        %1658 = vmatprep.subr.bf16.mxu0 0
        %1659 = vmatpush1.bf16.msra.mxu0 0
        %1660 = vmatprep.subr.bf16.mxu0 0
        %1661 = vmatpush1.bf16.msra.mxu0 0
        %1662 = vmatprep.subr.bf16.mxu0 0
        %1663 = vmatpush1.bf16.msra.mxu0 0
        %1664 = vmatprep.subr.bf16.mxu0 0
        %1665 = vmatpush1.bf16.msra.mxu0 0
        %1666 = vmatprep.subr.bf16.mxu0 0
        %1667 = vmatpush1.bf16.msra.mxu0 0
        %1668 = vmatprep.subr.bf16.mxu0 0
        %1669 = vmatpush1.bf16.msra.mxu0 0
        %1670 = vmatprep.subr.bf16.mxu0 0
        %1671 = vmatpush1.bf16.msra.mxu0 0
        %1672 = vmatprep.subr.bf16.mxu0 0
        %1673 = vmatpush1.bf16.msra.mxu0 0
        %1674 = vmatprep.subr.bf16.mxu0 0
        %1675 = vmatpush1.bf16.msra.mxu0 0
        %1676 = vmatprep.subr.bf16.mxu0 0
        %1677 = vmatpush1.bf16.msra.mxu0 0
        %1678 = vmatprep.subr.bf16.mxu0 0
        %1679 = vmatpush1.bf16.msra.mxu0 0
        %1680 = vmatprep.subr.bf16.mxu0 0
        %1681 = vmatpush1.bf16.msra.mxu0 0
        %1682 = vmatprep.mubr.bf16.mxu0 0
        %1683 = vmatmul.mubr.bf16.gmra.mrb[0].mxu0 %v1648
        %v1684 = vpop.f32.mrb[0].mxu0
        %v1685 = vadd.f32 0.0, %v1684
        %v1686 = vpop.f32.mrb[0].mxu0
        %v1687 = vpop.f32.mrb[0].mxu0
        %v1688 = vadd.f32 0.0, %v1687
        %v1689 = vpop.f32.mrb[0].mxu0
        %1690 = vdwg.mxu0
        %v1695 = vunpack.c.l.b16 %v1400
        %v1696 = vunpack.c.l.b16 %v1401
        %v1697 = vunpack.c.l.b16 %v1402
        %v1698 = vunpack.c.l.b16 %v1403
        %v1699 = vpack.c.b16 %v1696, %v1695
        %v1700 = vpack.c.b16 %v1698, %v1697
        %v1704 = vsel %vm1188, %v1399, 0
        %1706 = vmatprep.subr.bf16.mxu0 0
        %1707 = vmatpush1.bf16.msra.mxu0 %v1699
        %1708 = vmatprep.subr.bf16.mxu0 0
        %1709 = vmatpush1.bf16.msra.mxu0 %v1700
        %1710 = vmatprep.subr.bf16.mxu0 0
        %1711 = vmatpush1.bf16.msra.mxu0 0
        %1712 = vmatprep.subr.bf16.mxu0 0
        %1713 = vmatpush1.bf16.msra.mxu0 0
        %1714 = vmatprep.subr.bf16.mxu0 0
        %1715 = vmatpush1.bf16.msra.mxu0 0
        %1716 = vmatprep.subr.bf16.mxu0 0
        %1717 = vmatpush1.bf16.msra.mxu0 0
        %1718 = vmatprep.subr.bf16.mxu0 0
        %1719 = vmatpush1.bf16.msra.mxu0 0
        %1720 = vmatprep.subr.bf16.mxu0 0
        %1721 = vmatpush1.bf16.msra.mxu0 0
        %1722 = vmatprep.subr.bf16.mxu0 0
        %1723 = vmatpush1.bf16.msra.mxu0 0
        %1724 = vmatprep.subr.bf16.mxu0 0
        %1725 = vmatpush1.bf16.msra.mxu0 0
        %1726 = vmatprep.subr.bf16.mxu0 0
        %1727 = vmatpush1.bf16.msra.mxu0 0
        %1728 = vmatprep.subr.bf16.mxu0 0
        %1729 = vmatpush1.bf16.msra.mxu0 0
        %1730 = vmatprep.subr.bf16.mxu0 0
        %1731 = vmatpush1.bf16.msra.mxu0 0
        %1732 = vmatprep.subr.bf16.mxu0 0
        %1733 = vmatpush1.bf16.msra.mxu0 0
        %1734 = vmatprep.subr.bf16.mxu0 0
        %1735 = vmatpush1.bf16.msra.mxu0 0
        %1736 = vmatprep.subr.bf16.mxu0 0
        %1737 = vmatpush1.bf16.msra.mxu0 0
        %1738 = vmatprep.mubr.bf16.mxu0 0
        %1739 = vmatmul.mubr.bf16.gmra.mrb[0].mxu0 %v1704
        %v1740 = vpop.f32.mrb[0].mxu0
        %v1741 = vadd.f32 %v1685, %v1740
        %v1742 = vpop.f32.mrb[0].mxu0
        %v1743 = vpop.f32.mrb[0].mxu0
        %v1744 = vadd.f32 %v1688, %v1743
        %v1745 = vpop.f32.mrb[0].mxu0
        %1746 = vdwg.mxu0
        %1747 = vrot.lane.b32.xlu0 %v1148, 64
        %v1748 = vpop.permute.xlu0 %1747
        %1749 = vrot.lane.b32.xlu0 %v1150, 64
        %v1750 = vpop.permute.xlu0 %1749
        %v1752 = vsel %vm1188, %v1748, 0
        %v1755 = vsel %vm1188, %v1750, 0
        %1757 = vmatprep.subr.bf16.mxu0 0
        %1758 = vmatpush1.bf16.xpose.msra.mxu0 %v1755
        %1759 = vmatprep.subr.bf16.mxu0 0
        %1760 = vmatpush1.bf16.xpose.msra.mxu0 0
        %1761 = vmatprep.subr.bf16.mxu0 0
        %1762 = vmatpush1.bf16.xpose.msra.mxu0 0
        %1763 = vmatprep.subr.bf16.mxu0 0
        %1764 = vmatpush1.bf16.xpose.msra.mxu0 0
        %1765 = vmatprep.subr.bf16.mxu0 0
        %1766 = vmatpush1.bf16.xpose.msra.mxu0 0
        %1767 = vmatprep.subr.bf16.mxu0 0
        %1768 = vmatpush1.bf16.xpose.msra.mxu0 0
        %1769 = vmatprep.subr.bf16.mxu0 0
        %1770 = vmatpush1.bf16.xpose.msra.mxu0 0
        %1771 = vmatprep.subr.bf16.mxu0 0
        %1772 = vmatpush1.bf16.xpose.msra.mxu0 0
        %1773 = vmatprep.subr.bf16.mxu0 0
        %1774 = vmatpush1.bf16.xpose.msra.mxu0 0
        %1775 = vmatprep.subr.bf16.mxu0 0
        %1776 = vmatpush1.bf16.xpose.msra.mxu0 0
        %1777 = vmatprep.subr.bf16.mxu0 0
        %1778 = vmatpush1.bf16.xpose.msra.mxu0 0
        %1779 = vmatprep.subr.bf16.mxu0 0
        %1780 = vmatpush1.bf16.xpose.msra.mxu0 0
        %1781 = vmatprep.subr.bf16.mxu0 0
        %1782 = vmatpush1.bf16.xpose.msra.mxu0 0
        %1783 = vmatprep.subr.bf16.mxu0 0
        %1784 = vmatpush1.bf16.xpose.msra.mxu0 0
        %1785 = vmatprep.subr.bf16.mxu0 0
        %1786 = vmatpush1.bf16.xpose.msra.mxu0 0
        %1787 = vmatprep.subr.bf16.mxu0 0
        %1788 = vmatpush1.bf16.xpose.msra.mxu0 0
        %1789 = vmatprep.mubr.bf16.mxu0 0
        %1790 = vmatmul.mubr.bf16.gmra.mrb[0].mxu0 %v1752
        %v1791 = vpop.f32.mrb[0].mxu0
        %v1792 = vadd.f32 %v1181, %v1791
        %v1793 = vpop.f32.mrb[0].mxu0
        %v1794 = vpop.f32.mrb[0].mxu0
        %v1795 = vpop.f32.mrb[0].mxu0
        %1796 = vdwg.mxu0
        %1797 = vrot.lane.b32.xlu0 %v1149, 64
        %v1798 = vpop.permute.xlu0 %1797
        %1799 = vrot.lane.b32.xlu0 %v1151, 64
        %v1800 = vpop.permute.xlu0 %1799
        %v1802 = vsel %vm1188, %v1798, 0
        %v1805 = vsel %vm1188, %v1800, 0
        %1807 = vmatprep.subr.bf16.mxu0 0
        %1808 = vmatpush1.bf16.xpose.msra.mxu0 %v1805
        %1809 = vmatprep.subr.bf16.mxu0 0
        %1810 = vmatpush1.bf16.xpose.msra.mxu0 0
        %1811 = vmatprep.subr.bf16.mxu0 0
        %1812 = vmatpush1.bf16.xpose.msra.mxu0 0
        %1813 = vmatprep.subr.bf16.mxu0 0
        %1814 = vmatpush1.bf16.xpose.msra.mxu0 0
        %1815 = vmatprep.subr.bf16.mxu0 0
        %1816 = vmatpush1.bf16.xpose.msra.mxu0 0
        %1817 = vmatprep.subr.bf16.mxu0 0
        %1818 = vmatpush1.bf16.xpose.msra.mxu0 0
        %1819 = vmatprep.subr.bf16.mxu0 0
        %1820 = vmatpush1.bf16.xpose.msra.mxu0 0
        %1821 = vmatprep.subr.bf16.mxu0 0
        %1822 = vmatpush1.bf16.xpose.msra.mxu0 0
        %1823 = vmatprep.subr.bf16.mxu0 0
        %1824 = vmatpush1.bf16.xpose.msra.mxu0 0
        %1825 = vmatprep.subr.bf16.mxu0 0
        %1826 = vmatpush1.bf16.xpose.msra.mxu0 0
        %1827 = vmatprep.subr.bf16.mxu0 0
        %1828 = vmatpush1.bf16.xpose.msra.mxu0 0
        %1829 = vmatprep.subr.bf16.mxu0 0
        %1830 = vmatpush1.bf16.xpose.msra.mxu0 0
        %1831 = vmatprep.subr.bf16.mxu0 0
        %1832 = vmatpush1.bf16.xpose.msra.mxu0 0
        %1833 = vmatprep.subr.bf16.mxu0 0
        %1834 = vmatpush1.bf16.xpose.msra.mxu0 0
        %1835 = vmatprep.subr.bf16.mxu0 0
        %1836 = vmatpush1.bf16.xpose.msra.mxu0 0
        %1837 = vmatprep.subr.bf16.mxu0 0
        %1838 = vmatpush1.bf16.xpose.msra.mxu0 0
        %1839 = vmatprep.mubr.bf16.mxu0 0
        %1840 = vmatmul.mubr.bf16.gmra.mrb[0].mxu0 %v1802
        %v1841 = vpop.f32.mrb[0].mxu0
        %v1842 = vadd.f32 %v1185, %v1841
        %v1843 = vpop.f32.mrb[0].mxu0
        %v1844 = vpop.f32.mrb[0].mxu0
        %v1845 = vpop.f32.mrb[0].mxu0
        %1846 = vdwg.mxu0
        %v1847 = vsel %vm1281, %v1792, -inf
        %1848 = vmax.xlane.f32.xlu0 %v1847
        %v1849 = vpop.xlane.xlu0 %1848
        %v1850 = vsel %vm1281, %v1842, -inf
        %1851 = vmax.xlane.f32.xlu0 %v1850
        %v1852 = vpop.xlane.xlu0 %1851
        %v1853 = vsub.f32 %v1792, %v1849
        %v1854 = vsub.f32 %v1842, %v1852
        %v1855 = vmul.f32 %v1853, 1.442695
        %v1856 = vpow.pop %v1855
        %v1857 = vmul.f32 %v1854, 1.442695
        %v1858 = vpow.pop %v1857
        %v1859 = vsel %vm1281, %v1856, 0.0
        %1860 = vadd.xlane.f32.xlu0 %v1859
        %v1861 = vpop.xlane.xlu0 %1860
        %v1862 = vsel %vm1281, %v1858, 0.0
        %1863 = vadd.xlane.f32.xlu0 %v1862
        %v1864 = vpop.xlane.xlu0 %1863
        %v1865 = vrcp.pop %v1861
        %v1866 = vrcp.pop %v1864
        %v1867 = vmul.f32 %v1856, %v1865
        %v1868 = vmul.f32 %v1858, %v1866
        %v1869 = vpack.c.bf16 %v1867, %v1867
        %v1870 = vpack.c.bf16 %v1868, %v1868
        %1871 = vrot.lane.b32.xlu0 %v1152, 64
        %v1872 = vpop.permute.xlu0 %1871
        %v1874 = vsel %vm1281, %v1869, 0
        %v1877 = vsel %vm1309, %v1872, 0
        %1879 = vmatprep.subr.bf16.mxu0 0
        %1880 = vmatpush1.bf16.msra.mxu0 %v1877
        %1881 = vmatprep.subr.bf16.mxu0 0
        %1882 = vmatpush1.bf16.msra.mxu0 0
        %1883 = vmatprep.subr.bf16.mxu0 0
        %1884 = vmatpush1.bf16.msra.mxu0 0
        %1885 = vmatprep.subr.bf16.mxu0 0
        %1886 = vmatpush1.bf16.msra.mxu0 0
        %1887 = vmatprep.subr.bf16.mxu0 0
        %1888 = vmatpush1.bf16.msra.mxu0 0
        %1889 = vmatprep.subr.bf16.mxu0 0
        %1890 = vmatpush1.bf16.msra.mxu0 0
        %1891 = vmatprep.subr.bf16.mxu0 0
        %1892 = vmatpush1.bf16.msra.mxu0 0
        %1893 = vmatprep.subr.bf16.mxu0 0
        %1894 = vmatpush1.bf16.msra.mxu0 0
        %1895 = vmatprep.subr.bf16.mxu0 0
        %1896 = vmatpush1.bf16.msra.mxu0 0
        %1897 = vmatprep.subr.bf16.mxu0 0
        %1898 = vmatpush1.bf16.msra.mxu0 0
        %1899 = vmatprep.subr.bf16.mxu0 0
        %1900 = vmatpush1.bf16.msra.mxu0 0
        %1901 = vmatprep.subr.bf16.mxu0 0
        %1902 = vmatpush1.bf16.msra.mxu0 0
        %1903 = vmatprep.subr.bf16.mxu0 0
        %1904 = vmatpush1.bf16.msra.mxu0 0
        %1905 = vmatprep.subr.bf16.mxu0 0
        %1906 = vmatpush1.bf16.msra.mxu0 0
        %1907 = vmatprep.subr.bf16.mxu0 0
        %1908 = vmatpush1.bf16.msra.mxu0 0
        %1909 = vmatprep.subr.bf16.mxu0 0
        %1910 = vmatpush1.bf16.msra.mxu0 0
        %1911 = vmatprep.mubr.bf16.mxu0 0
        %1912 = vmatmul.mubr.bf16.gmra.mrb[0].mxu0 %v1874
        %v1913 = vpop.f32.mrb[0].mxu0
        %v1914 = vadd.f32 0.0, %v1913
        %v1915 = vpop.f32.mrb[0].mxu0
        %v1916 = vpop.f32.mrb[0].mxu0
        %v1917 = vpop.f32.mrb[0].mxu0
        %1918 = vdwg.mxu0
        %1919 = vrot.lane.b32.xlu0 %v1153, 64
        %v1920 = vpop.permute.xlu0 %1919
        %v1922 = vsel %vm1281, %v1870, 0
        %v1925 = vsel %vm1309, %v1920, 0
        %1927 = vmatprep.subr.bf16.mxu0 0
        %1928 = vmatpush1.bf16.msra.mxu0 %v1925
        %1929 = vmatprep.subr.bf16.mxu0 0
        %1930 = vmatpush1.bf16.msra.mxu0 0
        %1931 = vmatprep.subr.bf16.mxu0 0
        %1932 = vmatpush1.bf16.msra.mxu0 0
        %1933 = vmatprep.subr.bf16.mxu0 0
        %1934 = vmatpush1.bf16.msra.mxu0 0
        %1935 = vmatprep.subr.bf16.mxu0 0
        %1936 = vmatpush1.bf16.msra.mxu0 0
        %1937 = vmatprep.subr.bf16.mxu0 0
        %1938 = vmatpush1.bf16.msra.mxu0 0
        %1939 = vmatprep.subr.bf16.mxu0 0
        %1940 = vmatpush1.bf16.msra.mxu0 0
        %1941 = vmatprep.subr.bf16.mxu0 0
        %1942 = vmatpush1.bf16.msra.mxu0 0
        %1943 = vmatprep.subr.bf16.mxu0 0
        %1944 = vmatpush1.bf16.msra.mxu0 0
        %1945 = vmatprep.subr.bf16.mxu0 0
        %1946 = vmatpush1.bf16.msra.mxu0 0
        %1947 = vmatprep.subr.bf16.mxu0 0
        %1948 = vmatpush1.bf16.msra.mxu0 0
        %1949 = vmatprep.subr.bf16.mxu0 0
        %1950 = vmatpush1.bf16.msra.mxu0 0
        %1951 = vmatprep.subr.bf16.mxu0 0
        %1952 = vmatpush1.bf16.msra.mxu0 0
        %1953 = vmatprep.subr.bf16.mxu0 0
        %1954 = vmatpush1.bf16.msra.mxu0 0
        %1955 = vmatprep.subr.bf16.mxu0 0
        %1956 = vmatpush1.bf16.msra.mxu0 0
        %1957 = vmatprep.subr.bf16.mxu0 0
        %1958 = vmatpush1.bf16.msra.mxu0 0
        %1959 = vmatprep.mubr.bf16.mxu0 0
        %1960 = vmatmul.mubr.bf16.gmra.mrb[0].mxu0 %v1922
        %v1961 = vpop.f32.mrb[0].mxu0
        %v1962 = vadd.f32 0.0, %v1961
        %v1963 = vpop.f32.mrb[0].mxu0
        %v1964 = vpop.f32.mrb[0].mxu0
        %v1965 = vpop.f32.mrb[0].mxu0
        %1966 = vdwg.mxu0
        %v1967 = vpack.c.bf16 %v1962, %v1914
        %v1968 = vld [vmem:[%s703 + $0x20] sm:$0xf]
        %v1969 = vld [vmem:[%s703 + $0x24] sm:$0xf]
        %v1970 = vld [vmem:[%s703 + $0x28] sm:$0xf]
        %v1971 = vld [vmem:[%s703 + $0x2c] sm:$0xf]
        %v1976 = vunpack.c.l.b16 %v1968
        %v1977 = vunpack.c.l.b16 %v1969
        %v1978 = vunpack.c.l.b16 %v1970
        %v1979 = vunpack.c.l.b16 %v1971
        %v1980 = vpack.c.b16 %v1977, %v1976
        %v1981 = vpack.c.b16 %v1979, %v1978
        %v1985 = vsel %vm1188, %v1967, 0
        %1987 = vmatprep.subr.bf16.mxu0 0
        %1988 = vmatpush1.bf16.msra.mxu0 %v1980
        %1989 = vmatprep.subr.bf16.mxu0 0
        %1990 = vmatpush1.bf16.msra.mxu0 %v1981
        %1991 = vmatprep.subr.bf16.mxu0 0
        %1992 = vmatpush1.bf16.msra.mxu0 0
        %1993 = vmatprep.subr.bf16.mxu0 0
        %1994 = vmatpush1.bf16.msra.mxu0 0
        %1995 = vmatprep.subr.bf16.mxu0 0
        %1996 = vmatpush1.bf16.msra.mxu0 0
        %1997 = vmatprep.subr.bf16.mxu0 0
        %1998 = vmatpush1.bf16.msra.mxu0 0
        %1999 = vmatprep.subr.bf16.mxu0 0
        %2000 = vmatpush1.bf16.msra.mxu0 0
        %2001 = vmatprep.subr.bf16.mxu0 0
        %2002 = vmatpush1.bf16.msra.mxu0 0
        %2003 = vmatprep.subr.bf16.mxu0 0
        %2004 = vmatpush1.bf16.msra.mxu0 0
        %2005 = vmatprep.subr.bf16.mxu0 0
        %2006 = vmatpush1.bf16.msra.mxu0 0
        %2007 = vmatprep.subr.bf16.mxu0 0
        %2008 = vmatpush1.bf16.msra.mxu0 0
        %2009 = vmatprep.subr.bf16.mxu0 0
        %2010 = vmatpush1.bf16.msra.mxu0 0
        %2011 = vmatprep.subr.bf16.mxu0 0
        %2012 = vmatpush1.bf16.msra.mxu0 0
        %2013 = vmatprep.subr.bf16.mxu0 0
        %2014 = vmatpush1.bf16.msra.mxu0 0
        %2015 = vmatprep.subr.bf16.mxu0 0
        %2016 = vmatpush1.bf16.msra.mxu0 0
        %2017 = vmatprep.subr.bf16.mxu0 0
        %2018 = vmatpush1.bf16.msra.mxu0 0
        %2019 = vmatprep.mubr.bf16.mxu0 0
        %2020 = vmatmul.mubr.bf16.gmra.mrb[0].mxu0 %v1985
        %v2021 = vpop.f32.mrb[0].mxu0
        %v2022 = vadd.f32 0.0, %v2021
        %v2023 = vpop.f32.mrb[0].mxu0
        %v2024 = vpop.f32.mrb[0].mxu0
        %v2025 = vadd.f32 0.0, %v2024
        %v2026 = vpop.f32.mrb[0].mxu0
        %2027 = vdwg.mxu0
        %v2028 = vadd.f32 %v1741, %v2022
        %v2029 = vadd.f32 %v1744, %v2025
        %2030 = vrot.lane.b32.xlu0 %v1148, 32
        %v2031 = vpop.permute.xlu0 %2030
        %2032 = vrot.lane.b32.xlu0 %v1150, 32
        %v2033 = vpop.permute.xlu0 %2032
        %v2035 = vsel %vm1188, %v2031, 0
        %v2038 = vsel %vm1188, %v2033, 0
        %2040 = vmatprep.subr.bf16.mxu0 0
        %2041 = vmatpush1.bf16.xpose.msra.mxu0 %v2038
        %2042 = vmatprep.subr.bf16.mxu0 0
        %2043 = vmatpush1.bf16.xpose.msra.mxu0 0
        %2044 = vmatprep.subr.bf16.mxu0 0
        %2045 = vmatpush1.bf16.xpose.msra.mxu0 0
        %2046 = vmatprep.subr.bf16.mxu0 0
        %2047 = vmatpush1.bf16.xpose.msra.mxu0 0
        %2048 = vmatprep.subr.bf16.mxu0 0
        %2049 = vmatpush1.bf16.xpose.msra.mxu0 0
        %2050 = vmatprep.subr.bf16.mxu0 0
        %2051 = vmatpush1.bf16.xpose.msra.mxu0 0
        %2052 = vmatprep.subr.bf16.mxu0 0
        %2053 = vmatpush1.bf16.xpose.msra.mxu0 0
        %2054 = vmatprep.subr.bf16.mxu0 0
        %2055 = vmatpush1.bf16.xpose.msra.mxu0 0
        %2056 = vmatprep.subr.bf16.mxu0 0
        %2057 = vmatpush1.bf16.xpose.msra.mxu0 0
        %2058 = vmatprep.subr.bf16.mxu0 0
        %2059 = vmatpush1.bf16.xpose.msra.mxu0 0
        %2060 = vmatprep.subr.bf16.mxu0 0
        %2061 = vmatpush1.bf16.xpose.msra.mxu0 0
        %2062 = vmatprep.subr.bf16.mxu0 0
        %2063 = vmatpush1.bf16.xpose.msra.mxu0 0
        %2064 = vmatprep.subr.bf16.mxu0 0
        %2065 = vmatpush1.bf16.xpose.msra.mxu0 0
        %2066 = vmatprep.subr.bf16.mxu0 0
        %2067 = vmatpush1.bf16.xpose.msra.mxu0 0
        %2068 = vmatprep.subr.bf16.mxu0 0
        %2069 = vmatpush1.bf16.xpose.msra.mxu0 0
        %2070 = vmatprep.subr.bf16.mxu0 0
        %2071 = vmatpush1.bf16.xpose.msra.mxu0 0
        %2072 = vmatprep.mubr.bf16.mxu0 0
        %2073 = vmatmul.mubr.bf16.gmra.mrb[0].mxu0 %v2035
        %v2074 = vpop.f32.mrb[0].mxu0
        %v2075 = vadd.f32 %v1181, %v2074
        %v2076 = vpop.f32.mrb[0].mxu0
        %v2077 = vpop.f32.mrb[0].mxu0
        %v2078 = vpop.f32.mrb[0].mxu0
        %2079 = vdwg.mxu0
        %2080 = vrot.lane.b32.xlu0 %v1149, 32
        %v2081 = vpop.permute.xlu0 %2080
        %2082 = vrot.lane.b32.xlu0 %v1151, 32
        %v2083 = vpop.permute.xlu0 %2082
        %v2085 = vsel %vm1188, %v2081, 0
        %v2088 = vsel %vm1188, %v2083, 0
        %2090 = vmatprep.subr.bf16.mxu0 0
        %2091 = vmatpush1.bf16.xpose.msra.mxu0 %v2088
        %2092 = vmatprep.subr.bf16.mxu0 0
        %2093 = vmatpush1.bf16.xpose.msra.mxu0 0
        %2094 = vmatprep.subr.bf16.mxu0 0
        %2095 = vmatpush1.bf16.xpose.msra.mxu0 0
        %2096 = vmatprep.subr.bf16.mxu0 0
        %2097 = vmatpush1.bf16.xpose.msra.mxu0 0
        %2098 = vmatprep.subr.bf16.mxu0 0
        %2099 = vmatpush1.bf16.xpose.msra.mxu0 0
        %2100 = vmatprep.subr.bf16.mxu0 0
        %2101 = vmatpush1.bf16.xpose.msra.mxu0 0
        %2102 = vmatprep.subr.bf16.mxu0 0
        %2103 = vmatpush1.bf16.xpose.msra.mxu0 0
        %2104 = vmatprep.subr.bf16.mxu0 0
        %2105 = vmatpush1.bf16.xpose.msra.mxu0 0
        %2106 = vmatprep.subr.bf16.mxu0 0
        %2107 = vmatpush1.bf16.xpose.msra.mxu0 0
        %2108 = vmatprep.subr.bf16.mxu0 0
        %2109 = vmatpush1.bf16.xpose.msra.mxu0 0
        %2110 = vmatprep.subr.bf16.mxu0 0
        %2111 = vmatpush1.bf16.xpose.msra.mxu0 0
        %2112 = vmatprep.subr.bf16.mxu0 0
        %2113 = vmatpush1.bf16.xpose.msra.mxu0 0
        %2114 = vmatprep.subr.bf16.mxu0 0
        %2115 = vmatpush1.bf16.xpose.msra.mxu0 0
        %2116 = vmatprep.subr.bf16.mxu0 0
        %2117 = vmatpush1.bf16.xpose.msra.mxu0 0
        %2118 = vmatprep.subr.bf16.mxu0 0
        %2119 = vmatpush1.bf16.xpose.msra.mxu0 0
        %2120 = vmatprep.subr.bf16.mxu0 0
        %2121 = vmatpush1.bf16.xpose.msra.mxu0 0
        %2122 = vmatprep.mubr.bf16.mxu0 0
        %2123 = vmatmul.mubr.bf16.gmra.mrb[0].mxu0 %v2085
        %v2124 = vpop.f32.mrb[0].mxu0
        %v2125 = vadd.f32 %v1185, %v2124
        %v2126 = vpop.f32.mrb[0].mxu0
        %v2127 = vpop.f32.mrb[0].mxu0
        %v2128 = vpop.f32.mrb[0].mxu0
        %2129 = vdwg.mxu0
        %v2130 = vsel %vm1281, %v2075, -inf
        %2131 = vmax.xlane.f32.xlu0 %v2130
        %v2132 = vpop.xlane.xlu0 %2131
        %v2133 = vsel %vm1281, %v2125, -inf
        %2134 = vmax.xlane.f32.xlu0 %v2133
        %v2135 = vpop.xlane.xlu0 %2134
        %v2136 = vsub.f32 %v2075, %v2132
        %v2137 = vsub.f32 %v2125, %v2135
        %v2138 = vmul.f32 %v2136, 1.442695
        %v2139 = vpow.pop %v2138
        %v2140 = vmul.f32 %v2137, 1.442695
        %v2141 = vpow.pop %v2140
        %v2142 = vsel %vm1281, %v2139, 0.0
        %2143 = vadd.xlane.f32.xlu0 %v2142
        %v2144 = vpop.xlane.xlu0 %2143
        %v2145 = vsel %vm1281, %v2141, 0.0
        %2146 = vadd.xlane.f32.xlu0 %v2145
        %v2147 = vpop.xlane.xlu0 %2146
        %v2148 = vrcp.pop %v2144
        %v2149 = vrcp.pop %v2147
        %v2150 = vmul.f32 %v2139, %v2148
        %v2151 = vmul.f32 %v2141, %v2149
        %v2152 = vpack.c.bf16 %v2150, %v2150
        %v2153 = vpack.c.bf16 %v2151, %v2151
        %2154 = vrot.lane.b32.xlu0 %v1152, 32
        %v2155 = vpop.permute.xlu0 %2154
        %v2157 = vsel %vm1281, %v2152, 0
        %v2160 = vsel %vm1309, %v2155, 0
        %2162 = vmatprep.subr.bf16.mxu0 0
        %2163 = vmatpush1.bf16.msra.mxu0 %v2160
        %2164 = vmatprep.subr.bf16.mxu0 0
        %2165 = vmatpush1.bf16.msra.mxu0 0
        %2166 = vmatprep.subr.bf16.mxu0 0
        %2167 = vmatpush1.bf16.msra.mxu0 0
        %2168 = vmatprep.subr.bf16.mxu0 0
        %2169 = vmatpush1.bf16.msra.mxu0 0
        %2170 = vmatprep.subr.bf16.mxu0 0
        %2171 = vmatpush1.bf16.msra.mxu0 0
        %2172 = vmatprep.subr.bf16.mxu0 0
        %2173 = vmatpush1.bf16.msra.mxu0 0
        %2174 = vmatprep.subr.bf16.mxu0 0
        %2175 = vmatpush1.bf16.msra.mxu0 0
        %2176 = vmatprep.subr.bf16.mxu0 0
        %2177 = vmatpush1.bf16.msra.mxu0 0
        %2178 = vmatprep.subr.bf16.mxu0 0
        %2179 = vmatpush1.bf16.msra.mxu0 0
        %2180 = vmatprep.subr.bf16.mxu0 0
        %2181 = vmatpush1.bf16.msra.mxu0 0
        %2182 = vmatprep.subr.bf16.mxu0 0
        %2183 = vmatpush1.bf16.msra.mxu0 0
        %2184 = vmatprep.subr.bf16.mxu0 0
        %2185 = vmatpush1.bf16.msra.mxu0 0
        %2186 = vmatprep.subr.bf16.mxu0 0
        %2187 = vmatpush1.bf16.msra.mxu0 0
        %2188 = vmatprep.subr.bf16.mxu0 0
        %2189 = vmatpush1.bf16.msra.mxu0 0
        %2190 = vmatprep.subr.bf16.mxu0 0
        %2191 = vmatpush1.bf16.msra.mxu0 0
        %2192 = vmatprep.subr.bf16.mxu0 0
        %2193 = vmatpush1.bf16.msra.mxu0 0
        %2194 = vmatprep.mubr.bf16.mxu0 0
        %2195 = vmatmul.mubr.bf16.gmra.mrb[0].mxu0 %v2157
        %v2196 = vpop.f32.mrb[0].mxu0
        %v2197 = vadd.f32 0.0, %v2196
        %v2198 = vpop.f32.mrb[0].mxu0
        %v2199 = vpop.f32.mrb[0].mxu0
        %v2200 = vpop.f32.mrb[0].mxu0
        %2201 = vdwg.mxu0
        %2202 = vrot.lane.b32.xlu0 %v1153, 32
        %v2203 = vpop.permute.xlu0 %2202
        %v2205 = vsel %vm1281, %v2153, 0
        %v2208 = vsel %vm1309, %v2203, 0
        %2210 = vmatprep.subr.bf16.mxu0 0
        %2211 = vmatpush1.bf16.msra.mxu0 %v2208
        %2212 = vmatprep.subr.bf16.mxu0 0
        %2213 = vmatpush1.bf16.msra.mxu0 0
        %2214 = vmatprep.subr.bf16.mxu0 0
        %2215 = vmatpush1.bf16.msra.mxu0 0
        %2216 = vmatprep.subr.bf16.mxu0 0
        %2217 = vmatpush1.bf16.msra.mxu0 0
        %2218 = vmatprep.subr.bf16.mxu0 0
        %2219 = vmatpush1.bf16.msra.mxu0 0
        %2220 = vmatprep.subr.bf16.mxu0 0
        %2221 = vmatpush1.bf16.msra.mxu0 0
        %2222 = vmatprep.subr.bf16.mxu0 0
        %2223 = vmatpush1.bf16.msra.mxu0 0
        %2224 = vmatprep.subr.bf16.mxu0 0
        %2225 = vmatpush1.bf16.msra.mxu0 0
        %2226 = vmatprep.subr.bf16.mxu0 0
        %2227 = vmatpush1.bf16.msra.mxu0 0
        %2228 = vmatprep.subr.bf16.mxu0 0
        %2229 = vmatpush1.bf16.msra.mxu0 0
        %2230 = vmatprep.subr.bf16.mxu0 0
        %2231 = vmatpush1.bf16.msra.mxu0 0
        %2232 = vmatprep.subr.bf16.mxu0 0
        %2233 = vmatpush1.bf16.msra.mxu0 0
        %2234 = vmatprep.subr.bf16.mxu0 0
        %2235 = vmatpush1.bf16.msra.mxu0 0
        %2236 = vmatprep.subr.bf16.mxu0 0
        %2237 = vmatpush1.bf16.msra.mxu0 0
        %2238 = vmatprep.subr.bf16.mxu0 0
        %2239 = vmatpush1.bf16.msra.mxu0 0
        %2240 = vmatprep.subr.bf16.mxu0 0
        %2241 = vmatpush1.bf16.msra.mxu0 0
        %2242 = vmatprep.mubr.bf16.mxu0 0
        %2243 = vmatmul.mubr.bf16.gmra.mrb[0].mxu0 %v2205
        %v2244 = vpop.f32.mrb[0].mxu0
        %v2245 = vadd.f32 0.0, %v2244
        %v2246 = vpop.f32.mrb[0].mxu0
        %v2247 = vpop.f32.mrb[0].mxu0
        %v2248 = vpop.f32.mrb[0].mxu0
        %2249 = vdwg.mxu0
        %v2250 = vpack.c.bf16 %v2245, %v2197
        %v2251 = vld [vmem:[%s703 + $0x30] sm:$0xf]
        %v2252 = vld [vmem:[%s703 + $0x34] sm:$0xf]
        %v2253 = vld [vmem:[%s703 + $0x38] sm:$0xf]
        %v2254 = vld [vmem:[%s703 + $0x3c] sm:$0xf]
        %v2259 = vunpack.c.l.b16 %v2251
        %v2260 = vunpack.c.l.b16 %v2252
        %v2261 = vunpack.c.l.b16 %v2253
        %v2262 = vunpack.c.l.b16 %v2254
        %v2263 = vpack.c.b16 %v2260, %v2259
        %v2264 = vpack.c.b16 %v2262, %v2261
        %v2268 = vsel %vm1188, %v2250, 0
        %2270 = vmatprep.subr.bf16.mxu0 0
        %2271 = vmatpush1.bf16.msra.mxu0 %v2263
        %2272 = vmatprep.subr.bf16.mxu0 0
        %2273 = vmatpush1.bf16.msra.mxu0 %v2264
        %2274 = vmatprep.subr.bf16.mxu0 0
        %2275 = vmatpush1.bf16.msra.mxu0 0
        %2276 = vmatprep.subr.bf16.mxu0 0
        %2277 = vmatpush1.bf16.msra.mxu0 0
        %2278 = vmatprep.subr.bf16.mxu0 0
        %2279 = vmatpush1.bf16.msra.mxu0 0
        %2280 = vmatprep.subr.bf16.mxu0 0
        %2281 = vmatpush1.bf16.msra.mxu0 0
        %2282 = vmatprep.subr.bf16.mxu0 0
        %2283 = vmatpush1.bf16.msra.mxu0 0
        %2284 = vmatprep.subr.bf16.mxu0 0
        %2285 = vmatpush1.bf16.msra.mxu0 0
        %2286 = vmatprep.subr.bf16.mxu0 0
        %2287 = vmatpush1.bf16.msra.mxu0 0
        %2288 = vmatprep.subr.bf16.mxu0 0
        %2289 = vmatpush1.bf16.msra.mxu0 0
        %2290 = vmatprep.subr.bf16.mxu0 0
        %2291 = vmatpush1.bf16.msra.mxu0 0
        %2292 = vmatprep.subr.bf16.mxu0 0
        %2293 = vmatpush1.bf16.msra.mxu0 0
        %2294 = vmatprep.subr.bf16.mxu0 0
        %2295 = vmatpush1.bf16.msra.mxu0 0
        %2296 = vmatprep.subr.bf16.mxu0 0
        %2297 = vmatpush1.bf16.msra.mxu0 0
        %2298 = vmatprep.subr.bf16.mxu0 0
        %2299 = vmatpush1.bf16.msra.mxu0 0
        %2300 = vmatprep.subr.bf16.mxu0 0
        %2301 = vmatpush1.bf16.msra.mxu0 0
        %2302 = vmatprep.mubr.bf16.mxu0 0
        %2303 = vmatmul.mubr.bf16.gmra.mrb[0].mxu0 %v2268
        %v2304 = vpop.f32.mrb[0].mxu0
        %v2305 = vadd.f32 0.0, %v2304
        %v2306 = vpop.f32.mrb[0].mxu0
        %v2307 = vpop.f32.mrb[0].mxu0
        %v2308 = vadd.f32 0.0, %v2307
        %v2309 = vpop.f32.mrb[0].mxu0
        %2310 = vdwg.mxu0
        %v2311 = vadd.f32 %v2028, %v2305
        %v2312 = vadd.f32 %v2029, %v2308
        %v2313 = vld [vmem:[%s813] sm:$0x1]
        %v2315 = vlaneseq
        %v2316 = vshrl.u32 %v2315, 7
        %v2317 = vsub.s32 0, %v2316
        %v2318 = vrot.slane %v2313, %v2317
        %v2320 = vadd.f32 %v2311, %v2318
        %v2321 = vadd.f32 %v2312, %v2318
        %v2322 = vadd.f32 %v884, %v2320
        %v2323 = vadd.f32 %v885, %v2321
        %v2324 = vld [vmem:[%s816] sm:$0x1]
        %v2325 = vld [vmem:[%s819] sm:$0x1]
        %2326 = vadd.xlane.f32.xlu0 %v2322
        %v2327 = vpop.xlane.xlu0 %2326
        %2328 = vadd.xlane.f32.xlu0 %v2323
        %v2329 = vpop.xlane.xlu0 %2328
        %v2330 = vrcp.pop 128.0
        %v2331 = vmul.f32 %v2327, %v2330
        %v2332 = vmul.f32 %v2329, %v2330
        %v2333 = vsub.f32 %v2322, %v2331
        %v2334 = vsub.f32 %v2323, %v2332
        %v2335 = vmul.f32 %v2333, %v2333
        %v2336 = vmul.f32 %v2334, %v2334
        %2337 = vadd.xlane.f32.xlu0 %v2335
        %v2338 = vpop.xlane.xlu0 %2337
        %2339 = vadd.xlane.f32.xlu0 %v2336
        %v2340 = vpop.xlane.xlu0 %2339
        %v2341 = vmul.f32 %v2338, %v2330
        %v2342 = vmul.f32 %v2340, %v2330
        %v2343 = vadd.f32 %v2341, 1e-12
        %v2344 = vadd.f32 %v2342, 1e-12
        %v2345 = vrsqrt.pop %v2343
        %v2346 = vrsqrt.pop %v2344
        %v2347 = vmul.f32 %v2333, %v2345
        %v2348 = vmul.f32 %v2334, %v2346
        %v2350 = vlaneseq
        %v2351 = vshrl.u32 %v2350, 7
        %v2352 = vsub.s32 0, %v2351
        %v2353 = vrot.slane %v2324, %v2352
        %v2355 = vmul.f32 %v2347, %v2353
        %v2356 = vmul.f32 %v2348, %v2353
        %v2358 = vlaneseq
        %v2359 = vshrl.u32 %v2358, 7
        %v2360 = vsub.s32 0, %v2359
        %v2361 = vrot.slane %v2325, %v2360
        %v2363 = vadd.f32 %v2355, %v2361
        %v2364 = vadd.f32 %v2356, %v2361
        %v2365 = vpack.c.bf16 %v2364, %v2363
        %v2366 = vld [vmem:[%s712] sm:$0xff]
        %v2367 = vld [vmem:[%s712 + $0x8] sm:$0xff]
        %v2368 = vld [vmem:[%s712 + $0x10] sm:$0xff]
        %v2369 = vld [vmem:[%s712 + $0x18] sm:$0xff]
        %v2370 = vld [vmem:[%s712 + $0x20] sm:$0xff]
        %v2371 = vld [vmem:[%s712 + $0x28] sm:$0xff]
        %v2372 = vld [vmem:[%s712 + $0x30] sm:$0xff]
        %v2373 = vld [vmem:[%s712 + $0x38] sm:$0xff]
        %v2374 = vld [vmem:[%s712 + $0x40] sm:$0xff]
        %v2375 = vld [vmem:[%s712 + $0x48] sm:$0xff]
        %v2376 = vld [vmem:[%s712 + $0x50] sm:$0xff]
        %v2377 = vld [vmem:[%s712 + $0x58] sm:$0xff]
        %v2378 = vld [vmem:[%s712 + $0x60] sm:$0xff]
        %v2379 = vld [vmem:[%s712 + $0x68] sm:$0xff]
        %v2380 = vld [vmem:[%s712 + $0x70] sm:$0xff]
        %v2381 = vld [vmem:[%s712 + $0x78] sm:$0xff]
        %v2382 = vld [vmem:[%s823] sm:$0x3]
        %v2384 = vlaneseq
        %v2385 = vshrl.u32 %v2384, 7
        %v2386 = vsub.s32 0, %v2385
        %v2387 = vrot.slane %v2382, %v2386
        %v2388 = vlaneseq
        %v2389 = vshrl.u32 %v2388, 7
        %v2390 = vsub.s32 1, %v2389
        %v2391 = vrot.slane %v2382, %v2390
        %v2410 = vunpack.c.l.b16 %v2366
        %v2411 = vunpack.c.h.b16 %v2366
        %v2412 = vunpack.c.l.b16 %v2367
        %v2413 = vunpack.c.h.b16 %v2367
        %v2414 = vunpack.c.l.b16 %v2368
        %v2415 = vunpack.c.h.b16 %v2368
        %v2416 = vunpack.c.l.b16 %v2369
        %v2417 = vunpack.c.h.b16 %v2369
        %v2418 = vunpack.c.l.b16 %v2370
        %v2419 = vunpack.c.h.b16 %v2370
        %v2420 = vunpack.c.l.b16 %v2371
        %v2421 = vunpack.c.h.b16 %v2371
        %v2422 = vunpack.c.l.b16 %v2372
        %v2423 = vunpack.c.h.b16 %v2372
        %v2424 = vunpack.c.l.b16 %v2373
        %v2425 = vunpack.c.h.b16 %v2373
        %v2426 = vunpack.c.l.b16 %v2374
        %v2427 = vunpack.c.h.b16 %v2374
        %v2428 = vunpack.c.l.b16 %v2375
        %v2429 = vunpack.c.h.b16 %v2375
        %v2430 = vunpack.c.l.b16 %v2376
        %v2431 = vunpack.c.h.b16 %v2376
        %v2432 = vunpack.c.l.b16 %v2377
        %v2433 = vunpack.c.h.b16 %v2377
        %v2434 = vunpack.c.l.b16 %v2378
        %v2435 = vunpack.c.h.b16 %v2378
        %v2436 = vunpack.c.l.b16 %v2379
        %v2437 = vunpack.c.h.b16 %v2379
        %v2438 = vunpack.c.l.b16 %v2380
        %v2439 = vunpack.c.h.b16 %v2380
        %v2440 = vunpack.c.l.b16 %v2381
        %v2441 = vunpack.c.h.b16 %v2381
        %v2442 = vpack.c.b16 %v2412, %v2410
        %v2443 = vpack.c.b16 %v2413, %v2411
        %v2444 = vpack.c.b16 %v2416, %v2414
        %v2445 = vpack.c.b16 %v2417, %v2415
        %v2446 = vpack.c.b16 %v2420, %v2418
        %v2447 = vpack.c.b16 %v2421, %v2419
        %v2448 = vpack.c.b16 %v2424, %v2422
        %v2449 = vpack.c.b16 %v2425, %v2423
        %v2450 = vpack.c.b16 %v2428, %v2426
        %v2451 = vpack.c.b16 %v2429, %v2427
        %v2452 = vpack.c.b16 %v2432, %v2430
        %v2453 = vpack.c.b16 %v2433, %v2431
        %v2454 = vpack.c.b16 %v2436, %v2434
        %v2455 = vpack.c.b16 %v2437, %v2435
        %v2456 = vpack.c.b16 %v2440, %v2438
        %v2457 = vpack.c.b16 %v2441, %v2439
        %2474 = vmatprep.subr.bf16.mxu0 %v2443
        %2475 = vmatpush1.bf16.msra.mxu0 %v2442
        %2476 = vmatprep.subr.bf16.mxu0 %v2445
        %2477 = vmatpush1.bf16.msra.mxu0 %v2444
        %2478 = vmatprep.subr.bf16.mxu0 %v2447
        %2479 = vmatpush1.bf16.msra.mxu0 %v2446
        %2480 = vmatprep.subr.bf16.mxu0 %v2449
        %2481 = vmatpush1.bf16.msra.mxu0 %v2448
        %2482 = vmatprep.subr.bf16.mxu0 %v2451
        %2483 = vmatpush1.bf16.msra.mxu0 %v2450
        %2484 = vmatprep.subr.bf16.mxu0 %v2453
        %2485 = vmatpush1.bf16.msra.mxu0 %v2452
        %2486 = vmatprep.subr.bf16.mxu0 %v2455
        %2487 = vmatpush1.bf16.msra.mxu0 %v2454
        %2488 = vmatprep.subr.bf16.mxu0 %v2457
        %2489 = vmatpush1.bf16.msra.mxu0 %v2456
        %2490 = vmatprep.subr.bf16.mxu0 0
        %2491 = vmatpush1.bf16.msra.mxu0 0
        %2492 = vmatprep.subr.bf16.mxu0 0
        %2493 = vmatpush1.bf16.msra.mxu0 0
        %2494 = vmatprep.subr.bf16.mxu0 0
        %2495 = vmatpush1.bf16.msra.mxu0 0
        %2496 = vmatprep.subr.bf16.mxu0 0
        %2497 = vmatpush1.bf16.msra.mxu0 0
        %2498 = vmatprep.subr.bf16.mxu0 0
        %2499 = vmatpush1.bf16.msra.mxu0 0
        %2500 = vmatprep.subr.bf16.mxu0 0
        %2501 = vmatpush1.bf16.msra.mxu0 0
        %2502 = vmatprep.subr.bf16.mxu0 0
        %2503 = vmatpush1.bf16.msra.mxu0 0
        %2504 = vmatprep.subr.bf16.mxu0 0
        %2505 = vmatpush1.bf16.msra.mxu0 0
        %2506 = vmatprep.mubr.bf16.mxu0 0
        %2507 = vmatmul.mubr.bf16.gmra.mrb[0].mxu0 %v2365
        %v2508 = vpop.f32.mrb[0].mxu0
        %v2509 = vadd.f32 %v2387, %v2508
        %v2510 = vpop.f32.mrb[0].mxu0
        %v2511 = vadd.f32 %v2391, %v2510
        %v2512 = vpop.f32.mrb[0].mxu0
        %v2513 = vadd.f32 %v2387, %v2512
        %v2514 = vpop.f32.mrb[0].mxu0
        %v2515 = vadd.f32 %v2391, %v2514
        %2516 = vdwg.mxu0
        %v2517 = vmul.f32 %v2509, %v2509
        %v2518 = vmul.f32 %v2511, %v2511
        %v2519 = vmul.f32 %v2513, %v2513
        %v2520 = vmul.f32 %v2515, %v2515
        %v2521 = vmul.f32 %v2509, %v2517
        %v2522 = vmul.f32 %v2511, %v2518
        %v2523 = vmul.f32 %v2513, %v2519
        %v2524 = vmul.f32 %v2515, %v2520
        %v2525 = vmul.f32 %v2521, 0.044715
        %v2526 = vmul.f32 %v2522, 0.044715
        %v2527 = vmul.f32 %v2523, 0.044715
        %v2528 = vmul.f32 %v2524, 0.044715
        %v2529 = vadd.f32 %v2509, %v2525
        %v2530 = vadd.f32 %v2511, %v2526
        %v2531 = vadd.f32 %v2513, %v2527
        %v2532 = vadd.f32 %v2515, %v2528
        %v2533 = vmul.f32 %v2529, 0.7978846
        %v2534 = vmul.f32 %v2530, 0.7978846
        %v2535 = vmul.f32 %v2531, 0.7978846
        %v2536 = vmul.f32 %v2532, 0.7978846
        %v2537 = vtanh.pop %v2533
        %v2538 = vtanh.pop %v2534
        %v2539 = vtanh.pop %v2535
        %v2540 = vtanh.pop %v2536
        %v2541 = vadd.f32 %v2537, 1.0
        %v2542 = vadd.f32 %v2538, 1.0
        %v2543 = vadd.f32 %v2539, 1.0
        %v2544 = vadd.f32 %v2540, 1.0
        %v2545 = vmul.f32 %v2541, 0.5
        %v2546 = vmul.f32 %v2542, 0.5
        %v2547 = vmul.f32 %v2543, 0.5
        %v2548 = vmul.f32 %v2544, 0.5
        %v2549 = vmul.f32 %v2509, %v2545
        %v2550 = vmul.f32 %v2511, %v2546
        %v2551 = vmul.f32 %v2513, %v2547
        %v2552 = vmul.f32 %v2515, %v2548
        %v2553 = vpack.c.bf16 %v2551, %v2549
        %v2554 = vpack.c.bf16 %v2552, %v2550
        %v2555 = vld [vmem:[%s721] sm:$0xf]
        %v2556 = vld [vmem:[%s721 + $0x4] sm:$0xf]
        %v2557 = vld [vmem:[%s721 + $0x8] sm:$0xf]
        %v2558 = vld [vmem:[%s721 + $0xc] sm:$0xf]
        %v2559 = vld [vmem:[%s721 + $0x10] sm:$0xf]
        %v2560 = vld [vmem:[%s721 + $0x14] sm:$0xf]
        %v2561 = vld [vmem:[%s721 + $0x18] sm:$0xf]
        %v2562 = vld [vmem:[%s721 + $0x1c] sm:$0xf]
        %v2563 = vld [vmem:[%s721 + $0x20] sm:$0xf]
        %v2564 = vld [vmem:[%s721 + $0x24] sm:$0xf]
        %v2565 = vld [vmem:[%s721 + $0x28] sm:$0xf]
        %v2566 = vld [vmem:[%s721 + $0x2c] sm:$0xf]
        %v2567 = vld [vmem:[%s721 + $0x30] sm:$0xf]
        %v2568 = vld [vmem:[%s721 + $0x34] sm:$0xf]
        %v2569 = vld [vmem:[%s721 + $0x38] sm:$0xf]
        %v2570 = vld [vmem:[%s721 + $0x3c] sm:$0xf]
        %v2571 = vld [vmem:[%s721 + $0x40] sm:$0xf]
        %v2572 = vld [vmem:[%s721 + $0x44] sm:$0xf]
        %v2573 = vld [vmem:[%s721 + $0x48] sm:$0xf]
        %v2574 = vld [vmem:[%s721 + $0x4c] sm:$0xf]
        %v2575 = vld [vmem:[%s721 + $0x50] sm:$0xf]
        %v2576 = vld [vmem:[%s721 + $0x54] sm:$0xf]
        %v2577 = vld [vmem:[%s721 + $0x58] sm:$0xf]
        %v2578 = vld [vmem:[%s721 + $0x5c] sm:$0xf]
        %v2579 = vld [vmem:[%s721 + $0x60] sm:$0xf]
        %v2580 = vld [vmem:[%s721 + $0x64] sm:$0xf]
        %v2581 = vld [vmem:[%s721 + $0x68] sm:$0xf]
        %v2582 = vld [vmem:[%s721 + $0x6c] sm:$0xf]
        %v2583 = vld [vmem:[%s721 + $0x70] sm:$0xf]
        %v2584 = vld [vmem:[%s721 + $0x74] sm:$0xf]
        %v2585 = vld [vmem:[%s721 + $0x78] sm:$0xf]
        %v2586 = vld [vmem:[%s721 + $0x7c] sm:$0xf]
        %v2587 = vld [vmem:[%s826] sm:$0x1]
        %v2589 = vlaneseq
        %v2590 = vshrl.u32 %v2589, 7
        %v2591 = vsub.s32 0, %v2590
        %v2592 = vrot.slane %v2587, %v2591
        %v2626 = vunpack.c.l.b16 %v2555
        %v2627 = vunpack.c.l.b16 %v2556
        %v2628 = vunpack.c.l.b16 %v2557
        %v2629 = vunpack.c.l.b16 %v2558
        %v2630 = vunpack.c.l.b16 %v2559
        %v2631 = vunpack.c.l.b16 %v2560
        %v2632 = vunpack.c.l.b16 %v2561
        %v2633 = vunpack.c.l.b16 %v2562
        %v2634 = vunpack.c.l.b16 %v2563
        %v2635 = vunpack.c.l.b16 %v2564
        %v2636 = vunpack.c.l.b16 %v2565
        %v2637 = vunpack.c.l.b16 %v2566
        %v2638 = vunpack.c.l.b16 %v2567
        %v2639 = vunpack.c.l.b16 %v2568
        %v2640 = vunpack.c.l.b16 %v2569
        %v2641 = vunpack.c.l.b16 %v2570
        %v2642 = vunpack.c.l.b16 %v2571
        %v2643 = vunpack.c.l.b16 %v2572
        %v2644 = vunpack.c.l.b16 %v2573
        %v2645 = vunpack.c.l.b16 %v2574
        %v2646 = vunpack.c.l.b16 %v2575
        %v2647 = vunpack.c.l.b16 %v2576
        %v2648 = vunpack.c.l.b16 %v2577
        %v2649 = vunpack.c.l.b16 %v2578
        %v2650 = vunpack.c.l.b16 %v2579
        %v2651 = vunpack.c.l.b16 %v2580
        %v2652 = vunpack.c.l.b16 %v2581
        %v2653 = vunpack.c.l.b16 %v2582
        %v2654 = vunpack.c.l.b16 %v2583
        %v2655 = vunpack.c.l.b16 %v2584
        %v2656 = vunpack.c.l.b16 %v2585
        %v2657 = vunpack.c.l.b16 %v2586
        %v2658 = vpack.c.b16 %v2627, %v2626
        %v2659 = vpack.c.b16 %v2629, %v2628
        %v2660 = vpack.c.b16 %v2631, %v2630
        %v2661 = vpack.c.b16 %v2633, %v2632
        %v2662 = vpack.c.b16 %v2635, %v2634
        %v2663 = vpack.c.b16 %v2637, %v2636
        %v2664 = vpack.c.b16 %v2639, %v2638
        %v2665 = vpack.c.b16 %v2641, %v2640
        %v2666 = vpack.c.b16 %v2643, %v2642
        %v2667 = vpack.c.b16 %v2645, %v2644
        %v2668 = vpack.c.b16 %v2647, %v2646
        %v2669 = vpack.c.b16 %v2649, %v2648
        %v2670 = vpack.c.b16 %v2651, %v2650
        %v2671 = vpack.c.b16 %v2653, %v2652
        %v2672 = vpack.c.b16 %v2655, %v2654
        %v2673 = vpack.c.b16 %v2657, %v2656
        %2690 = vmatprep.subr.bf16.mxu0 0
        %2691 = vmatpush1.bf16.msra.mxu0 %v2658
        %2692 = vmatprep.subr.bf16.mxu0 0
        %2693 = vmatpush1.bf16.msra.mxu0 %v2659
        %2694 = vmatprep.subr.bf16.mxu0 0
        %2695 = vmatpush1.bf16.msra.mxu0 %v2660
        %2696 = vmatprep.subr.bf16.mxu0 0
        %2697 = vmatpush1.bf16.msra.mxu0 %v2661
        %2698 = vmatprep.subr.bf16.mxu0 0
        %2699 = vmatpush1.bf16.msra.mxu0 %v2662
        %2700 = vmatprep.subr.bf16.mxu0 0
        %2701 = vmatpush1.bf16.msra.mxu0 %v2663
        %2702 = vmatprep.subr.bf16.mxu0 0
        %2703 = vmatpush1.bf16.msra.mxu0 %v2664
        %2704 = vmatprep.subr.bf16.mxu0 0
        %2705 = vmatpush1.bf16.msra.mxu0 %v2665
        %2706 = vmatprep.subr.bf16.mxu0 0
        %2707 = vmatpush1.bf16.msra.mxu0 %v2666
        %2708 = vmatprep.subr.bf16.mxu0 0
        %2709 = vmatpush1.bf16.msra.mxu0 %v2667
        %2710 = vmatprep.subr.bf16.mxu0 0
        %2711 = vmatpush1.bf16.msra.mxu0 %v2668
        %2712 = vmatprep.subr.bf16.mxu0 0
        %2713 = vmatpush1.bf16.msra.mxu0 %v2669
        %2714 = vmatprep.subr.bf16.mxu0 0
        %2715 = vmatpush1.bf16.msra.mxu0 %v2670
        %2716 = vmatprep.subr.bf16.mxu0 0
        %2717 = vmatpush1.bf16.msra.mxu0 %v2671
        %2718 = vmatprep.subr.bf16.mxu0 0
        %2719 = vmatpush1.bf16.msra.mxu0 %v2672
        %2720 = vmatprep.subr.bf16.mxu0 0
        %2721 = vmatpush1.bf16.msra.mxu0 %v2673
        %2722 = vmatprep.mubr.bf16.mxu0 %v2554
        %2723 = vmatmul.mubr.bf16.gmra.mrb[0].mxu0 %v2553
        %v2724 = vpop.f32.mrb[0].mxu0
        %v2725 = vadd.f32 %v2592, %v2724
        %v2726 = vpop.f32.mrb[0].mxu0
        %v2727 = vpop.f32.mrb[0].mxu0
        %v2728 = vadd.f32 %v2592, %v2727
        %v2729 = vpop.f32.mrb[0].mxu0
        %2730 = vdwg.mxu0
        %v2731 = vadd.f32 %v2363, %v2725
        %v2732 = vadd.f32 %v2364, %v2728
        %v2733 = vld [vmem:[%s829] sm:$0x1]
        %v2734 = vld [vmem:[%s832] sm:$0x1]
        %2735 = vadd.xlane.f32.xlu0 %v2731
        %v2736 = vpop.xlane.xlu0 %2735
        %2737 = vadd.xlane.f32.xlu0 %v2732
        %v2738 = vpop.xlane.xlu0 %2737
        %v2739 = vmul.f32 %v2736, %v2330
        %v2740 = vmul.f32 %v2738, %v2330
        %v2741 = vsub.f32 %v2731, %v2739
        %v2742 = vsub.f32 %v2732, %v2740
        %v2743 = vmul.f32 %v2741, %v2741
        %v2744 = vmul.f32 %v2742, %v2742
        %2745 = vadd.xlane.f32.xlu0 %v2743
        %v2746 = vpop.xlane.xlu0 %2745
        %2747 = vadd.xlane.f32.xlu0 %v2744
        %v2748 = vpop.xlane.xlu0 %2747
        %v2749 = vmul.f32 %v2746, %v2330
        %v2750 = vmul.f32 %v2748, %v2330
        %v2751 = vadd.f32 %v2749, 1e-12
        %v2752 = vadd.f32 %v2750, 1e-12
        %v2753 = vrsqrt.pop %v2751
        %v2754 = vrsqrt.pop %v2752
        %v2755 = vmul.f32 %v2741, %v2753
        %v2756 = vmul.f32 %v2742, %v2754
        %v2758 = vlaneseq
        %v2759 = vshrl.u32 %v2758, 7
        %v2760 = vsub.s32 0, %v2759
        %v2761 = vrot.slane %v2733, %v2760
        %v2763 = vmul.f32 %v2755, %v2761
        %v2764 = vmul.f32 %v2756, %v2761
        %v2766 = vlaneseq
        %v2767 = vshrl.u32 %v2766, 7
        %v2768 = vsub.s32 0, %v2767
        %v2769 = vrot.slane %v2734, %v2768
        %v2771 = vadd.f32 %v2763, %v2769
        %v2772 = vadd.f32 %v2764, %v2769
        %2773 = vst [vmem:[#allocation14] sm:$0xff] %v2771
        %2774 = vst [vmem:[#allocation14 + $0x8] sm:$0xff] %v2772
        // Predicated region
        $region121: #{tpu_custom_call.1} parent=83 // pred_check
          %p2775 = pneg %p462
        $region122: #{tpu_custom_call.1} parent=83 // pred_check_branch
          %2777 = sbr.rel (%p2775) target = $region124
        $region123: #{tpu_custom_call.1} parent=83 // pred_region
          %s2778 = smul.u32 2, %s35
          %s2780 = ssub.s32 256, 256
          %2781 = vsyncadd [#allocation4], %s2780
          %s2782 = smul.addr %s2778, 128
          %s2783 = scalar_lea.hbm %s16, %s2782
          %s2784 = sshll.u32 [#allocation14], 4
          %s2785 = int_to_ptr.vmem [resolvable:$true] %s2784
          %2790 = dma.vmem_to_hbm [thread:$0]  %s2785, 256, %s2783, [#allocation4], 128, 128, 8
        $region124: #{tpu_custom_call.1} parent=83 // pred_fallthru
          _
        // Predicated region
        $region125: #{tpu_custom_call.1} parent=83 // pred_check
          %p2791 = pneg %p462
        $region126: #{tpu_custom_call.1} parent=83 // pred_check_branch
          %2793 = sbr.rel (%p2791) target = $region128
        $region127: #{tpu_custom_call.1} parent=83 // pred_region
          %2794 = dma.done [#allocation4], 256
        $region128: #{tpu_custom_call.1} parent=83 // pred_fallthru
          _
      $region84: #{tpu_custom_call.1} parent=5 // pred_fallthru
        _
      %p2795 = scmp.le.s32.totalorder 2, %s26
      // Predicated region
      $region129: #{tpu_custom_call.1} parent=5 // pred_check
        %p2796 = pneg %p2795
      $region130: #{tpu_custom_call.1} parent=5 // pred_check_branch
        %2798 = sbr.rel (%p2796) target = $region132
      $region131: #{tpu_custom_call.1} parent=5 // pred_region
        %s2799 = ssub.s32 %s26, 2
      $region132: #{tpu_custom_call.1} parent=5 // pred_fallthru
        _
    $region6: #{tpu_custom_call.1} parent=1 // loop_footer
      %s30 = sadd.s32 1, %s26
    $region7: #{tpu_custom_call.1} parent=1 // loop_footer_branch
      %25 = sbr.rel target = $region3
    $region8: #{tpu_custom_call.1} parent=1 // loop_exit
      _
    %2800 = vsyncpa [#allocation3], 1
    %s2801 = scalar_lea.sflag [#allocation3], 1
    %2802 = vsyncpa %s2801, 1
    %2803 = vsyncpa [#allocation6], 1
    %2804 = vsyncpa [#allocation9], 1
    %2805 = vsyncpa [#allocation4], 1
    %s2806 = scalar_lea.sflag [#allocation4], 1
    %2807 = vsyncpa %s2806, 1

</llo_original>
